<compile_context>
chip_gen: v7x
topology: tpu7x:2x2x1
jax: 0.10.0
libtpu: 0.0.40
codegen_flags: <defaults>
</compile_context>

<pallas_src>
import functools
import math

import jax
import jax.numpy as jnp
import numpy as np
from jax.experimental import pallas as pl
from jax.experimental.pallas import tpu as pltpu


# ----------------------------------------------------------------------------
# Fused kernel 1: RC_1D conv stack + SAPL in_fc / positional enc / QKV / attn
# ----------------------------------------------------------------------------
def rc1d_attn_kernel(x_ref, pe_ref, a2_ref, b2_ref, w3k_ref, b3_ref, w4k_ref,
                     b4_ref, w5k_ref, win_ref, bin_ref, wqkv_ref, bqkv_ref,
                     rc_ref, y_ref, v_ref, attn_ref, *, n_head, d_k, hid_dim):
    x = x_ref[0]                                          # (N, F), one batch elem

    def left(t):    # replicate-padded value at position l-1 (per sublane row)
        return jnp.concatenate([t[:, :1], t[:, :-1]], axis=1)

    def right(t):   # replicate-padded value at position l+1 (per sublane row)
        return jnp.concatenate([t[:, 1:], t[:, -1:]], axis=1)

    # ---- RC_1D. Hidden state is (C*N, F): row c*N+i = channel c of node i.
    # conv1 (1x1, no bias) is folded into conv2 on host -> the first block is a
    # single small matmul on the raw signal (includes the +x residual).
    xs = jnp.concatenate([left(x), x, right(x)], axis=0)             # (3N, F)
    h = jnp.maximum(
        jnp.dot(a2_ref[...], xs, preferred_element_type=jnp.float32)
        + b2_ref[...], 0.0)                                          # (C*N, F)

    def conv_block(h, wk_ref, b_ref):
        # k=3 replicate conv + channel mixing as ONE matmul with the three taps
        # stacked on the contraction axis (kron-with-I_N weight from host).
        hs = jnp.concatenate([left(h), h, right(h)], axis=0)         # (3*C*N, F)
        out = jnp.dot(wk_ref[...], hs,
                      preferred_element_type=jnp.float32) + b_ref[...]
        return jnp.maximum(out + h, 0.0)                             # relu(conv + x)

    h = conv_block(h, w3k_ref, b3_ref)
    h = conv_block(h, w4k_ref, b4_ref)

    # conv5: 16->8->1 (both 1x1, no bias) folded into one (N, C*N) projection;
    # directly produces the (N, F) per-node output -> no reshape needed.
    rc = jnp.dot(w5k_ref[...], h, preferred_element_type=jnp.float32)  # (N, F)
    rc_ref[0] = rc

    # ---- SAPL front half: in_fc + positional encoding + fused QKV projection.
    y = (jnp.dot(rc, win_ref[...], preferred_element_type=jnp.float32)
         + bin_ref[...] + pe_ref[...])                               # (N, Hd)
    y_ref[0] = y
    qkv = (jnp.dot(y, wqkv_ref[...], preferred_element_type=jnp.float32)
           + bqkv_ref[...])                                          # (N, 3*Hd)
    q = qkv[:, :hid_dim]
    k = qkv[:, hid_dim:2 * hid_dim]
    v = qkv[:, 2 * hid_dim:]
    v_ref[0] = v                                                     # natural (N, Hd)

    scale = 1.0 / math.sqrt(d_k)
    heads = []
    for hh in range(n_head):
        sl = slice(hh * d_k, (hh + 1) * d_k)
        s = jnp.dot(q[:, sl], k[:, sl].T,
                    preferred_element_type=jnp.float32) * scale
        s = s - jnp.max(s, axis=-1, keepdims=True)
        e = jnp.exp(s)
        heads.append(e * pl.reciprocal(jnp.sum(e, axis=-1, keepdims=True),
                                       approx=True))
    # Single lane-dense store (N, n_head*N) instead of n_head masked (N,N) stores.
    attn_ref[0] = jnp.concatenate(heads, axis=-1)


def rc1d_attn_forward(x, pe, kp, n_head, hid_dim):
    B, N, F = x.shape
    d_k = hid_dim // n_head

    def rep(a):  # full-array block, resident across the batch grid axis
        return pl.BlockSpec(a.shape, lambda b, n=len(a.shape): (0,) * n)

    rc, y, v, attn_flat = pl.pallas_call(
        functools.partial(rc1d_attn_kernel, n_head=n_head, d_k=d_k,
                          hid_dim=hid_dim),
        grid=(B,),
        in_specs=[
            pl.BlockSpec((1, N, F), lambda b: (b, 0, 0)),
            rep(pe),
            rep(kp["a2"]), rep(kp["b2"]),
            rep(kp["w3k"]), rep(kp["b3"]),
            rep(kp["w4k"]), rep(kp["b4"]),
            rep(kp["w5k"]),
            rep(kp["w_in"]), rep(kp["b_in"]),
            rep(kp["w_qkv"]), rep(kp["b_qkv"]),
        ],
        out_specs=[
            pl.BlockSpec((1, N, F), lambda b: (b, 0, 0)),
            pl.BlockSpec((1, N, hid_dim), lambda b: (b, 0, 0)),
            pl.BlockSpec((1, N, hid_dim), lambda b: (b, 0, 0)),
            pl.BlockSpec((1, N, n_head * N), lambda b: (b, 0, 0)),
        ],
        out_shape=[
            jax.ShapeDtypeStruct((B, N, F), jnp.float32),
            jax.ShapeDtypeStruct((B, N, hid_dim), jnp.float32),
            jax.ShapeDtypeStruct((B, N, hid_dim), jnp.float32),
            jax.ShapeDtypeStruct((B, N, n_head * N), jnp.float32),
        ],
        compiler_params=pltpu.CompilerParams(dimension_semantics=("parallel",)),
    )(x.astype(jnp.float32), pe, kp["a2"], kp["b2"], kp["w3k"], kp["b3"],
      kp["w4k"], kp["b4"], kp["w5k"], kp["w_in"], kp["b_in"], kp["w_qkv"],
      kp["b_qkv"])
    return rc, y, v, attn_flat


# ----------------------------------------------------------------------------
# Kernel 2: masked attention output + layernorms + FF + score pooling
# ----------------------------------------------------------------------------
def sapl_out_kernel(attn_ref, v_ref, y_ref, s_ref, wf1_ref, bf1_ref, wf2_ref,
                    bf2_ref, g1_ref, be1_ref, g2_ref, be2_ref, o_ref, *,
                    n_head, d_k, eps=1e-5):
    v = v_ref[0]                                          # (Nk, Hd)
    heads = [jnp.dot(attn_ref[0, h], v[:, h * d_k:(h + 1) * d_k],
                     preferred_element_type=jnp.float32) for h in range(n_head)]
    attn_out = jnp.concatenate(heads, axis=-1)            # (Nk, Hd)
    # TODO(synk): dropout1/dropout2 treated as identity (inference mode).
    x = y_ref[0] + attn_out

    def layer_norm(t, g, b):
        mu = jnp.mean(t, axis=-1, keepdims=True)
        var = jnp.mean((t - mu) ** 2, axis=-1, keepdims=True)
        return (t - mu) * jax.lax.rsqrt(var + eps) * g + b

    x = layer_norm(x, g1_ref[...], be1_ref[...])
    ff = jnp.maximum(jnp.dot(x, wf1_ref[...], preferred_element_type=jnp.float32)
                     + bf1_ref[...], 0.0)
    ff = jnp.dot(ff, wf2_ref[...], preferred_element_type=jnp.float32) + bf2_ref[...]
    x = layer_norm(x + ff, g2_ref[...], be2_ref[...])
    # Score-weighted pooling on the VPU (avoid a padded (1, Nk) MXU matmul).
    o_ref[0] = jnp.sum(s_ref[...] * x, axis=0, keepdims=True)        # (1, Hd)


def sapl_out_forward(attn_k, v_k, y_k, s_col, p, n_head):
    B, H, Nk, _ = attn_k.shape
    Hd = y_k.shape[-1]
    d_k = Hd // n_head

    def rep(a):
        return pl.BlockSpec(a.shape, lambda b, n=len(a.shape): (0,) * n)

    out = pl.pallas_call(
        functools.partial(sapl_out_kernel, n_head=n_head, d_k=d_k),
        grid=(B,),
        in_specs=[
            pl.BlockSpec((1, H, Nk, Nk), lambda b: (b, 0, 0, 0)),
            pl.BlockSpec((1, Nk, Hd), lambda b: (b, 0, 0)),
            pl.BlockSpec((1, Nk, Hd), lambda b: (b, 0, 0)),
            rep(s_col),
            rep(p["w_f1"]), rep(p["b_f1"]), rep(p["w_f2"]), rep(p["b_f2"]),
            rep(p["g1"]), rep(p["be1"]), rep(p["g2"]), rep(p["be2"]),
        ],
        out_specs=pl.BlockSpec((1, 1, Hd), lambda b: (b, 0, 0)),
        out_shape=jax.ShapeDtypeStruct((B, 1, Hd), jnp.float32),
        compiler_params=pltpu.CompilerParams(dimension_semantics=("parallel",)),
    )(attn_k, v_k, y_k, s_col, p["w_f1"], p["b_f1"], p["w_f2"], p["b_f2"],
      p["g1"], p["be1"], p["g2"], p["be2"])
    return out[:, 0, :]                                   # torch .squeeze()


# ----------------------------------------------------------------------------
# Host-side glue: pagerank (replaces networkx) and median masking
# ----------------------------------------------------------------------------
def pagerank_np(W, alpha=0.85, tol=1e-6, max_iter=100):
    W = np.asarray(W, dtype=np.float64)
    n = W.shape[0]
    out_sum = W.sum(axis=1, keepdims=True)
    S = np.where(out_sum > 0, W / np.where(out_sum == 0, 1.0, out_sum), 0.0)
    dangling = (out_sum.squeeze(-1) == 0)
    p = np.full(n, 1.0 / n)
    x = np.full(n, 1.0 / n)
    for _ in range(max_iter):
        xlast = x
        x = alpha * (x @ S + x[dangling].sum() * p) + (1.0 - alpha) * p
        if np.abs(x - xlast).sum() < n * tol:
            break
    return x.astype(np.float32)


def positional_encoding_table(num_node, hid_dim):
    position = np.arange(num_node, dtype=np.float32)[:, None]
    div_term = np.exp(np.arange(0, hid_dim, 2, dtype=np.float32)
                      * (-math.log(10000.0) / hid_dim))
    pe = np.zeros((num_node, hid_dim), np.float32)
    pe[:, 0::2] = np.sin(position * div_term)
    pe[:, 1::2] = np.cos(position * div_term)
    return jnp.asarray(pe)


# ----------------------------------------------------------------------------
# Parameter construction + host-side weight folding for the kernels
# ----------------------------------------------------------------------------
def init_params(key, feature_dim, n_head, hid_channel=16):
    hid_dim = feature_dim // 2 * 2
    ks = jax.random.split(key, 20)
    nrm = lambda k, shape, scale: scale * jax.random.normal(k, shape, jnp.float32)
    C = hid_channel
    rc = {
        "w1": nrm(ks[0], (C, 1), 0.5),
        "w2": nrm(ks[1], (3, C, C), 0.15), "b2": nrm(ks[2], (C, 1), 0.05),
        "w3": nrm(ks[3], (3, C, C), 0.15), "b3": nrm(ks[4], (C, 1), 0.05),
        "w4": nrm(ks[5], (3, C, C), 0.15), "b4": nrm(ks[6], (C, 1), 0.05),
        "w5a": nrm(ks[7], (C // 2, C), 0.25),
        "w5b": nrm(ks[8], (1, C // 2), 0.25),
    }
    sc = 1.0 / math.sqrt(hid_dim)
    sapl = {
        "w_in": nrm(ks[9], (feature_dim, hid_dim), 1.0 / math.sqrt(feature_dim)),
        "b_in": nrm(ks[10], (1, hid_dim), 0.05),
        "w_q": nrm(ks[11], (hid_dim, hid_dim), sc), "b_q": nrm(ks[12], (1, hid_dim), 0.05),
        "w_k": nrm(ks[13], (hid_dim, hid_dim), sc), "b_k": nrm(ks[14], (1, hid_dim), 0.05),
        "w_v": nrm(ks[15], (hid_dim, hid_dim), sc), "b_v": nrm(ks[16], (1, hid_dim), 0.05),
        "w_f1": nrm(ks[17], (hid_dim, hid_dim), sc), "b_f1": nrm(ks[18], (1, hid_dim), 0.05),
        "w_f2": nrm(ks[19], (hid_dim, hid_dim), sc), "b_f2": jnp.zeros((1, hid_dim), jnp.float32),
        "g1": jnp.ones((1, hid_dim), jnp.float32), "be1": jnp.zeros((1, hid_dim), jnp.float32),
        "g2": jnp.ones((1, hid_dim), jnp.float32), "be2": jnp.zeros((1, hid_dim), jnp.float32),
    }
    return rc, sapl, hid_dim


def prepare_kernel_params(rc, sapl, num_node):
    """Host-side weight folding for the fused kernel:
       * conv1 folded into conv2 (identity residual folded into centre tap),
       * the three k=3 taps of each conv block stacked on the contraction axis,
       * kron-with-I_N expansion so the per-batch hidden state is one
         (C*num_node, F) 2-D tile (no in-kernel reshapes),
       * conv5 (16->8->1) folded into one (num_node, C*num_node) projection,
       * Q/K/V weights and biases fused into a single (Hd, 3*Hd) matmul."""
    N = num_node
    w1 = np.asarray(rc["w1"], np.float32)                 # (C, 1)
    eyeN = np.eye(N, dtype=np.float32)

    def kron_taps(w3c):                                   # (3,C,C) -> (C*N, 3*C*N)
        return np.concatenate([np.kron(np.asarray(w3c[k], np.float32), eyeN)
                               for k in range(3)], axis=1)

    def expand(v):                                        # (C,1) -> (C*N,1)
        return np.repeat(np.asarray(v, np.float32), N, axis=0)

    w2 = np.asarray(rc["w2"], np.float32)
    taps = [w2[0] @ w1, w2[1] @ w1 + w1, w2[2] @ w1]      # conv1 fold + residual
    a2 = np.concatenate([np.kron(t, eyeN) for t in taps], axis=1)   # (C*N, 3*N)
    w5 = np.asarray(rc["w5b"], np.float32) @ np.asarray(rc["w5a"], np.float32)

    return {
        "a2": jnp.asarray(a2),
        "b2": jnp.asarray(expand(rc["b2"])),
        "w3k": jnp.asarray(kron_taps(rc["w3"])),
        "b3": jnp.asarray(expand(rc["b3"])),
        "w4k": jnp.asarray(kron_taps(rc["w4"])),
        "b4": jnp.asarray(expand(rc["b4"])),
        "w5k": jnp.asarray(np.kron(w5, eyeN)),            # (N, C*N)
        "w_in": sapl["w_in"], "b_in": sapl["b_in"],
        "w_qkv": jnp.concatenate([sapl["w_q"], sapl["w_k"], sapl["w_v"]], axis=1),
        "b_qkv": jnp.concatenate([sapl["b_q"], sapl["b_k"], sapl["b_v"]], axis=1),
    }


# ----------------------------------------------------------------------------
# Full forward
# ----------------------------------------------------------------------------
def rc1d_sapl_forward(x, kp, sapl_p, pe, n_head, hid_dim):
    B, N, F = x.shape

    # Fused RC_1D + SAPL attention front half (one kernel launch).
    rc_out, y, v, attn_flat = rc1d_attn_forward(x, pe, kp, n_head, hid_dim)

    # (B, N, H*N) -> (B, H, N, N); batch/head mean reduced on device so only an
    # (N, N) tensor is transferred for the host pagerank step.
    attn4 = attn_flat.reshape(B, N, n_head, N).transpose(0, 2, 1, 3)
    mean_attn = jnp.mean(attn4, axis=(0, 1))

    mean_np = np.asarray(jax.device_get(mean_attn))       # small D2H sync
    scores = pagerank_np(mean_np)                         # host (replaces networkx)
    median = np.sort(scores)[(N - 1) // 2]                # torch lower median
    mask = scores <= median
    kept = np.nonzero(~mask)[0]

    # Pad the kept set to a STATIC Nk = N//2 (always an upper bound for a
    # lower-median threshold) so the second kernel never recompiles; padded
    # slots get zero score / zero attention columns, so they contribute nothing.
    nk_static = max(N // 2, 1)
    nk = int(kept.size)
    pad_idx = int(kept[0]) if nk > 0 else 0
    kept_pad = np.concatenate(
        [kept, np.full(nk_static - nk, pad_idx, dtype=np.int64)])
    valid = (np.arange(nk_static) < nk).astype(np.float32)

    attn_k = attn4[:, :, kept_pad][:, :, :, kept_pad] * valid    # zero pad cols
    v_k = v[:, kept_pad]                                         # (B, Nk, Hd)
    y_k = y[:, kept_pad]                                         # (B, Nk, Hd)
    s_col = jnp.asarray((scores[kept_pad] * valid)[:, None], jnp.float32)

    x_atte = sapl_out_forward(attn_k, v_k, y_k, s_col, sapl_p, n_head)  # (B, Hd)

    x_masked = rc_out[:, kept]                                   # (B, n_kept, F)
    return x_masked, x_atte, mean_attn, jnp.asarray(mask)


if __name__ == "__main__":
    B, N, F, n_head = 2, 8, 32, 4

    key = jax.random.PRNGKey(0)
    k_param, k_x = jax.random.split(key)
    rc_raw, sapl_p, hid_dim = init_params(k_param, F, n_head)
    kp = prepare_kernel_params(rc_raw, sapl_p, N)
    pe = positional_encoding_table(N, hid_dim)

    x = jax.random.normal(k_x, (B, N, F), jnp.float32)

    x_masked, x_atte, attn_weights, mask = rc1d_sapl_forward(
        x, kp, sapl_p, pe, n_head, hid_dim)
    jax.block_until_ready((x_masked, x_atte, attn_weights))

    assert x_atte.shape == (B, hid_dim)
    assert attn_weights.shape == (N, N)
    assert x_masked.shape[0] == B and x_masked.shape[2] == F
    print("KERNEL_OK")
</pallas_src>

<mosaic_0001>
module attributes {stable_mosaic.version = 11 : i64} {
  func.func @rc1d_attn_kernel(%arg0: i32, %arg1: memref<1x8x32xf32, #tpu.memory_space<vmem>>, %arg2: memref<8x32xf32, #tpu.memory_space<vmem>>, %arg3: memref<128x24xf32, #tpu.memory_space<vmem>>, %arg4: memref<128x1xf32, #tpu.memory_space<vmem>>, %arg5: memref<128x384xf32, #tpu.memory_space<vmem>>, %arg6: memref<128x1xf32, #tpu.memory_space<vmem>>, %arg7: memref<128x384xf32, #tpu.memory_space<vmem>>, %arg8: memref<128x1xf32, #tpu.memory_space<vmem>>, %arg9: memref<8x128xf32, #tpu.memory_space<vmem>>, %arg10: memref<32x32xf32, #tpu.memory_space<vmem>>, %arg11: memref<1x32xf32, #tpu.memory_space<vmem>>, %arg12: memref<32x96xf32, #tpu.memory_space<vmem>>, %arg13: memref<1x96xf32, #tpu.memory_space<vmem>>, %arg14: memref<1x8x32xf32, #tpu.memory_space<vmem>>, %arg15: memref<1x8x32xf32, #tpu.memory_space<vmem>>, %arg16: memref<1x8x32xf32, #tpu.memory_space<vmem>>, %arg17: memref<1x8x32xf32, #tpu.memory_space<vmem>>) attributes {dimension_semantics = [#tpu.dimension_semantics<parallel>], iteration_bounds = array<i64: 2>, scalar_prefetch = 0 : i64, scratch_operands = 0 : i64, tpu.core_type = #tpu.core_type<tc>, window_params = [{transform_indices = @transform_0, window_bounds = array<i64: 1, 8, 32>}, {pipeline_mode = #tpu.pipeline_mode<synchronous>, transform_indices = @transform_1, window_bounds = array<i64: 8, 32>}, {pipeline_mode = #tpu.pipeline_mode<synchronous>, transform_indices = @transform_2, window_bounds = array<i64: 128, 24>}, {pipeline_mode = #tpu.pipeline_mode<synchronous>, transform_indices = @transform_3, window_bounds = array<i64: 128, 1>}, {pipeline_mode = #tpu.pipeline_mode<synchronous>, transform_indices = @transform_4, window_bounds = array<i64: 128, 384>}, {pipeline_mode = #tpu.pipeline_mode<synchronous>, transform_indices = @transform_5, window_bounds = array<i64: 128, 1>}, {pipeline_mode = #tpu.pipeline_mode<synchronous>, transform_indices = @transform_6, window_bounds = array<i64: 128, 384>}, {pipeline_mode = #tpu.pipeline_mode<synchronous>, transform_indices = @transform_7, window_bounds = array<i64: 128, 1>}, {pipeline_mode = #tpu.pipeline_mode<synchronous>, transform_indices = @transform_8, window_bounds = array<i64: 8, 128>}, {pipeline_mode = #tpu.pipeline_mode<synchronous>, transform_indices = @transform_9, window_bounds = array<i64: 32, 32>}, {pipeline_mode = #tpu.pipeline_mode<synchronous>, transform_indices = @transform_10, window_bounds = array<i64: 1, 32>}, {pipeline_mode = #tpu.pipeline_mode<synchronous>, transform_indices = @transform_11, window_bounds = array<i64: 32, 96>}, {pipeline_mode = #tpu.pipeline_mode<synchronous>, transform_indices = @transform_12, window_bounds = array<i64: 1, 96>}, {transform_indices = @transform_13, window_bounds = array<i64: 1, 8, 32>}, {transform_indices = @transform_14, window_bounds = array<i64: 1, 8, 32>}, {transform_indices = @transform_15, window_bounds = array<i64: 1, 8, 32>}, {transform_indices = @transform_16, window_bounds = array<i64: 1, 8, 32>}]} {
    %c0 = arith.constant 0 : index
    %c0_0 = arith.constant 0 : index
    %c0_1 = arith.constant 0 : index
    %0 = vector.load %arg1[%c0, %c0_0, %c0_1] : memref<1x8x32xf32, #tpu.memory_space<vmem>>, vector<1x8x32xf32>
    %1 = vector.shape_cast %0 : vector<1x8x32xf32> to vector<8x32xf32>
    %2 = vector.extract_strided_slice %1 {offsets = [0, 0], sizes = [8, 1], strides = [1, 1]} : vector<8x32xf32> to vector<8x1xf32>
    %3 = vector.extract_strided_slice %1 {offsets = [0, 0], sizes = [8, 31], strides = [1, 1]} : vector<8x32xf32> to vector<8x31xf32>
    %4 = tpu.concatenate %2, %3 in 1 : vector<8x1xf32>, vector<8x31xf32> -> vector<8x32xf32>
    %5 = vector.extract_strided_slice %1 {offsets = [0, 1], sizes = [8, 31], strides = [1, 1]} : vector<8x32xf32> to vector<8x31xf32>
    %6 = vector.extract_strided_slice %1 {offsets = [0, 31], sizes = [8, 1], strides = [1, 1]} : vector<8x32xf32> to vector<8x1xf32>
    %7 = tpu.concatenate %5, %6 in 1 : vector<8x31xf32>, vector<8x1xf32> -> vector<8x32xf32>
    %8 = tpu.concatenate %4, %1, %7 in 0 : vector<8x32xf32>, vector<8x32xf32>, vector<8x32xf32> -> vector<24x32xf32>
    %c0_2 = arith.constant 0 : index
    %c0_3 = arith.constant 0 : index
    %9 = vector.load %arg3[%c0_2, %c0_3] : memref<128x24xf32, #tpu.memory_space<vmem>>, vector<128x24xf32>
    %cst = arith.constant dense<0.000000e+00> : vector<128x32xf32>
    %10 = tpu.matmul %9, %8, %cst {dimension_numbers = #tpu.dot_dimension_numbers<[1], [0], [0], [1], [0, 0, 1, 1], [], []>} : vector<128x24xf32>, vector<24x32xf32>, vector<128x32xf32> -> vector<128x32xf32>
    %c0_4 = arith.constant 0 : index
    %c0_5 = arith.constant 0 : index
    %11 = vector.load %arg4[%c0_4, %c0_5] : memref<128x1xf32, #tpu.memory_space<vmem>>, vector<128x1xf32>
    %12 = vector.broadcast %11 : vector<128x1xf32> to vector<128x32xf32>
    %13 = arith.addf %10, %12 : vector<128x32xf32>
    %cst_6 = arith.constant 0.000000e+00 : f32
    %14 = vector.broadcast %cst_6 : f32 to vector<128x32xf32>
    %15 = arith.maximumf %13, %14 : vector<128x32xf32>
    %16 = vector.extract_strided_slice %15 {offsets = [0, 0], sizes = [128, 1], strides = [1, 1]} : vector<128x32xf32> to vector<128x1xf32>
    %17 = vector.extract_strided_slice %15 {offsets = [0, 0], sizes = [128, 31], strides = [1, 1]} : vector<128x32xf32> to vector<128x31xf32>
    %18 = tpu.concatenate %16, %17 in 1 : vector<128x1xf32>, vector<128x31xf32> -> vector<128x32xf32>
    %19 = vector.extract_strided_slice %15 {offsets = [0, 1], sizes = [128, 31], strides = [1, 1]} : vector<128x32xf32> to vector<128x31xf32>
    %20 = vector.extract_strided_slice %15 {offsets = [0, 31], sizes = [128, 1], strides = [1, 1]} : vector<128x32xf32> to vector<128x1xf32>
    %21 = tpu.concatenate %19, %20 in 1 : vector<128x31xf32>, vector<128x1xf32> -> vector<128x32xf32>
    %22 = tpu.concatenate %18, %15, %21 in 0 : vector<128x32xf32>, vector<128x32xf32>, vector<128x32xf32> -> vector<384x32xf32>
    %c0_7 = arith.constant 0 : index
    %c0_8 = arith.constant 0 : index
    %23 = vector.load %arg5[%c0_7, %c0_8] : memref<128x384xf32, #tpu.memory_space<vmem>>, vector<128x384xf32>
    %cst_9 = arith.constant dense<0.000000e+00> : vector<128x32xf32>
    %24 = tpu.matmul %23, %22, %cst_9 {dimension_numbers = #tpu.dot_dimension_numbers<[1], [0], [0], [1], [0, 0, 1, 1], [], []>} : vector<128x384xf32>, vector<384x32xf32>, vector<128x32xf32> -> vector<128x32xf32>
    %c0_10 = arith.constant 0 : index
    %c0_11 = arith.constant 0 : index
    %25 = vector.load %arg6[%c0_10, %c0_11] : memref<128x1xf32, #tpu.memory_space<vmem>>, vector<128x1xf32>
    %26 = vector.broadcast %25 : vector<128x1xf32> to vector<128x32xf32>
    %27 = arith.addf %24, %26 : vector<128x32xf32>
    %28 = arith.addf %27, %15 : vector<128x32xf32>
    %cst_12 = arith.constant 0.000000e+00 : f32
    %29 = vector.broadcast %cst_12 : f32 to vector<128x32xf32>
    %30 = arith.maximumf %28, %29 : vector<128x32xf32>
    %31 = vector.extract_strided_slice %30 {offsets = [0, 0], sizes = [128, 1], strides = [1, 1]} : vector<128x32xf32> to vector<128x1xf32>
    %32 = vector.extract_strided_slice %30 {offsets = [0, 0], sizes = [128, 31], strides = [1, 1]} : vector<128x32xf32> to vector<128x31xf32>
    %33 = tpu.concatenate %31, %32 in 1 : vector<128x1xf32>, vector<128x31xf32> -> vector<128x32xf32>
    %34 = vector.extract_strided_slice %30 {offsets = [0, 1], sizes = [128, 31], strides = [1, 1]} : vector<128x32xf32> to vector<128x31xf32>
    %35 = vector.extract_strided_slice %30 {offsets = [0, 31], sizes = [128, 1], strides = [1, 1]} : vector<128x32xf32> to vector<128x1xf32>
    %36 = tpu.concatenate %34, %35 in 1 : vector<128x31xf32>, vector<128x1xf32> -> vector<128x32xf32>
    %37 = tpu.concatenate %33, %30, %36 in 0 : vector<128x32xf32>, vector<128x32xf32>, vector<128x32xf32> -> vector<384x32xf32>
    %c0_13 = arith.constant 0 : index
    %c0_14 = arith.constant 0 : index
    %38 = vector.load %arg7[%c0_13, %c0_14] : memref<128x384xf32, #tpu.memory_space<vmem>>, vector<128x384xf32>
    %cst_15 = arith.constant dense<0.000000e+00> : vector<128x32xf32>
    %39 = tpu.matmul %38, %37, %cst_15 {dimension_numbers = #tpu.dot_dimension_numbers<[1], [0], [0], [1], [0, 0, 1, 1], [], []>} : vector<128x384xf32>, vector<384x32xf32>, vector<128x32xf32> -> vector<128x32xf32>
    %c0_16 = arith.constant 0 : index
    %c0_17 = arith.constant 0 : index
    %40 = vector.load %arg8[%c0_16, %c0_17] : memref<128x1xf32, #tpu.memory_space<vmem>>, vector<128x1xf32>
    %41 = vector.broadcast %40 : vector<128x1xf32> to vector<128x32xf32>
    %42 = arith.addf %39, %41 : vector<128x32xf32>
    %43 = arith.addf %42, %30 : vector<128x32xf32>
    %cst_18 = arith.constant 0.000000e+00 : f32
    %44 = vector.broadcast %cst_18 : f32 to vector<128x32xf32>
    %45 = arith.maximumf %43, %44 : vector<128x32xf32>
    %c0_19 = arith.constant 0 : index
    %c0_20 = arith.constant 0 : index
    %46 = vector.load %arg9[%c0_19, %c0_20] : memref<8x128xf32, #tpu.memory_space<vmem>>, vector<8x128xf32>
    %cst_21 = arith.constant dense<0.000000e+00> : vector<8x32xf32>
    %47 = tpu.matmul %46, %45, %cst_21 {dimension_numbers = #tpu.dot_dimension_numbers<[1], [0], [0], [1], [0, 0, 1, 1], [], []>} : vector<8x128xf32>, vector<128x32xf32>, vector<8x32xf32> -> vector<8x32xf32>
    %c0_22 = arith.constant 0 : index
    %c0_23 = arith.constant 0 : index
    %c0_24 = arith.constant 0 : index
    %48 = vector.load %arg14[%c0_22, %c0_23, %c0_24] : memref<1x8x32xf32, #tpu.memory_space<vmem>>, vector<1x8x32xf32>
    %49 = vector.shape_cast %48 : vector<1x8x32xf32> to vector<8x32xf32>
    %50 = vector.shape_cast %47 : vector<8x32xf32> to vector<1x8x32xf32>
    tpu.vector_store %arg14[%c0_22, %c0_23, %c0_24], %50 {strides = array<i32>} : memref<1x8x32xf32, #tpu.memory_space<vmem>>, vector<1x8x32xf32>,
    %c0_25 = arith.constant 0 : index
    %c0_26 = arith.constant 0 : index
    %51 = vector.load %arg10[%c0_25, %c0_26] : memref<32x32xf32, #tpu.memory_space<vmem>>, vector<32x32xf32>
    %cst_27 = arith.constant dense<0.000000e+00> : vector<8x32xf32>
    %52 = tpu.matmul %47, %51, %cst_27 {dimension_numbers = #tpu.dot_dimension_numbers<[1], [0], [0], [1], [0, 0, 1, 1], [], []>} : vector<8x32xf32>, vector<32x32xf32>, vector<8x32xf32> -> vector<8x32xf32>
    %c0_28 = arith.constant 0 : index
    %c0_29 = arith.constant 0 : index
    %53 = vector.load %arg11[%c0_28, %c0_29] : memref<1x32xf32, #tpu.memory_space<vmem>>, vector<1x32xf32>
    %54 = vector.broadcast %53 : vector<1x32xf32> to vector<8x32xf32>
    %55 = arith.addf %52, %54 : vector<8x32xf32>
    %c0_30 = arith.constant 0 : index
    %c0_31 = arith.constant 0 : index
    %56 = vector.load %arg2[%c0_30, %c0_31] : memref<8x32xf32, #tpu.memory_space<vmem>>, vector<8x32xf32>
    %57 = arith.addf %55, %56 : vector<8x32xf32>
    %c0_32 = arith.constant 0 : index
    %c0_33 = arith.constant 0 : index
    %c0_34 = arith.constant 0 : index
    %58 = vector.load %arg15[%c0_32, %c0_33, %c0_34] : memref<1x8x32xf32, #tpu.memory_space<vmem>>, vector<1x8x32xf32>
    %59 = vector.shape_cast %58 : vector<1x8x32xf32> to vector<8x32xf32>
    %60 = vector.shape_cast %57 : vector<8x32xf32> to vector<1x8x32xf32>
    tpu.vector_store %arg15[%c0_32, %c0_33, %c0_34], %60 {strides = array<i32>} : memref<1x8x32xf32, #tpu.memory_space<vmem>>, vector<1x8x32xf32>,
    %c0_35 = arith.constant 0 : index
    %c0_36 = arith.constant 0 : index
    %61 = vector.load %arg12[%c0_35, %c0_36] : memref<32x96xf32, #tpu.memory_space<vmem>>, vector<32x96xf32>
    %cst_37 = arith.constant dense<0.000000e+00> : vector<8x96xf32>
    %62 = tpu.matmul %57, %61, %cst_37 {dimension_numbers = #tpu.dot_dimension_numbers<[1], [0], [0], [1], [0, 0, 1, 1], [], []>} : vector<8x32xf32>, vector<32x96xf32>, vector<8x96xf32> -> vector<8x96xf32>
    %c0_38 = arith.constant 0 : index
    %c0_39 = arith.constant 0 : index
    %63 = vector.load %arg13[%c0_38, %c0_39] : memref<1x96xf32, #tpu.memory_space<vmem>>, vector<1x96xf32>
    %64 = vector.broadcast %63 : vector<1x96xf32> to vector<8x96xf32>
    %65 = arith.addf %62, %64 : vector<8x96xf32>
    %66 = vector.extract_strided_slice %65 {offsets = [0, 0], sizes = [8, 32], strides = [1, 1]} : vector<8x96xf32> to vector<8x32xf32>
    %67 = vector.extract_strided_slice %65 {offsets = [0, 32], sizes = [8, 32], strides = [1, 1]} : vector<8x96xf32> to vector<8x32xf32>
    %68 = vector.extract_strided_slice %65 {offsets = [0, 64], sizes = [8, 32], strides = [1, 1]} : vector<8x96xf32> to vector<8x32xf32>
    %c0_40 = arith.constant 0 : index
    %c0_41 = arith.constant 0 : index
    %c0_42 = arith.constant 0 : index
    %69 = vector.load %arg16[%c0_40, %c0_41, %c0_42] : memref<1x8x32xf32, #tpu.memory_space<vmem>>, vector<1x8x32xf32>
    %70 = vector.shape_cast %69 : vector<1x8x32xf32> to vector<8x32xf32>
    %71 = vector.shape_cast %68 : vector<8x32xf32> to vector<1x8x32xf32>
    tpu.vector_store %arg16[%c0_40, %c0_41, %c0_42], %71 {strides = array<i32>} : memref<1x8x32xf32, #tpu.memory_space<vmem>>, vector<1x8x32xf32>,
    %72 = vector.extract_strided_slice %66 {offsets = [0, 0], sizes = [8, 8], strides = [1, 1]} : vector<8x32xf32> to vector<8x8xf32>
    %73 = vector.extract_strided_slice %67 {offsets = [0, 0], sizes = [8, 8], strides = [1, 1]} : vector<8x32xf32> to vector<8x8xf32>
    %74 = tpu.transpose %73, [1, 0] : vector<8x8xf32> -> vector<8x8xf32>
    %cst_43 = arith.constant dense<0.000000e+00> : vector<8x8xf32>
    %75 = tpu.matmul %72, %74, %cst_43 {dimension_numbers = #tpu.dot_dimension_numbers<[1], [0], [0], [1], [0, 0, 1, 1], [], []>} : vector<8x8xf32>, vector<8x8xf32>, vector<8x8xf32> -> vector<8x8xf32>
    %cst_44 = arith.constant 0.353553385 : f32
    %76 = vector.broadcast %cst_44 : f32 to vector<8x8xf32>
    %77 = arith.mulf %75, %76 : vector<8x8xf32>
    %cst_45 = arith.constant dense<0xFF800000> : vector<8xf32>
    %78 = vector.multi_reduction <maximumf>, %77, %cst_45 [1] : vector<8x8xf32> to vector<8xf32>
    %79 = vector.shape_cast %78 : vector<8xf32> to vector<8x1xf32>
    %80 = vector.broadcast %79 : vector<8x1xf32> to vector<8x8xf32>
    %81 = arith.subf %77, %80 : vector<8x8xf32>
    %82 = math.exp %81 : vector<8x8xf32>
    %cst_46 = arith.constant dense<0.000000e+00> : vector<8xf32>
    %83 = vector.multi_reduction <add>, %82, %cst_46 [1] : vector<8x8xf32> to vector<8xf32>
    %84 = vector.shape_cast %83 : vector<8xf32> to vector<8x1xf32>
    %85 = tpu.reciprocal %84 {approx = true} : vector<8x1xf32> -> vector<8x1xf32>
    %86 = vector.broadcast %85 : vector<8x1xf32> to vector<8x8xf32>
    %87 = arith.mulf %82, %86 : vector<8x8xf32>
    %88 = vector.extract_strided_slice %66 {offsets = [0, 8], sizes = [8, 8], strides = [1, 1]} : vector<8x32xf32> to vector<8x8xf32>
    %89 = vector.extract_strided_slice %67 {offsets = [0, 8], sizes = [8, 8], strides = [1, 1]} : vector<8x32xf32> to vector<8x8xf32>
    %90 = tpu.transpose %89, [1, 0] : vector<8x8xf32> -> vector<8x8xf32>
    %cst_47 = arith.constant dense<0.000000e+00> : vector<8x8xf32>
    %91 = tpu.matmul %88, %90, %cst_47 {dimension_numbers = #tpu.dot_dimension_numbers<[1], [0], [0], [1], [0, 0, 1, 1], [], []>} : vector<8x8xf32>, vector<8x8xf32>, vector<8x8xf32> -> vector<8x8xf32>
    %cst_48 = arith.constant 0.353553385 : f32
    %92 = vector.broadcast %cst_48 : f32 to vector<8x8xf32>
    %93 = arith.mulf %91, %92 : vector<8x8xf32>
    %cst_49 = arith.constant dense<0xFF800000> : vector<8xf32>
    %94 = vector.multi_reduction <maximumf>, %93, %cst_49 [1] : vector<8x8xf32> to vector<8xf32>
    %95 = vector.shape_cast %94 : vector<8xf32> to vector<8x1xf32>
    %96 = vector.broadcast %95 : vector<8x1xf32> to vector<8x8xf32>
    %97 = arith.subf %93, %96 : vector<8x8xf32>
    %98 = math.exp %97 : vector<8x8xf32>
    %cst_50 = arith.constant dense<0.000000e+00> : vector<8xf32>
    %99 = vector.multi_reduction <add>, %98, %cst_50 [1] : vector<8x8xf32> to vector<8xf32>
    %100 = vector.shape_cast %99 : vector<8xf32> to vector<8x1xf32>
    %101 = tpu.reciprocal %100 {approx = true} : vector<8x1xf32> -> vector<8x1xf32>
    %102 = vector.broadcast %101 : vector<8x1xf32> to vector<8x8xf32>
    %103 = arith.mulf %98, %102 : vector<8x8xf32>
    %104 = vector.extract_strided_slice %66 {offsets = [0, 16], sizes = [8, 8], strides = [1, 1]} : vector<8x32xf32> to vector<8x8xf32>
    %105 = vector.extract_strided_slice %67 {offsets = [0, 16], sizes = [8, 8], strides = [1, 1]} : vector<8x32xf32> to vector<8x8xf32>
    %106 = tpu.transpose %105, [1, 0] : vector<8x8xf32> -> vector<8x8xf32>
    %cst_51 = arith.constant dense<0.000000e+00> : vector<8x8xf32>
    %107 = tpu.matmul %104, %106, %cst_51 {dimension_numbers = #tpu.dot_dimension_numbers<[1], [0], [0], [1], [0, 0, 1, 1], [], []>} : vector<8x8xf32>, vector<8x8xf32>, vector<8x8xf32> -> vector<8x8xf32>
    %cst_52 = arith.constant 0.353553385 : f32
    %108 = vector.broadcast %cst_52 : f32 to vector<8x8xf32>
    %109 = arith.mulf %107, %108 : vector<8x8xf32>
    %cst_53 = arith.constant dense<0xFF800000> : vector<8xf32>
    %110 = vector.multi_reduction <maximumf>, %109, %cst_53 [1] : vector<8x8xf32> to vector<8xf32>
    %111 = vector.shape_cast %110 : vector<8xf32> to vector<8x1xf32>
    %112 = vector.broadcast %111 : vector<8x1xf32> to vector<8x8xf32>
    %113 = arith.subf %109, %112 : vector<8x8xf32>
    %114 = math.exp %113 : vector<8x8xf32>
    %cst_54 = arith.constant dense<0.000000e+00> : vector<8xf32>
    %115 = vector.multi_reduction <add>, %114, %cst_54 [1] : vector<8x8xf32> to vector<8xf32>
    %116 = vector.shape_cast %115 : vector<8xf32> to vector<8x1xf32>
    %117 = tpu.reciprocal %116 {approx = true} : vector<8x1xf32> -> vector<8x1xf32>
    %118 = vector.broadcast %117 : vector<8x1xf32> to vector<8x8xf32>
    %119 = arith.mulf %114, %118 : vector<8x8xf32>
    %120 = vector.extract_strided_slice %66 {offsets = [0, 24], sizes = [8, 8], strides = [1, 1]} : vector<8x32xf32> to vector<8x8xf32>
    %121 = vector.extract_strided_slice %67 {offsets = [0, 24], sizes = [8, 8], strides = [1, 1]} : vector<8x32xf32> to vector<8x8xf32>
    %122 = tpu.transpose %121, [1, 0] : vector<8x8xf32> -> vector<8x8xf32>
    %cst_55 = arith.constant dense<0.000000e+00> : vector<8x8xf32>
    %123 = tpu.matmul %120, %122, %cst_55 {dimension_numbers = #tpu.dot_dimension_numbers<[1], [0], [0], [1], [0, 0, 1, 1], [], []>} : vector<8x8xf32>, vector<8x8xf32>, vector<8x8xf32> -> vector<8x8xf32>
    %cst_56 = arith.constant 0.353553385 : f32
    %124 = vector.broadcast %cst_56 : f32 to vector<8x8xf32>
    %125 = arith.mulf %123, %124 : vector<8x8xf32>
    %cst_57 = arith.constant dense<0xFF800000> : vector<8xf32>
    %126 = vector.multi_reduction <maximumf>, %125, %cst_57 [1] : vector<8x8xf32> to vector<8xf32>
    %127 = vector.shape_cast %126 : vector<8xf32> to vector<8x1xf32>
    %128 = vector.broadcast %127 : vector<8x1xf32> to vector<8x8xf32>
    %129 = arith.subf %125, %128 : vector<8x8xf32>
    %130 = math.exp %129 : vector<8x8xf32>
    %cst_58 = arith.constant dense<0.000000e+00> : vector<8xf32>
    %131 = vector.multi_reduction <add>, %130, %cst_58 [1] : vector<8x8xf32> to vector<8xf32>
    %132 = vector.shape_cast %131 : vector<8xf32> to vector<8x1xf32>
    %133 = tpu.reciprocal %132 {approx = true} : vector<8x1xf32> -> vector<8x1xf32>
    %134 = vector.broadcast %133 : vector<8x1xf32> to vector<8x8xf32>
    %135 = arith.mulf %130, %134 : vector<8x8xf32>
    %136 = tpu.concatenate %87, %103, %119, %135 in 1 : vector<8x8xf32>, vector<8x8xf32>, vector<8x8xf32>, vector<8x8xf32> -> vector<8x32xf32>
    %c0_59 = arith.constant 0 : index
    %c0_60 = arith.constant 0 : index
    %c0_61 = arith.constant 0 : index
    %137 = vector.load %arg17[%c0_59, %c0_60, %c0_61] : memref<1x8x32xf32, #tpu.memory_space<vmem>>, vector<1x8x32xf32>
    %138 = vector.shape_cast %137 : vector<1x8x32xf32> to vector<8x32xf32>
    %139 = vector.shape_cast %136 : vector<8x32xf32> to vector<1x8x32xf32>
    tpu.vector_store %arg17[%c0_59, %c0_60, %c0_61], %139 {strides = array<i32>} : memref<1x8x32xf32, #tpu.memory_space<vmem>>, vector<1x8x32xf32>,
    return
  }
  func.func @transform_0(%arg0: i32) -> (i32, i32, i32) {
    %c0_i32 = arith.constant 0 : i32
    %c0_i32_0 = arith.constant 0 : i32
    %c0_i32_1 = arith.constant 0 : i32
    return %arg0, %c0_i32, %c0_i32_0 : i32, i32, i32
  }
  func.func @transform_1(%arg0: i32) -> (i32, i32) {
    %c0_i32 = arith.constant 0 : i32
    %c0_i32_0 = arith.constant 0 : i32
    %c0_i32_1 = arith.constant 0 : i32
    return %c0_i32, %c0_i32_0 : i32, i32
  }
  func.func @transform_2(%arg0: i32) -> (i32, i32) {
    %c0_i32 = arith.constant 0 : i32
    %c0_i32_0 = arith.constant 0 : i32
    %c0_i32_1 = arith.constant 0 : i32
    return %c0_i32, %c0_i32_0 : i32, i32
  }
  func.func @transform_3(%arg0: i32) -> (i32, i32) {
    %c0_i32 = arith.constant 0 : i32
    %c0_i32_0 = arith.constant 0 : i32
    %c0_i32_1 = arith.constant 0 : i32
    return %c0_i32, %c0_i32_0 : i32, i32
  }
  func.func @transform_4(%arg0: i32) -> (i32, i32) {
    %c0_i32 = arith.constant 0 : i32
    %c0_i32_0 = arith.constant 0 : i32
    %c0_i32_1 = arith.constant 0 : i32
    return %c0_i32, %c0_i32_0 : i32, i32
  }
  func.func @transform_5(%arg0: i32) -> (i32, i32) {
    %c0_i32 = arith.constant 0 : i32
    %c0_i32_0 = arith.constant 0 : i32
    %c0_i32_1 = arith.constant 0 : i32
    return %c0_i32, %c0_i32_0 : i32, i32
  }
  func.func @transform_6(%arg0: i32) -> (i32, i32) {
    %c0_i32 = arith.constant 0 : i32
    %c0_i32_0 = arith.constant 0 : i32
    %c0_i32_1 = arith.constant 0 : i32
    return %c0_i32, %c0_i32_0 : i32, i32
  }
  func.func @transform_7(%arg0: i32) -> (i32, i32) {
    %c0_i32 = arith.constant 0 : i32
    %c0_i32_0 = arith.constant 0 : i32
    %c0_i32_1 = arith.constant 0 : i32
    return %c0_i32, %c0_i32_0 : i32, i32
  }
  func.func @transform_8(%arg0: i32) -> (i32, i32) {
    %c0_i32 = arith.constant 0 : i32
    %c0_i32_0 = arith.constant 0 : i32
    %c0_i32_1 = arith.constant 0 : i32
    return %c0_i32, %c0_i32_0 : i32, i32
  }
  func.func @transform_9(%arg0: i32) -> (i32, i32) {
    %c0_i32 = arith.constant 0 : i32
    %c0_i32_0 = arith.constant 0 : i32
    %c0_i32_1 = arith.constant 0 : i32
    return %c0_i32, %c0_i32_0 : i32, i32
  }
  func.func @transform_10(%arg0: i32) -> (i32, i32) {
    %c0_i32 = arith.constant 0 : i32
    %c0_i32_0 = arith.constant 0 : i32
    %c0_i32_1 = arith.constant 0 : i32
    return %c0_i32, %c0_i32_0 : i32, i32
  }
  func.func @transform_11(%arg0: i32) -> (i32, i32) {
    %c0_i32 = arith.constant 0 : i32
    %c0_i32_0 = arith.constant 0 : i32
    %c0_i32_1 = arith.constant 0 : i32
    return %c0_i32, %c0_i32_0 : i32, i32
  }
  func.func @transform_12(%arg0: i32) -> (i32, i32) {
    %c0_i32 = arith.constant 0 : i32
    %c0_i32_0 = arith.constant 0 : i32
    %c0_i32_1 = arith.constant 0 : i32
    return %c0_i32, %c0_i32_0 : i32, i32
  }
  func.func @transform_13(%arg0: i32) -> (i32, i32, i32) {
    %c0_i32 = arith.constant 0 : i32
    %c0_i32_0 = arith.constant 0 : i32
    %c0_i32_1 = arith.constant 0 : i32
    return %arg0, %c0_i32, %c0_i32_0 : i32, i32, i32
  }
  func.func @transform_14(%arg0: i32) -> (i32, i32, i32) {
    %c0_i32 = arith.constant 0 : i32
    %c0_i32_0 = arith.constant 0 : i32
    %c0_i32_1 = arith.constant 0 : i32
    return %arg0, %c0_i32, %c0_i32_0 : i32, i32, i32
  }
  func.func @transform_15(%arg0: i32) -> (i32, i32, i32) {
    %c0_i32 = arith.constant 0 : i32
    %c0_i32_0 = arith.constant 0 : i32
    %c0_i32_1 = arith.constant 0 : i32
    return %arg0, %c0_i32, %c0_i32_0 : i32, i32, i32
  }
  func.func @transform_16(%arg0: i32) -> (i32, i32, i32) {
    %c0_i32 = arith.constant 0 : i32
    %c0_i32_0 = arith.constant 0 : i32
    %c0_i32_1 = arith.constant 0 : i32
    return %arg0, %c0_i32, %c0_i32_0 : i32, i32, i32
  }
}

</mosaic_0001>

<llo_original>
// kernel: tpu_custom_call.1
$region0: #{tpu_custom_call.1}
  #allocation0 [shape = 'u32[]', space=smem, size = 0x4, offset = 0x4, fixed_abs, tag = 'smem constant byte address 0x4 - core index']
  #allocation1 [shape = 'u32[144,128]{1,0:T(1,128)}', space=vmem, size = 0x12000, scoped, tag = 'internal scratch']
  %s0 = inlined_call_operand.vmem [shape: f32[2,8,32], index: 0, kind: input, shape index: {}]
  %s1 = inlined_call_operand.vmem [shape: f32[8,32], index: 1, kind: input, shape index: {}]
  %s2 = inlined_call_operand.vmem [shape: f32[128,24], index: 2, kind: input, shape index: {}]
  %s3 = inlined_call_operand.vmem [shape: f32[128,1], index: 3, kind: input, shape index: {}]
  %s4 = inlined_call_operand.vmem [shape: f32[128,384], index: 4, kind: input, shape index: {}]
  %s5 = inlined_call_operand.vmem [shape: f32[128,1], index: 5, kind: input, shape index: {}]
  %s6 = inlined_call_operand.hbm [shape: f32[128,384], index: 6, kind: input, shape index: {}]
  %s7 = inlined_call_operand.vmem [shape: f32[128,1], index: 7, kind: input, shape index: {}]
  %s8 = inlined_call_operand.vmem [shape: f32[8,128], index: 8, kind: input, shape index: {}]
  %s9 = inlined_call_operand.vmem [shape: f32[32,32], index: 9, kind: input, shape index: {}]
  %s10 = inlined_call_operand.vmem [shape: f32[1,32], index: 10, kind: input, shape index: {}]
  %s11 = inlined_call_operand.vmem [shape: f32[32,96], index: 11, kind: input, shape index: {}]
  %s12 = inlined_call_operand.vmem [shape: f32[1,96], index: 12, kind: input, shape index: {}]
  %s13 = inlined_call_operand.hbm [shape: f32[2,8,32], index: 13, kind: output, shape index: {0}]
  %s14 = inlined_call_operand.hbm [shape: f32[2,8,32], index: 14, kind: output, shape index: {1}]
  %s15 = inlined_call_operand.hbm [shape: f32[2,8,32], index: 15, kind: output, shape index: {2}]
  %s16 = inlined_call_operand.hbm [shape: f32[2,8,32], index: 16, kind: output, shape index: {3}]
  %17 = xla_tuple %s13, %s14, %s15, %s16
  %s18 = sld [smem:[#allocation0]]
  $region113: #{tpu_custom_call.1} parent=0
    _
  %s20 = ssub.s32 1, %s18
  %s21 = scalar_select 0, %s20, %s18
  $region1: #{tpu_custom_call.1} parent=0
    #allocation2 [shape = 'u8[196608]{0}', space=vmem, size = 0x30000, scoped, tag = 'input window, operand 6, single buffered']
    #allocation3 [shape = 's32[2]{0}', space=sflag, size = 0x8, scoped, tag = 'scoped memory for tpu_custom_call.1']
    #allocation4 [shape = 's32[2]{0}', space=sflag, size = 0x8, scoped, tag = 'scoped memory for tpu_custom_call.1']
    #allocation5 [shape = 'u8[8192]{0}', space=vmem, size = 0x2000, scoped, tag = 'output window, operand 0']
    #allocation6 [shape = 'u8[8192]{0}', space=vmem, size = 0x2000, scoped, tag = 'output window, operand 1']
    #allocation7 [shape = 's32[2]{0}', space=sflag, size = 0x8, scoped, tag = 'scoped memory for tpu_custom_call.1']
    #allocation8 [shape = 'u8[8192]{0}', space=vmem, size = 0x2000, scoped, tag = 'output window, operand 2']
    #allocation9 [shape = 'u8[8192]{0}', space=vmem, size = 0x2000, scoped, tag = 'output window, operand 3']
    #allocation10 [shape = 's32[2]{0}', space=sflag, size = 0x8, scoped, tag = 'scoped memory for tpu_custom_call.1']
    %22 = vsyncpa [#allocation3], 0
    %23 = vsyncpa [#allocation4], 0
    %s24 = scalar_lea.sflag [#allocation4], 1
    %25 = vsyncpa %s24, 0
    %26 = vsyncpa [#allocation7], 0
    %s27 = scalar_lea.sflag [#allocation7], 1
    %28 = vsyncpa %s27, 0
    %29 = vsyncpa [#allocation10], 0
    %s30 = scalar_lea.sflag [#allocation10], 1
    %31 = vsyncpa %s30, 0
    loop: start=0, step=1, limit=4
    $region2: #{tpu_custom_call.1} parent=1 // loop_pre_header
      _
    $region3: #{tpu_custom_call.1} parent=1 // loop_header
      %s33 = sphi 0, %s37
      %p34 = scmp.ge.s32.totalorder %s33, 4
      %s43 = sphi 0, %s45
      %s46 = sphi 0, %s43
      %s47 = sphi 0, %s46
      %s63 = sphi 0, %s47
      %s67 = sphi 0, %s67
      %s69 = sphi 0, %s67
      %s70 = sphi 0, %s69
      %s84 = sphi 0, %s70
      %s88 = sphi 0, %s88
      %s90 = sphi 0, %s88
      %s91 = sphi 0, %s90
      %s105 = sphi 0, %s91
      %s109 = sphi 0, %s109
      %s111 = sphi 0, %s109
      %s112 = sphi 0, %s111
      %s126 = sphi 0, %s112
      %s130 = sphi 0, %s130
      %s132 = sphi 0, %s130
      %s133 = sphi 0, %s132
      %s147 = sphi 0, %s133
      %s151 = sphi 0, %s151
      %s153 = sphi 0, %s151
      %s154 = sphi 0, %s153
      %s168 = sphi 0, %s154
      %s172 = sphi 0, %s172
      %s174 = sphi 0, %s172
      %s175 = sphi 0, %s174
      %s189 = sphi 0, %s175
      %s193 = sphi 0, %s193
      %s195 = sphi 0, %s193
      %s196 = sphi 0, %s195
      %s210 = sphi 0, %s196
      %s214 = sphi 0, %s214
      %s216 = sphi 0, %s214
      %s217 = sphi 0, %s216
      %s231 = sphi 0, %s217
      %s235 = sphi 0, %s235
      %s237 = sphi 0, %s235
      %s238 = sphi 0, %s237
      %s252 = sphi 0, %s238
      %s256 = sphi 0, %s256
      %s258 = sphi 0, %s256
      %s259 = sphi 0, %s258
      %s273 = sphi 0, %s259
      %s277 = sphi 0, %s277
      %s279 = sphi 0, %s277
      %s280 = sphi 0, %s279
      %s294 = sphi 0, %s280
      %s298 = sphi 0, %s298
      %s300 = sphi 0, %s298
      %s301 = sphi 0, %s300
      %s315 = sphi 0, %s301
      %s321 = sphi 0, %s323
      %s324 = sphi 0, %s321
      %s325 = sphi 0, %s324
      %s341 = sphi 0, %s325
      %s347 = sphi 0, %s349
      %s350 = sphi 0, %s347
      %s351 = sphi 0, %s350
      %s367 = sphi 0, %s351
      %s373 = sphi 0, %s375
      %s376 = sphi 0, %s373
      %s377 = sphi 0, %s376
      %s393 = sphi 0, %s377
      %s399 = sphi 0, %s401
      %s402 = sphi 0, %s399
      %s403 = sphi 0, %s402
      %s419 = sphi 0, %s403
    $region4: #{tpu_custom_call.1} parent=1 // loop_header_branch
      %36 = sbr.rel (%p34) target = $region8
    $region5: #{tpu_custom_call.1} parent=1 // loop_body
      %s38 = ssub.s32 %s33, 1
      %s39 = ssub.s32 %s33, 2
      %s40 = sadd.s32 %s33, 1
      %s41 = ssub.s32 %s33, %s40
      %p42 = scmp.eq.s32.totalorder %s41, 0
      %s44 = sadd.s32 %s43, 1
      %s45 = scalar_select %p42, %s43, %s44
      %p48 = pneg %p42
      %p49 = scmp.eq.s32.totalorder %s33, 1
      %p50 = por %p48, %p49
      %p51 = scmp.ne.s32.totalorder %s43, %s46
      %p52 = scmp.eq.s32.totalorder %s33, 0
      %p53 = por %p51, %p52
      %p54 = scmp.ne.s32.totalorder %s43, %s46
      %p55 = scmp.eq.s32.totalorder %s38, 1
      %p56 = por %p54, %p55
      %p57 = scmp.ne.s32.totalorder %s46, %s47
      %p58 = scmp.eq.s32.totalorder %s38, 0
      %p59 = por %p57, %p58
      %p60 = scmp.ne.s32.totalorder %s46, %s47
      %p61 = scmp.eq.s32.totalorder %s39, 1
      %p62 = por %p60, %p61
      %p64 = scmp.ne.s32.totalorder %s47, %s63
      %p65 = scmp.eq.s32.totalorder %s39, 0
      %p66 = por %p64, %p65
      %s68 = sadd.s32 %s67, 1
      %p71 = scmp.eq.s32.totalorder %s33, 1
      %p72 = scmp.ne.s32.totalorder %s67, %s69
      %p73 = scmp.eq.s32.totalorder %s33, 0
      %p74 = por %p72, %p73
      %p75 = scmp.ne.s32.totalorder %s67, %s69
      %p76 = scmp.eq.s32.totalorder %s38, 1
      %p77 = por %p75, %p76
      %p78 = scmp.ne.s32.totalorder %s69, %s70
      %p79 = scmp.eq.s32.totalorder %s38, 0
      %p80 = por %p78, %p79
      %p81 = scmp.ne.s32.totalorder %s69, %s70
      %p82 = scmp.eq.s32.totalorder %s39, 1
      %p83 = por %p81, %p82
      %p85 = scmp.ne.s32.totalorder %s70, %s84
      %p86 = scmp.eq.s32.totalorder %s39, 0
      %p87 = por %p85, %p86
      %s89 = sadd.s32 %s88, 1
      %p92 = scmp.eq.s32.totalorder %s33, 1
      %p93 = scmp.ne.s32.totalorder %s88, %s90
      %p94 = scmp.eq.s32.totalorder %s33, 0
      %p95 = por %p93, %p94
      %p96 = scmp.ne.s32.totalorder %s88, %s90
      %p97 = scmp.eq.s32.totalorder %s38, 1
      %p98 = por %p96, %p97
      %p99 = scmp.ne.s32.totalorder %s90, %s91
      %p100 = scmp.eq.s32.totalorder %s38, 0
      %p101 = por %p99, %p100
      %p102 = scmp.ne.s32.totalorder %s90, %s91
      %p103 = scmp.eq.s32.totalorder %s39, 1
      %p104 = por %p102, %p103
      %p106 = scmp.ne.s32.totalorder %s91, %s105
      %p107 = scmp.eq.s32.totalorder %s39, 0
      %p108 = por %p106, %p107
      %s110 = sadd.s32 %s109, 1
      %p113 = scmp.eq.s32.totalorder %s33, 1
      %p114 = scmp.ne.s32.totalorder %s109, %s111
      %p115 = scmp.eq.s32.totalorder %s33, 0
      %p116 = por %p114, %p115
      %p117 = scmp.ne.s32.totalorder %s109, %s111
      %p118 = scmp.eq.s32.totalorder %s38, 1
      %p119 = por %p117, %p118
      %p120 = scmp.ne.s32.totalorder %s111, %s112
      %p121 = scmp.eq.s32.totalorder %s38, 0
      %p122 = por %p120, %p121
      %p123 = scmp.ne.s32.totalorder %s111, %s112
      %p124 = scmp.eq.s32.totalorder %s39, 1
      %p125 = por %p123, %p124
      %p127 = scmp.ne.s32.totalorder %s112, %s126
      %p128 = scmp.eq.s32.totalorder %s39, 0
      %p129 = por %p127, %p128
      %s131 = sadd.s32 %s130, 1
      %p134 = scmp.eq.s32.totalorder %s33, 1
      %p135 = scmp.ne.s32.totalorder %s130, %s132
      %p136 = scmp.eq.s32.totalorder %s33, 0
      %p137 = por %p135, %p136
      %p138 = scmp.ne.s32.totalorder %s130, %s132
      %p139 = scmp.eq.s32.totalorder %s38, 1
      %p140 = por %p138, %p139
      %p141 = scmp.ne.s32.totalorder %s132, %s133
      %p142 = scmp.eq.s32.totalorder %s38, 0
      %p143 = por %p141, %p142
      %p144 = scmp.ne.s32.totalorder %s132, %s133
      %p145 = scmp.eq.s32.totalorder %s39, 1
      %p146 = por %p144, %p145
      %p148 = scmp.ne.s32.totalorder %s133, %s147
      %p149 = scmp.eq.s32.totalorder %s39, 0
      %p150 = por %p148, %p149
      %s152 = sadd.s32 %s151, 1
      %p155 = scmp.eq.s32.totalorder %s33, 1
      %p156 = scmp.ne.s32.totalorder %s151, %s153
      %p157 = scmp.eq.s32.totalorder %s33, 0
      %p158 = por %p156, %p157
      %p159 = scmp.ne.s32.totalorder %s151, %s153
      %p160 = scmp.eq.s32.totalorder %s38, 1
      %p161 = por %p159, %p160
      %p162 = scmp.ne.s32.totalorder %s153, %s154
      %p163 = scmp.eq.s32.totalorder %s38, 0
      %p164 = por %p162, %p163
      %p165 = scmp.ne.s32.totalorder %s153, %s154
      %p166 = scmp.eq.s32.totalorder %s39, 1
      %p167 = por %p165, %p166
      %p169 = scmp.ne.s32.totalorder %s154, %s168
      %p170 = scmp.eq.s32.totalorder %s39, 0
      %p171 = por %p169, %p170
      %s173 = sadd.s32 %s172, 1
      %p176 = scmp.eq.s32.totalorder %s33, 1
      %p177 = scmp.ne.s32.totalorder %s172, %s174
      %p178 = scmp.eq.s32.totalorder %s33, 0
      %p179 = por %p177, %p178
      %p180 = scmp.ne.s32.totalorder %s172, %s174
      %p181 = scmp.eq.s32.totalorder %s38, 1
      %p182 = por %p180, %p181
      %p183 = scmp.ne.s32.totalorder %s174, %s175
      %p184 = scmp.eq.s32.totalorder %s38, 0
      %p185 = por %p183, %p184
      %p186 = scmp.ne.s32.totalorder %s174, %s175
      %p187 = scmp.eq.s32.totalorder %s39, 1
      %p188 = por %p186, %p187
      %p190 = scmp.ne.s32.totalorder %s175, %s189
      %p191 = scmp.eq.s32.totalorder %s39, 0
      %p192 = por %p190, %p191
      %s194 = sadd.s32 %s193, 1
      %p197 = scmp.eq.s32.totalorder %s33, 1
      %p198 = scmp.ne.s32.totalorder %s193, %s195
      %p199 = scmp.eq.s32.totalorder %s33, 0
      %p200 = por %p198, %p199
      %p201 = scmp.ne.s32.totalorder %s193, %s195
      %p202 = scmp.eq.s32.totalorder %s38, 1
      %p203 = por %p201, %p202
      %p204 = scmp.ne.s32.totalorder %s195, %s196
      %p205 = scmp.eq.s32.totalorder %s38, 0
      %p206 = por %p204, %p205
      %p207 = scmp.ne.s32.totalorder %s195, %s196
      %p208 = scmp.eq.s32.totalorder %s39, 1
      %p209 = por %p207, %p208
      %p211 = scmp.ne.s32.totalorder %s196, %s210
      %p212 = scmp.eq.s32.totalorder %s39, 0
      %p213 = por %p211, %p212
      %s215 = sadd.s32 %s214, 1
      %p218 = scmp.eq.s32.totalorder %s33, 1
      %p219 = scmp.ne.s32.totalorder %s214, %s216
      %p220 = scmp.eq.s32.totalorder %s33, 0
      %p221 = por %p219, %p220
      %p222 = scmp.ne.s32.totalorder %s214, %s216
      %p223 = scmp.eq.s32.totalorder %s38, 1
      %p224 = por %p222, %p223
      %p225 = scmp.ne.s32.totalorder %s216, %s217
      %p226 = scmp.eq.s32.totalorder %s38, 0
      %p227 = por %p225, %p226
      %p228 = scmp.ne.s32.totalorder %s216, %s217
      %p229 = scmp.eq.s32.totalorder %s39, 1
      %p230 = por %p228, %p229
      %p232 = scmp.ne.s32.totalorder %s217, %s231
      %p233 = scmp.eq.s32.totalorder %s39, 0
      %p234 = por %p232, %p233
      %s236 = sadd.s32 %s235, 1
      %p239 = scmp.eq.s32.totalorder %s33, 1
      %p240 = scmp.ne.s32.totalorder %s235, %s237
      %p241 = scmp.eq.s32.totalorder %s33, 0
      %p242 = por %p240, %p241
      %p243 = scmp.ne.s32.totalorder %s235, %s237
      %p244 = scmp.eq.s32.totalorder %s38, 1
      %p245 = por %p243, %p244
      %p246 = scmp.ne.s32.totalorder %s237, %s238
      %p247 = scmp.eq.s32.totalorder %s38, 0
      %p248 = por %p246, %p247
      %p249 = scmp.ne.s32.totalorder %s237, %s238
      %p250 = scmp.eq.s32.totalorder %s39, 1
      %p251 = por %p249, %p250
      %p253 = scmp.ne.s32.totalorder %s238, %s252
      %p254 = scmp.eq.s32.totalorder %s39, 0
      %p255 = por %p253, %p254
      %s257 = sadd.s32 %s256, 1
      %p260 = scmp.eq.s32.totalorder %s33, 1
      %p261 = scmp.ne.s32.totalorder %s256, %s258
      %p262 = scmp.eq.s32.totalorder %s33, 0
      %p263 = por %p261, %p262
      %p264 = scmp.ne.s32.totalorder %s256, %s258
      %p265 = scmp.eq.s32.totalorder %s38, 1
      %p266 = por %p264, %p265
      %p267 = scmp.ne.s32.totalorder %s258, %s259
      %p268 = scmp.eq.s32.totalorder %s38, 0
      %p269 = por %p267, %p268
      %p270 = scmp.ne.s32.totalorder %s258, %s259
      %p271 = scmp.eq.s32.totalorder %s39, 1
      %p272 = por %p270, %p271
      %p274 = scmp.ne.s32.totalorder %s259, %s273
      %p275 = scmp.eq.s32.totalorder %s39, 0
      %p276 = por %p274, %p275
      %s278 = sadd.s32 %s277, 1
      %p281 = scmp.eq.s32.totalorder %s33, 1
      %p282 = scmp.ne.s32.totalorder %s277, %s279
      %p283 = scmp.eq.s32.totalorder %s33, 0
      %p284 = por %p282, %p283
      %p285 = scmp.ne.s32.totalorder %s277, %s279
      %p286 = scmp.eq.s32.totalorder %s38, 1
      %p287 = por %p285, %p286
      %p288 = scmp.ne.s32.totalorder %s279, %s280
      %p289 = scmp.eq.s32.totalorder %s38, 0
      %p290 = por %p288, %p289
      %p291 = scmp.ne.s32.totalorder %s279, %s280
      %p292 = scmp.eq.s32.totalorder %s39, 1
      %p293 = por %p291, %p292
      %p295 = scmp.ne.s32.totalorder %s280, %s294
      %p296 = scmp.eq.s32.totalorder %s39, 0
      %p297 = por %p295, %p296
      %s299 = sadd.s32 %s298, 1
      %p302 = scmp.eq.s32.totalorder %s33, 1
      %p303 = scmp.ne.s32.totalorder %s298, %s300
      %p304 = scmp.eq.s32.totalorder %s33, 0
      %p305 = por %p303, %p304
      %p306 = scmp.ne.s32.totalorder %s298, %s300
      %p307 = scmp.eq.s32.totalorder %s38, 1
      %p308 = por %p306, %p307
      %p309 = scmp.ne.s32.totalorder %s300, %s301
      %p310 = scmp.eq.s32.totalorder %s38, 0
      %p311 = por %p309, %p310
      %p312 = scmp.ne.s32.totalorder %s300, %s301
      %p313 = scmp.eq.s32.totalorder %s39, 1
      %p314 = por %p312, %p313
      %p316 = scmp.ne.s32.totalorder %s301, %s315
      %p317 = scmp.eq.s32.totalorder %s39, 0
      %p318 = por %p316, %p317
      %s319 = ssub.s32 %s33, %s40
      %p320 = scmp.eq.s32.totalorder %s319, 0
      %s322 = sadd.s32 %s321, 1
      %s323 = scalar_select %p320, %s321, %s322
      %p326 = pneg %p320
      %p327 = scmp.eq.s32.totalorder %s33, 1
      %p328 = por %p326, %p327
      %p329 = scmp.ne.s32.totalorder %s321, %s324
      %p330 = scmp.eq.s32.totalorder %s33, 0
      %p331 = por %p329, %p330
      %p332 = scmp.ne.s32.totalorder %s321, %s324
      %p333 = scmp.eq.s32.totalorder %s38, 1
      %p334 = por %p332, %p333
      %p335 = scmp.ne.s32.totalorder %s324, %s325
      %p336 = scmp.eq.s32.totalorder %s38, 0
      %p337 = por %p335, %p336
      %p338 = scmp.ne.s32.totalorder %s324, %s325
      %p339 = scmp.eq.s32.totalorder %s39, 1
      %p340 = por %p338, %p339
      %p342 = scmp.ne.s32.totalorder %s325, %s341
      %p343 = scmp.eq.s32.totalorder %s39, 0
      %p344 = por %p342, %p343
      %s345 = ssub.s32 %s33, %s40
      %p346 = scmp.eq.s32.totalorder %s345, 0
      %s348 = sadd.s32 %s347, 1
      %s349 = scalar_select %p346, %s347, %s348
      %p352 = pneg %p346
      %p353 = scmp.eq.s32.totalorder %s33, 1
      %p354 = por %p352, %p353
      %p355 = scmp.ne.s32.totalorder %s347, %s350
      %p356 = scmp.eq.s32.totalorder %s33, 0
      %p357 = por %p355, %p356
      %p358 = scmp.ne.s32.totalorder %s347, %s350
      %p359 = scmp.eq.s32.totalorder %s38, 1
      %p360 = por %p358, %p359
      %p361 = scmp.ne.s32.totalorder %s350, %s351
      %p362 = scmp.eq.s32.totalorder %s38, 0
      %p363 = por %p361, %p362
      %p364 = scmp.ne.s32.totalorder %s350, %s351
      %p365 = scmp.eq.s32.totalorder %s39, 1
      %p366 = por %p364, %p365
      %p368 = scmp.ne.s32.totalorder %s351, %s367
      %p369 = scmp.eq.s32.totalorder %s39, 0
      %p370 = por %p368, %p369
      %s371 = ssub.s32 %s33, %s40
      %p372 = scmp.eq.s32.totalorder %s371, 0
      %s374 = sadd.s32 %s373, 1
      %s375 = scalar_select %p372, %s373, %s374
      %p378 = pneg %p372
      %p379 = scmp.eq.s32.totalorder %s33, 1
      %p380 = por %p378, %p379
      %p381 = scmp.ne.s32.totalorder %s373, %s376
      %p382 = scmp.eq.s32.totalorder %s33, 0
      %p383 = por %p381, %p382
      %p384 = scmp.ne.s32.totalorder %s373, %s376
      %p385 = scmp.eq.s32.totalorder %s38, 1
      %p386 = por %p384, %p385
      %p387 = scmp.ne.s32.totalorder %s376, %s377
      %p388 = scmp.eq.s32.totalorder %s38, 0
      %p389 = por %p387, %p388
      %p390 = scmp.ne.s32.totalorder %s376, %s377
      %p391 = scmp.eq.s32.totalorder %s39, 1
      %p392 = por %p390, %p391
      %p394 = scmp.ne.s32.totalorder %s377, %s393
      %p395 = scmp.eq.s32.totalorder %s39, 0
      %p396 = por %p394, %p395
      %s397 = ssub.s32 %s33, %s40
      %p398 = scmp.eq.s32.totalorder %s397, 0
      %s400 = sadd.s32 %s399, 1
      %s401 = scalar_select %p398, %s399, %s400
      %p404 = pneg %p398
      %p405 = scmp.eq.s32.totalorder %s33, 1
      %p406 = por %p404, %p405
      %p407 = scmp.ne.s32.totalorder %s399, %s402
      %p408 = scmp.eq.s32.totalorder %s33, 0
      %p409 = por %p407, %p408
      %p410 = scmp.ne.s32.totalorder %s399, %s402
      %p411 = scmp.eq.s32.totalorder %s38, 1
      %p412 = por %p410, %p411
      %p413 = scmp.ne.s32.totalorder %s402, %s403
      %p414 = scmp.eq.s32.totalorder %s38, 0
      %p415 = por %p413, %p414
      %p416 = scmp.ne.s32.totalorder %s402, %s403
      %p417 = scmp.eq.s32.totalorder %s39, 1
      %p418 = por %p416, %p417
      %p420 = scmp.ne.s32.totalorder %s403, %s419
      %p421 = scmp.eq.s32.totalorder %s39, 0
      %p422 = por %p420, %p421
      %p423 = scmp.le.s32.totalorder 1, %s33
      %p424 = scmp.lt.s32.totalorder %s33, 3
      %p425 = pnand %p423, %p424
      %p426 = pneg %p425
      // Predicated region
      $region9: #{tpu_custom_call.1} parent=5 // pred_check
        _
      $region10: #{tpu_custom_call.1} parent=5 // pred_check_branch
        %428 = sbr.rel (%p425) target = $region12
      $region11: #{tpu_custom_call.1} parent=5 // pred_region
        %s429 = ssub.s32 %s33, 1
        // Predicated region
        $region13: #{tpu_custom_call.1} parent=11 // pred_check
          %p430 = pneg %p80
        $region14: #{tpu_custom_call.1} parent=11 // pred_check_branch
          %432 = sbr.rel (%p430) target = $region16
        $region15: #{tpu_custom_call.1} parent=11 // pred_region
          _
        $region16: #{tpu_custom_call.1} parent=11 // pred_fallthru
          _
        // Predicated region
        $region17: #{tpu_custom_call.1} parent=11 // pred_check
          %p433 = pneg %p101
        $region18: #{tpu_custom_call.1} parent=11 // pred_check_branch
          %435 = sbr.rel (%p433) target = $region20
        $region19: #{tpu_custom_call.1} parent=11 // pred_region
          _
        $region20: #{tpu_custom_call.1} parent=11 // pred_fallthru
          _
        // Predicated region
        $region21: #{tpu_custom_call.1} parent=11 // pred_check
          %p436 = pneg %p122
        $region22: #{tpu_custom_call.1} parent=11 // pred_check_branch
          %438 = sbr.rel (%p436) target = $region24
        $region23: #{tpu_custom_call.1} parent=11 // pred_region
          _
        $region24: #{tpu_custom_call.1} parent=11 // pred_fallthru
          _
        // Predicated region
        $region25: #{tpu_custom_call.1} parent=11 // pred_check
          %p439 = pneg %p143
        $region26: #{tpu_custom_call.1} parent=11 // pred_check_branch
          %441 = sbr.rel (%p439) target = $region28
        $region27: #{tpu_custom_call.1} parent=11 // pred_region
          _
        $region28: #{tpu_custom_call.1} parent=11 // pred_fallthru
          _
        // Predicated region
        $region29: #{tpu_custom_call.1} parent=11 // pred_check
          %p442 = pneg %p164
        $region30: #{tpu_custom_call.1} parent=11 // pred_check_branch
          %444 = sbr.rel (%p442) target = $region32
        $region31: #{tpu_custom_call.1} parent=11 // pred_region
          _
        $region32: #{tpu_custom_call.1} parent=11 // pred_fallthru
          _
        // Predicated region
        $region33: #{tpu_custom_call.1} parent=11 // pred_check
          %p445 = pneg %p185
        $region34: #{tpu_custom_call.1} parent=11 // pred_check_branch
          %447 = sbr.rel (%p445) target = $region36
        $region35: #{tpu_custom_call.1} parent=11 // pred_region
          %s449 = ssub.s32 6144, 6144
          %450 = vsyncadd [#allocation3], %s449
          %s451 = sshll.u32 [#allocation2], 4
          %s452 = int_to_ptr.vmem [resolvable:$true] %s451
          %457 = dma.hbm_to_vmem [thread:$0]  %s6, 6144, %s452, [#allocation3], 384, 384, 24
        $region36: #{tpu_custom_call.1} parent=11 // pred_fallthru
          _
        // Predicated region
        $region37: #{tpu_custom_call.1} parent=11 // pred_check
          %p458 = pneg %p206
        $region38: #{tpu_custom_call.1} parent=11 // pred_check_branch
          %460 = sbr.rel (%p458) target = $region40
        $region39: #{tpu_custom_call.1} parent=11 // pred_region
          _
        $region40: #{tpu_custom_call.1} parent=11 // pred_fallthru
          _
        // Predicated region
        $region41: #{tpu_custom_call.1} parent=11 // pred_check
          %p461 = pneg %p227
        $region42: #{tpu_custom_call.1} parent=11 // pred_check_branch
          %463 = sbr.rel (%p461) target = $region44
        $region43: #{tpu_custom_call.1} parent=11 // pred_region
          _
        $region44: #{tpu_custom_call.1} parent=11 // pred_fallthru
          _
        // Predicated region
        $region45: #{tpu_custom_call.1} parent=11 // pred_check
          %p464 = pneg %p248
        $region46: #{tpu_custom_call.1} parent=11 // pred_check_branch
          %466 = sbr.rel (%p464) target = $region48
        $region47: #{tpu_custom_call.1} parent=11 // pred_region
          _
        $region48: #{tpu_custom_call.1} parent=11 // pred_fallthru
          _
        // Predicated region
        $region49: #{tpu_custom_call.1} parent=11 // pred_check
          %p467 = pneg %p269
        $region50: #{tpu_custom_call.1} parent=11 // pred_check_branch
          %469 = sbr.rel (%p467) target = $region52
        $region51: #{tpu_custom_call.1} parent=11 // pred_region
          _
        $region52: #{tpu_custom_call.1} parent=11 // pred_fallthru
          _
        // Predicated region
        $region53: #{tpu_custom_call.1} parent=11 // pred_check
          %p470 = pneg %p290
        $region54: #{tpu_custom_call.1} parent=11 // pred_check_branch
          %472 = sbr.rel (%p470) target = $region56
        $region55: #{tpu_custom_call.1} parent=11 // pred_region
          _
        $region56: #{tpu_custom_call.1} parent=11 // pred_fallthru
          _
        // Predicated region
        $region57: #{tpu_custom_call.1} parent=11 // pred_check
          %p473 = pneg %p311
        $region58: #{tpu_custom_call.1} parent=11 // pred_check_branch
          %475 = sbr.rel (%p473) target = $region60
        $region59: #{tpu_custom_call.1} parent=11 // pred_region
          _
        $region60: #{tpu_custom_call.1} parent=11 // pred_fallthru
          _
      $region12: #{tpu_custom_call.1} parent=5 // pred_fallthru
        _
      %p476 = scmp.lt.s32.totalorder %s33, 2
      // Predicated region
      $region61: #{tpu_custom_call.1} parent=5 // pred_check
        %p477 = pneg %p476
      $region62: #{tpu_custom_call.1} parent=5 // pred_check_branch
        %479 = sbr.rel (%p477) target = $region64
      $region63: #{tpu_custom_call.1} parent=5 // pred_region
        // Predicated region
        $region65: #{tpu_custom_call.1} parent=63 // pred_check
          %p480 = pneg %p53
        $region66: #{tpu_custom_call.1} parent=63 // pred_check_branch
          %482 = sbr.rel (%p480) target = $region68
        $region67: #{tpu_custom_call.1} parent=63 // pred_region
          %p483 = scmp.lt.s32.totalorder %s33, 1
          %s484 = scalar_select %p483, %s33, 1
          %s485 = smul.addr %s484, 8
          %s486 = scalar_lea.vmem %s0, %s485
        $region68: #{tpu_custom_call.1} parent=63 // pred_fallthru
          _
      $region64: #{tpu_custom_call.1} parent=5 // pred_fallthru
        _
      %p487 = scmp.le.s32.totalorder 1, %s33
      %p488 = scmp.lt.s32.totalorder %s33, 3
      %p489 = pnand %p487, %p488
      %p490 = pneg %p489
      // Predicated region
      $region69: #{tpu_custom_call.1} parent=5 // pred_check
        _
      $region70: #{tpu_custom_call.1} parent=5 // pred_check_branch
        %492 = sbr.rel (%p489) target = $region72
      $region71: #{tpu_custom_call.1} parent=5 // pred_region
        %s493 = ssub.s32 %s33, 1
        // Predicated region
        $region73: #{tpu_custom_call.1} parent=71 // pred_check
          %p494 = pneg %p185
        $region74: #{tpu_custom_call.1} parent=71 // pred_check_branch
          %496 = sbr.rel (%p494) target = $region76
        $region75: #{tpu_custom_call.1} parent=71 // pred_region
          %497 = dma.done [#allocation3], 6144
        $region76: #{tpu_custom_call.1} parent=71 // pred_fallthru
          _
        %p498 = scmp.lt.s32.totalorder %s38, 1
        %s499 = scalar_select %p498, %s38, 1
        %s500 = smul.addr %s499, 8
        %s501 = scalar_lea.vmem %s0, %s500
        %p502 = pneg %p59
        %p503 = pneg %p56
        %p504 = pneg %p80
        %p505 = pneg %p77
        %p506 = pneg %p101
        %p507 = pneg %p98
        %p508 = pneg %p122
        %p509 = pneg %p119
        %p510 = pneg %p143
        %p511 = pneg %p140
        %p512 = pneg %p164
        %p513 = pneg %p161
        %p514 = pneg %p185
        %p515 = pneg %p182
        %p516 = pneg %p206
        %p517 = pneg %p203
        %p518 = pneg %p227
        %p519 = pneg %p224
        %p520 = pneg %p248
        %p521 = pneg %p245
        %p522 = pneg %p269
        %p523 = pneg %p266
        %p524 = pneg %p290
        %p525 = pneg %p287
        %p526 = pneg %p311
        %p527 = pneg %p308
        %p528 = pneg %p337
        %p529 = pneg %p334
        %s530 = sand.u32 %s324, 1
        %s531 = scalar_lea.sflag [#allocation4], %s530
        %s532 = sand.u32 %s324, 1
        %s533 = smul.addr %s532, 8
        %s534 = scalar_lea.vmem [#allocation5], %s533
        %p535 = pneg %p363
        %p536 = pneg %p360
        %s537 = sand.u32 %s38, 1
        %s538 = scalar_lea.sflag [#allocation7], %s537
        %s539 = sand.u32 %s350, 1
        %s540 = smul.addr %s539, 8
        %s541 = scalar_lea.vmem [#allocation6], %s540
        %p542 = pneg %p389
        %p543 = pneg %p386
        %s544 = sand.u32 %s38, 1
        %s545 = scalar_lea.sflag [#allocation7], %s544
        %s546 = sand.u32 %s376, 1
        %s547 = smul.addr %s546, 8
        %s548 = scalar_lea.vmem [#allocation8], %s547
        %p549 = pneg %p415
        %p550 = pneg %p412
        %s551 = sand.u32 %s402, 1
        %s552 = scalar_lea.sflag [#allocation10], %s551
        %s553 = sand.u32 %s402, 1
        %s554 = smul.addr %s553, 8
        %s555 = scalar_lea.vmem [#allocation9], %s554
        %p556 = scmp.lt.s32.totalorder %s38, 1
        %s557 = scalar_select %p556, %s38, 1
        %s558 = smul.addr %s557, 8
        %s559 = scalar_lea.vmem %s0, %s558
        %v560 = vld [vmem:[%s559] sm:$0xff]
        %562 = vrot.lane.b32.xlu0 %v560, 1
        %v563 = vpop.permute.xlu0 %562
        %vm565 = vcmask 7168
        %v566 = vsel %vm565, %v560, %v563
        %567 = vrot.lane.b32.xlu0 %v560, 127
        %v568 = vpop.permute.xlu0 %567
        %vm570 = vcmask 252928
        %v571 = vsel %vm570, %v568, %v560
        %v572 = vld [vmem:[%s2] sm:$0xff]
        %v573 = vld [vmem:[%s2 + $0x8] sm:$0xff]
        %v574 = vld [vmem:[%s2 + $0x10] sm:$0xff]
        %v575 = vld [vmem:[%s2 + $0x18] sm:$0xff]
        %v576 = vld [vmem:[%s2 + $0x20] sm:$0xff]
        %v577 = vld [vmem:[%s2 + $0x28] sm:$0xff]
        %v578 = vld [vmem:[%s2 + $0x30] sm:$0xff]
        %v579 = vld [vmem:[%s2 + $0x38] sm:$0xff]
        %v580 = vld [vmem:[%s2 + $0x40] sm:$0xff]
        %v581 = vld [vmem:[%s2 + $0x48] sm:$0xff]
        %v582 = vld [vmem:[%s2 + $0x50] sm:$0xff]
        %v583 = vld [vmem:[%s2 + $0x58] sm:$0xff]
        %v584 = vld [vmem:[%s2 + $0x60] sm:$0xff]
        %v585 = vld [vmem:[%s2 + $0x68] sm:$0xff]
        %v586 = vld [vmem:[%s2 + $0x70] sm:$0xff]
        %v587 = vld [vmem:[%s2 + $0x78] sm:$0xff]
        %v588 = vld [vmem:[%s3] sm:$0xff]
        %v589 = vld [vmem:[%s3 + $0x8] sm:$0xff]
        %v590 = vld [vmem:[%s3 + $0x10] sm:$0xff]
        %v591 = vld [vmem:[%s3 + $0x18] sm:$0xff]
        %v592 = vld [vmem:[%s3 + $0x20] sm:$0xff]
        %v593 = vld [vmem:[%s3 + $0x28] sm:$0xff]
        %v594 = vld [vmem:[%s3 + $0x30] sm:$0xff]
        %v595 = vld [vmem:[%s3 + $0x38] sm:$0xff]
        %v596 = vld [vmem:[%s3 + $0x40] sm:$0xff]
        %v597 = vld [vmem:[%s3 + $0x48] sm:$0xff]
        %v598 = vld [vmem:[%s3 + $0x50] sm:$0xff]
        %v599 = vld [vmem:[%s3 + $0x58] sm:$0xff]
        %v600 = vld [vmem:[%s3 + $0x60] sm:$0xff]
        %v601 = vld [vmem:[%s3 + $0x68] sm:$0xff]
        %v602 = vld [vmem:[%s3 + $0x70] sm:$0xff]
        %v603 = vld [vmem:[%s3 + $0x78] sm:$0xff]
        %605 = vset.pattern.permute.xlu0 0
        %606 = vperm.xlu0 %605, %v588
        %v607 = vpop.permute.xlu0 %606
        %610 = vset.pattern.permute.xlu0 0
        %611 = vperm.xlu0 %610, %v589
        %v612 = vpop.permute.xlu0 %611
        %615 = vset.pattern.permute.xlu0 0
        %616 = vperm.xlu0 %615, %v590
        %v617 = vpop.permute.xlu0 %616
        %620 = vset.pattern.permute.xlu0 0
        %621 = vperm.xlu0 %620, %v591
        %v622 = vpop.permute.xlu0 %621
        %625 = vset.pattern.permute.xlu0 0
        %626 = vperm.xlu0 %625, %v592
        %v627 = vpop.permute.xlu0 %626
        %630 = vset.pattern.permute.xlu0 0
        %631 = vperm.xlu0 %630, %v593
        %v632 = vpop.permute.xlu0 %631
        %635 = vset.pattern.permute.xlu0 0
        %636 = vperm.xlu0 %635, %v594
        %v637 = vpop.permute.xlu0 %636
        %640 = vset.pattern.permute.xlu0 0
        %641 = vperm.xlu0 %640, %v595
        %v642 = vpop.permute.xlu0 %641
        %645 = vset.pattern.permute.xlu0 0
        %646 = vperm.xlu0 %645, %v596
        %v647 = vpop.permute.xlu0 %646
        %650 = vset.pattern.permute.xlu0 0
        %651 = vperm.xlu0 %650, %v597
        %v652 = vpop.permute.xlu0 %651
        %655 = vset.pattern.permute.xlu0 0
        %656 = vperm.xlu0 %655, %v598
        %v657 = vpop.permute.xlu0 %656
        %660 = vset.pattern.permute.xlu0 0
        %661 = vperm.xlu0 %660, %v599
        %v662 = vpop.permute.xlu0 %661
        %665 = vset.pattern.permute.xlu0 0
        %666 = vperm.xlu0 %665, %v600
        %v667 = vpop.permute.xlu0 %666
        %670 = vset.pattern.permute.xlu0 0
        %671 = vperm.xlu0 %670, %v601
        %v672 = vpop.permute.xlu0 %671
        %675 = vset.pattern.permute.xlu0 0
        %676 = vperm.xlu0 %675, %v602
        %v677 = vpop.permute.xlu0 %676
        %680 = vset.pattern.permute.xlu0 0
        %681 = vperm.xlu0 %680, %v603
        %v682 = vpop.permute.xlu0 %681
        %vm684 = vcmask 195584
        %v686 = vsel %vm684, %v572, 0
        %v689 = vsel %vm684, %v573, 0
        %v692 = vsel %vm684, %v574, 0
        %v695 = vsel %vm684, %v575, 0
        %v698 = vsel %vm684, %v576, 0
        %v701 = vsel %vm684, %v577, 0
        %v704 = vsel %vm684, %v578, 0
        %v707 = vsel %vm684, %v579, 0
        %v710 = vsel %vm684, %v580, 0
        %v713 = vsel %vm684, %v581, 0
        %v716 = vsel %vm684, %v582, 0
        %v719 = vsel %vm684, %v583, 0
        %v722 = vsel %vm684, %v584, 0
        %v725 = vsel %vm684, %v585, 0
        %v728 = vsel %vm684, %v586, 0
        %v731 = vsel %vm684, %v587, 0
        %733 = vmatprep.subr.mxu0 0.0
        %734 = vmatpush1.msra.mxu0 %v566
        %735 = vmatprep.subr.mxu0 0.0
        %736 = vmatpush1.msra.mxu0 %v560
        %737 = vmatprep.subr.mxu0 0.0
        %738 = vmatpush1.msra.mxu0 %v571
        %739 = vmatprep.subr.mxu0 0.0
        %740 = vmatpush1.msra.mxu0 0.0
        %741 = vmatprep.subr.mxu0 0.0
        %742 = vmatpush1.msra.mxu0 0.0
        %743 = vmatprep.subr.mxu0 0.0
        %744 = vmatpush1.msra.mxu0 0.0
        %745 = vmatprep.subr.mxu0 0.0
        %746 = vmatpush1.msra.mxu0 0.0
        %747 = vmatprep.subr.mxu0 0.0
        %748 = vmatpush1.msra.mxu0 0.0
        %749 = vmatprep.subr.mxu0 0.0
        %750 = vmatpush1.msra.mxu0 0.0
        %751 = vmatprep.subr.mxu0 0.0
        %752 = vmatpush1.msra.mxu0 0.0
        %753 = vmatprep.subr.mxu0 0.0
        %754 = vmatpush1.msra.mxu0 0.0
        %755 = vmatprep.subr.mxu0 0.0
        %756 = vmatpush1.msra.mxu0 0.0
        %757 = vmatprep.subr.mxu0 0.0
        %758 = vmatpush1.msra.mxu0 0.0
        %759 = vmatprep.subr.mxu0 0.0
        %760 = vmatpush1.msra.mxu0 0.0
        %761 = vmatprep.subr.mxu0 0.0
        %762 = vmatpush1.msra.mxu0 0.0
        %763 = vmatprep.subr.mxu0 0.0
        %764 = vmatpush1.msra.mxu0 0.0
        %765 = vmatprep.subr.mxu0 0.0
        %766 = vmatpush1.msra.mxu0 0.0
        %767 = vmatprep.subr.mxu0 0.0
        %768 = vmatpush1.msra.mxu0 0.0
        %769 = vmatprep.subr.mxu0 0.0
        %770 = vmatpush1.msra.mxu0 0.0
        %771 = vmatprep.subr.mxu0 0.0
        %772 = vmatpush1.msra.mxu0 0.0
        %773 = vmatprep.subr.mxu0 0.0
        %774 = vmatpush1.msra.mxu0 0.0
        %775 = vmatprep.subr.mxu0 0.0
        %776 = vmatpush1.msra.mxu0 0.0
        %777 = vmatprep.subr.mxu0 0.0
        %778 = vmatpush1.msra.mxu0 0.0
        %779 = vmatprep.subr.mxu0 0.0
        %780 = vmatpush1.msra.mxu0 0.0
        %781 = vmatprep.subr.mxu0 0.0
        %782 = vmatpush1.msra.mxu0 0.0
        %783 = vmatprep.subr.mxu0 0.0
        %784 = vmatpush1.msra.mxu0 0.0
        %785 = vmatprep.subr.mxu0 0.0
        %786 = vmatpush1.msra.mxu0 0.0
        %787 = vmatprep.subr.mxu0 0.0
        %788 = vmatpush1.msra.mxu0 0.0
        %789 = vmatprep.subr.mxu0 0.0
        %790 = vmatpush1.msra.mxu0 0.0
        %791 = vmatprep.subr.mxu0 0.0
        %792 = vmatpush1.msra.mxu0 0.0
        %793 = vmatprep.subr.mxu0 0.0
        %794 = vmatpush1.msra.mxu0 0.0
        %795 = vmatprep.subr.mxu0 0.0
        %796 = vmatpush1.msra.mxu0 0.0
        %797 = vmatprep.mubr.f32.mxu0 0.0
        %798 = vmatmul.mubr.f32.gmra.mrb[0].mxu0 %v686
        %v799 = vpop.f32.mrb[0].mxu0
        %v800 = vadd.f32 %v607, %v799
        %v801 = vpop.f32.mrb[0].mxu0
        %802 = vmatprep.mubr.f32.mxu0 0.0
        %803 = vmatmul.mubr.f32.gmra.mrb[0].mxu0 %v689
        %v804 = vpop.f32.mrb[0].mxu0
        %v805 = vadd.f32 %v612, %v804
        %v806 = vpop.f32.mrb[0].mxu0
        %807 = vmatprep.mubr.f32.mxu0 0.0
        %808 = vmatmul.mubr.f32.gmra.mrb[0].mxu0 %v692
        %v809 = vpop.f32.mrb[0].mxu0
        %v810 = vadd.f32 %v617, %v809
        %v811 = vpop.f32.mrb[0].mxu0
        %812 = vmatprep.mubr.f32.mxu0 0.0
        %813 = vmatmul.mubr.f32.gmra.mrb[0].mxu0 %v695
        %v814 = vpop.f32.mrb[0].mxu0
        %v815 = vadd.f32 %v622, %v814
        %v816 = vpop.f32.mrb[0].mxu0
        %817 = vmatprep.mubr.f32.mxu0 0.0
        %818 = vmatmul.mubr.f32.gmra.mrb[0].mxu0 %v698
        %v819 = vpop.f32.mrb[0].mxu0
        %v820 = vadd.f32 %v627, %v819
        %v821 = vpop.f32.mrb[0].mxu0
        %822 = vmatprep.mubr.f32.mxu0 0.0
        %823 = vmatmul.mubr.f32.gmra.mrb[0].mxu0 %v701
        %v824 = vpop.f32.mrb[0].mxu0
        %v825 = vadd.f32 %v632, %v824
        %v826 = vpop.f32.mrb[0].mxu0
        %827 = vmatprep.mubr.f32.mxu0 0.0
        %828 = vmatmul.mubr.f32.gmra.mrb[0].mxu0 %v704
        %v829 = vpop.f32.mrb[0].mxu0
        %v830 = vadd.f32 %v637, %v829
        %v831 = vpop.f32.mrb[0].mxu0
        %832 = vmatprep.mubr.f32.mxu0 0.0
        %833 = vmatmul.mubr.f32.gmra.mrb[0].mxu0 %v707
        %v834 = vpop.f32.mrb[0].mxu0
        %v835 = vadd.f32 %v642, %v834
        %v836 = vpop.f32.mrb[0].mxu0
        %837 = vmatprep.mubr.f32.mxu0 0.0
        %838 = vmatmul.mubr.f32.gmra.mrb[0].mxu0 %v710
        %v839 = vpop.f32.mrb[0].mxu0
        %v840 = vadd.f32 %v647, %v839
        %v841 = vpop.f32.mrb[0].mxu0
        %842 = vmatprep.mubr.f32.mxu0 0.0
        %843 = vmatmul.mubr.f32.gmra.mrb[0].mxu0 %v713
        %v844 = vpop.f32.mrb[0].mxu0
        %v845 = vadd.f32 %v652, %v844
        %v846 = vpop.f32.mrb[0].mxu0
        %847 = vmatprep.mubr.f32.mxu0 0.0
        %848 = vmatmul.mubr.f32.gmra.mrb[0].mxu0 %v716
        %v849 = vpop.f32.mrb[0].mxu0
        %v850 = vadd.f32 %v657, %v849
        %v851 = vpop.f32.mrb[0].mxu0
        %852 = vmatprep.mubr.f32.mxu0 0.0
        %853 = vmatmul.mubr.f32.gmra.mrb[0].mxu0 %v719
        %v854 = vpop.f32.mrb[0].mxu0
        %v855 = vadd.f32 %v662, %v854
        %v856 = vpop.f32.mrb[0].mxu0
        %857 = vmatprep.mubr.f32.mxu0 0.0
        %858 = vmatmul.mubr.f32.gmra.mrb[0].mxu0 %v722
        %v859 = vpop.f32.mrb[0].mxu0
        %v860 = vadd.f32 %v667, %v859
        %v861 = vpop.f32.mrb[0].mxu0
        %862 = vmatprep.mubr.f32.mxu0 0.0
        %863 = vmatmul.mubr.f32.gmra.mrb[0].mxu0 %v725
        %v864 = vpop.f32.mrb[0].mxu0
        %v865 = vadd.f32 %v672, %v864
        %v866 = vpop.f32.mrb[0].mxu0
        %867 = vmatprep.mubr.f32.mxu0 0.0
        %868 = vmatmul.mubr.f32.gmra.mrb[0].mxu0 %v728
        %v869 = vpop.f32.mrb[0].mxu0
        %v870 = vadd.f32 %v677, %v869
        %v871 = vpop.f32.mrb[0].mxu0
        %872 = vmatprep.mubr.f32.mxu0 0.0
        %873 = vmatmul.mubr.f32.gmra.mrb[0].mxu0 %v731
        %v874 = vpop.f32.mrb[0].mxu0
        %v875 = vadd.f32 %v682, %v874
        %v876 = vpop.f32.mrb[0].mxu0
        %877 = vdwg.mxu0
        %v878 = vmax.f32 %v800, 0.0
        %v879 = vmax.f32 %v805, 0.0
        %v880 = vmax.f32 %v810, 0.0
        %v881 = vmax.f32 %v815, 0.0
        %v882 = vmax.f32 %v820, 0.0
        %v883 = vmax.f32 %v825, 0.0
        %v884 = vmax.f32 %v830, 0.0
        %v885 = vmax.f32 %v835, 0.0
        %v886 = vmax.f32 %v840, 0.0
        %v887 = vmax.f32 %v845, 0.0
        %v888 = vmax.f32 %v850, 0.0
        %v889 = vmax.f32 %v855, 0.0
        %v890 = vmax.f32 %v860, 0.0
        %v891 = vmax.f32 %v865, 0.0
        %v892 = vmax.f32 %v870, 0.0
        %v893 = vmax.f32 %v875, 0.0
        %910 = vrot.lane.b32.xlu0 %v878, 1
        %v911 = vpop.permute.xlu0 %910
        %912 = vrot.lane.b32.xlu0 %v879, 1
        %v913 = vpop.permute.xlu0 %912
        %914 = vrot.lane.b32.xlu0 %v880, 1
        %v915 = vpop.permute.xlu0 %914
        %916 = vrot.lane.b32.xlu0 %v881, 1
        %v917 = vpop.permute.xlu0 %916
        %918 = vrot.lane.b32.xlu0 %v882, 1
        %v919 = vpop.permute.xlu0 %918
        %920 = vrot.lane.b32.xlu0 %v883, 1
        %v921 = vpop.permute.xlu0 %920
        %922 = vrot.lane.b32.xlu0 %v884, 1
        %v923 = vpop.permute.xlu0 %922
        %924 = vrot.lane.b32.xlu0 %v885, 1
        %v925 = vpop.permute.xlu0 %924
        %926 = vrot.lane.b32.xlu0 %v886, 1
        %v927 = vpop.permute.xlu0 %926
        %928 = vrot.lane.b32.xlu0 %v887, 1
        %v929 = vpop.permute.xlu0 %928
        %930 = vrot.lane.b32.xlu0 %v888, 1
        %v931 = vpop.permute.xlu0 %930
        %932 = vrot.lane.b32.xlu0 %v889, 1
        %v933 = vpop.permute.xlu0 %932
        %934 = vrot.lane.b32.xlu0 %v890, 1
        %v935 = vpop.permute.xlu0 %934
        %936 = vrot.lane.b32.xlu0 %v891, 1
        %v937 = vpop.permute.xlu0 %936
        %938 = vrot.lane.b32.xlu0 %v892, 1
        %v939 = vpop.permute.xlu0 %938
        %940 = vrot.lane.b32.xlu0 %v893, 1
        %v941 = vpop.permute.xlu0 %940
        %v958 = vsel %vm565, %v878, %v911
        %v959 = vsel %vm565, %v879, %v913
        %v960 = vsel %vm565, %v880, %v915
        %v961 = vsel %vm565, %v881, %v917
        %v962 = vsel %vm565, %v882, %v919
        %v963 = vsel %vm565, %v883, %v921
        %v964 = vsel %vm565, %v884, %v923
        %v965 = vsel %vm565, %v885, %v925
        %v966 = vsel %vm565, %v886, %v927
        %v967 = vsel %vm565, %v887, %v929
        %v968 = vsel %vm565, %v888, %v931
        %v969 = vsel %vm565, %v889, %v933
        %v970 = vsel %vm565, %v890, %v935
        %v971 = vsel %vm565, %v891, %v937
        %v972 = vsel %vm565, %v892, %v939
        %v973 = vsel %vm565, %v893, %v941
        %974 = vrot.lane.b32.xlu0 %v878, 127
        %v975 = vpop.permute.xlu0 %974
        %976 = vrot.lane.b32.xlu0 %v879, 127
        %v977 = vpop.permute.xlu0 %976
        %978 = vrot.lane.b32.xlu0 %v880, 127
        %v979 = vpop.permute.xlu0 %978
        %980 = vrot.lane.b32.xlu0 %v881, 127
        %v981 = vpop.permute.xlu0 %980
        %982 = vrot.lane.b32.xlu0 %v882, 127
        %v983 = vpop.permute.xlu0 %982
        %984 = vrot.lane.b32.xlu0 %v883, 127
        %v985 = vpop.permute.xlu0 %984
        %986 = vrot.lane.b32.xlu0 %v884, 127
        %v987 = vpop.permute.xlu0 %986
        %988 = vrot.lane.b32.xlu0 %v885, 127
        %v989 = vpop.permute.xlu0 %988
        %990 = vrot.lane.b32.xlu0 %v886, 127
        %v991 = vpop.permute.xlu0 %990
        %992 = vrot.lane.b32.xlu0 %v887, 127
        %v993 = vpop.permute.xlu0 %992
        %994 = vrot.lane.b32.xlu0 %v888, 127
        %v995 = vpop.permute.xlu0 %994
        %996 = vrot.lane.b32.xlu0 %v889, 127
        %v997 = vpop.permute.xlu0 %996
        %998 = vrot.lane.b32.xlu0 %v890, 127
        %v999 = vpop.permute.xlu0 %998
        %1000 = vrot.lane.b32.xlu0 %v891, 127
        %v1001 = vpop.permute.xlu0 %1000
        %1002 = vrot.lane.b32.xlu0 %v892, 127
        %v1003 = vpop.permute.xlu0 %1002
        %1004 = vrot.lane.b32.xlu0 %v893, 127
        %v1005 = vpop.permute.xlu0 %1004
        %v1022 = vsel %vm570, %v975, %v878
        %v1023 = vsel %vm570, %v977, %v879
        %v1024 = vsel %vm570, %v979, %v880
        %v1025 = vsel %vm570, %v981, %v881
        %v1026 = vsel %vm570, %v983, %v882
        %v1027 = vsel %vm570, %v985, %v883
        %v1028 = vsel %vm570, %v987, %v884
        %v1029 = vsel %vm570, %v989, %v885
        %v1030 = vsel %vm570, %v991, %v886
        %v1031 = vsel %vm570, %v993, %v887
        %v1032 = vsel %vm570, %v995, %v888
        %v1033 = vsel %vm570, %v997, %v889
        %v1034 = vsel %vm570, %v999, %v890
        %v1035 = vsel %vm570, %v1001, %v891
        %v1036 = vsel %vm570, %v1003, %v892
        %v1037 = vsel %vm570, %v1005, %v893
        %v1038 = vld [vmem:[%s4] sm:$0xff]
        %v1039 = vld [vmem:[%s4 + $0x8] sm:$0xff]
        %v1040 = vld [vmem:[%s4 + $0x10] sm:$0xff]
        %v1041 = vld [vmem:[%s4 + $0x18] sm:$0xff]
        %v1042 = vld [vmem:[%s4 + $0x20] sm:$0xff]
        %v1043 = vld [vmem:[%s4 + $0x28] sm:$0xff]
        %v1044 = vld [vmem:[%s4 + $0x30] sm:$0xff]
        %v1045 = vld [vmem:[%s4 + $0x38] sm:$0xff]
        %v1046 = vld [vmem:[%s4 + $0x40] sm:$0xff]
        %v1047 = vld [vmem:[%s4 + $0x48] sm:$0xff]
        %v1048 = vld [vmem:[%s4 + $0x50] sm:$0xff]
        %v1049 = vld [vmem:[%s4 + $0x58] sm:$0xff]
        %v1050 = vld [vmem:[%s4 + $0x60] sm:$0xff]
        %v1051 = vld [vmem:[%s4 + $0x68] sm:$0xff]
        %v1052 = vld [vmem:[%s4 + $0x70] sm:$0xff]
        %v1053 = vld [vmem:[%s4 + $0x78] sm:$0xff]
        %v1054 = vld [vmem:[%s4 + $0x80] sm:$0xff]
        %v1055 = vld [vmem:[%s4 + $0x88] sm:$0xff]
        %v1056 = vld [vmem:[%s4 + $0x90] sm:$0xff]
        %v1057 = vld [vmem:[%s4 + $0x98] sm:$0xff]
        %v1058 = vld [vmem:[%s4 + $0xa0] sm:$0xff]
        %v1059 = vld [vmem:[%s4 + $0xa8] sm:$0xff]
        %v1060 = vld [vmem:[%s4 + $0xb0] sm:$0xff]
        %v1061 = vld [vmem:[%s4 + $0xb8] sm:$0xff]
        %v1062 = vld [vmem:[%s4 + $0xc0] sm:$0xff]
        %v1063 = vld [vmem:[%s4 + $0xc8] sm:$0xff]
        %v1064 = vld [vmem:[%s4 + $0xd0] sm:$0xff]
        %v1065 = vld [vmem:[%s4 + $0xd8] sm:$0xff]
        %v1066 = vld [vmem:[%s4 + $0xe0] sm:$0xff]
        %v1067 = vld [vmem:[%s4 + $0xe8] sm:$0xff]
        %v1068 = vld [vmem:[%s4 + $0xf0] sm:$0xff]
        %v1069 = vld [vmem:[%s4 + $0xf8] sm:$0xff]
        %v1070 = vld [vmem:[%s4 + $0x100] sm:$0xff]
        %v1071 = vld [vmem:[%s4 + $0x108] sm:$0xff]
        %v1072 = vld [vmem:[%s4 + $0x110] sm:$0xff]
        %v1073 = vld [vmem:[%s4 + $0x118] sm:$0xff]
        %v1074 = vld [vmem:[%s4 + $0x120] sm:$0xff]
        %v1075 = vld [vmem:[%s4 + $0x128] sm:$0xff]
        %v1076 = vld [vmem:[%s4 + $0x130] sm:$0xff]
        %v1077 = vld [vmem:[%s4 + $0x138] sm:$0xff]
        %v1078 = vld [vmem:[%s4 + $0x140] sm:$0xff]
        %v1079 = vld [vmem:[%s4 + $0x148] sm:$0xff]
        %v1080 = vld [vmem:[%s4 + $0x150] sm:$0xff]
        %v1081 = vld [vmem:[%s4 + $0x158] sm:$0xff]
        %v1082 = vld [vmem:[%s4 + $0x160] sm:$0xff]
        %v1083 = vld [vmem:[%s4 + $0x168] sm:$0xff]
        %v1084 = vld [vmem:[%s4 + $0x170] sm:$0xff]
        %v1085 = vld [vmem:[%s4 + $0x178] sm:$0xff]
        %v1086 = vld [vmem:[%s5] sm:$0xff]
        %v1087 = vld [vmem:[%s5 + $0x8] sm:$0xff]
        %v1088 = vld [vmem:[%s5 + $0x10] sm:$0xff]
        %v1089 = vld [vmem:[%s5 + $0x18] sm:$0xff]
        %v1090 = vld [vmem:[%s5 + $0x20] sm:$0xff]
        %v1091 = vld [vmem:[%s5 + $0x28] sm:$0xff]
        %v1092 = vld [vmem:[%s5 + $0x30] sm:$0xff]
        %v1093 = vld [vmem:[%s5 + $0x38] sm:$0xff]
        %v1094 = vld [vmem:[%s5 + $0x40] sm:$0xff]
        %v1095 = vld [vmem:[%s5 + $0x48] sm:$0xff]
        %v1096 = vld [vmem:[%s5 + $0x50] sm:$0xff]
        %v1097 = vld [vmem:[%s5 + $0x58] sm:$0xff]
        %v1098 = vld [vmem:[%s5 + $0x60] sm:$0xff]
        %v1099 = vld [vmem:[%s5 + $0x68] sm:$0xff]
        %v1100 = vld [vmem:[%s5 + $0x70] sm:$0xff]
        %v1101 = vld [vmem:[%s5 + $0x78] sm:$0xff]
        %1103 = vset.pattern.permute.xlu0 0
        %1104 = vperm.xlu0 %1103, %v1086
        %v1105 = vpop.permute.xlu0 %1104
        %1108 = vset.pattern.permute.xlu0 0
        %1109 = vperm.xlu0 %1108, %v1087
        %v1110 = vpop.permute.xlu0 %1109
        %1113 = vset.pattern.permute.xlu0 0
        %1114 = vperm.xlu0 %1113, %v1088
        %v1115 = vpop.permute.xlu0 %1114
        %1118 = vset.pattern.permute.xlu0 0
        %1119 = vperm.xlu0 %1118, %v1089
        %v1120 = vpop.permute.xlu0 %1119
        %1123 = vset.pattern.permute.xlu0 0
        %1124 = vperm.xlu0 %1123, %v1090
        %v1125 = vpop.permute.xlu0 %1124
        %1128 = vset.pattern.permute.xlu0 0
        %1129 = vperm.xlu0 %1128, %v1091
        %v1130 = vpop.permute.xlu0 %1129
        %1133 = vset.pattern.permute.xlu0 0
        %1134 = vperm.xlu0 %1133, %v1092
        %v1135 = vpop.permute.xlu0 %1134
        %1138 = vset.pattern.permute.xlu0 0
        %1139 = vperm.xlu0 %1138, %v1093
        %v1140 = vpop.permute.xlu0 %1139
        %1143 = vset.pattern.permute.xlu0 0
        %1144 = vperm.xlu0 %1143, %v1094
        %v1145 = vpop.permute.xlu0 %1144
        %1148 = vset.pattern.permute.xlu0 0
        %1149 = vperm.xlu0 %1148, %v1095
        %v1150 = vpop.permute.xlu0 %1149
        %1153 = vset.pattern.permute.xlu0 0
        %1154 = vperm.xlu0 %1153, %v1096
        %v1155 = vpop.permute.xlu0 %1154
        %1158 = vset.pattern.permute.xlu0 0
        %1159 = vperm.xlu0 %1158, %v1097
        %v1160 = vpop.permute.xlu0 %1159
        %1163 = vset.pattern.permute.xlu0 0
        %1164 = vperm.xlu0 %1163, %v1098
        %v1165 = vpop.permute.xlu0 %1164
        %1168 = vset.pattern.permute.xlu0 0
        %1169 = vperm.xlu0 %1168, %v1099
        %v1170 = vpop.permute.xlu0 %1169
        %1173 = vset.pattern.permute.xlu0 0
        %1174 = vperm.xlu0 %1173, %v1100
        %v1175 = vpop.permute.xlu0 %1174
        %1178 = vset.pattern.permute.xlu0 0
        %1179 = vperm.xlu0 %1178, %v1101
        %v1180 = vpop.permute.xlu0 %1179
        %1182 = vmatprep.subr.mxu0 0.0
        %1183 = vmatpush1.msra.mxu0 %v958
        %1184 = vmatprep.subr.mxu0 0.0
        %1185 = vmatpush1.msra.mxu0 %v959
        %1186 = vmatprep.subr.mxu0 0.0
        %1187 = vmatpush1.msra.mxu0 %v960
        %1188 = vmatprep.subr.mxu0 0.0
        %1189 = vmatpush1.msra.mxu0 %v961
        %1190 = vmatprep.subr.mxu0 0.0
        %1191 = vmatpush1.msra.mxu0 %v962
        %1192 = vmatprep.subr.mxu0 0.0
        %1193 = vmatpush1.msra.mxu0 %v963
        %1194 = vmatprep.subr.mxu0 0.0
        %1195 = vmatpush1.msra.mxu0 %v964
        %1196 = vmatprep.subr.mxu0 0.0
        %1197 = vmatpush1.msra.mxu0 %v965
        %1198 = vmatprep.subr.mxu0 0.0
        %1199 = vmatpush1.msra.mxu0 %v966
        %1200 = vmatprep.subr.mxu0 0.0
        %1201 = vmatpush1.msra.mxu0 %v967
        %1202 = vmatprep.subr.mxu0 0.0
        %1203 = vmatpush1.msra.mxu0 %v968
        %1204 = vmatprep.subr.mxu0 0.0
        %1205 = vmatpush1.msra.mxu0 %v969
        %1206 = vmatprep.subr.mxu0 0.0
        %1207 = vmatpush1.msra.mxu0 %v970
        %1208 = vmatprep.subr.mxu0 0.0
        %1209 = vmatpush1.msra.mxu0 %v971
        %1210 = vmatprep.subr.mxu0 0.0
        %1211 = vmatpush1.msra.mxu0 %v972
        %1212 = vmatprep.subr.mxu0 0.0
        %1213 = vmatpush1.msra.mxu0 %v973
        %1214 = vmatprep.subr.mxu0 0.0
        %1215 = vmatpush1.msra.mxu0 %v878
        %1216 = vmatprep.subr.mxu0 0.0
        %1217 = vmatpush1.msra.mxu0 %v879
        %1218 = vmatprep.subr.mxu0 0.0
        %1219 = vmatpush1.msra.mxu0 %v880
        %1220 = vmatprep.subr.mxu0 0.0
        %1221 = vmatpush1.msra.mxu0 %v881
        %1222 = vmatprep.subr.mxu0 0.0
        %1223 = vmatpush1.msra.mxu0 %v882
        %1224 = vmatprep.subr.mxu0 0.0
        %1225 = vmatpush1.msra.mxu0 %v883
        %1226 = vmatprep.subr.mxu0 0.0
        %1227 = vmatpush1.msra.mxu0 %v884
        %1228 = vmatprep.subr.mxu0 0.0
        %1229 = vmatpush1.msra.mxu0 %v885
        %1230 = vmatprep.subr.mxu0 0.0
        %1231 = vmatpush1.msra.mxu0 %v886
        %1232 = vmatprep.subr.mxu0 0.0
        %1233 = vmatpush1.msra.mxu0 %v887
        %1234 = vmatprep.subr.mxu0 0.0
        %1235 = vmatpush1.msra.mxu0 %v888
        %1236 = vmatprep.subr.mxu0 0.0
        %1237 = vmatpush1.msra.mxu0 %v889
        %1238 = vmatprep.subr.mxu0 0.0
        %1239 = vmatpush1.msra.mxu0 %v890
        %1240 = vmatprep.subr.mxu0 0.0
        %1241 = vmatpush1.msra.mxu0 %v891
        %1242 = vmatprep.subr.mxu0 0.0
        %1243 = vmatpush1.msra.mxu0 %v892
        %1244 = vmatprep.subr.mxu0 0.0
        %1245 = vmatpush1.msra.mxu0 %v893
        %1246 = vmatprep.mubr.f32.mxu0 %v1039
        %1247 = vmatmul.mubr.f32.gmra.mrb[0].mxu0 %v1038
        %v1248 = vpop.f32.mrb[0].mxu0
        %v1249 = vadd.f32 %v1105, %v1248
        %v1250 = vpop.f32.mrb[0].mxu0
        %1251 = vmatprep.mubr.f32.mxu0 %v1042
        %1252 = vmatmul.mubr.f32.gmra.mrb[0].mxu0 %v1041
        %v1253 = vpop.f32.mrb[0].mxu0
        %v1254 = vadd.f32 %v1110, %v1253
        %v1255 = vpop.f32.mrb[0].mxu0
        %1256 = vmatprep.mubr.f32.mxu0 %v1045
        %1257 = vmatmul.mubr.f32.gmra.mrb[0].mxu0 %v1044
        %v1258 = vpop.f32.mrb[0].mxu0
        %v1259 = vadd.f32 %v1115, %v1258
        %v1260 = vpop.f32.mrb[0].mxu0
        %1261 = vmatprep.mubr.f32.mxu0 %v1048
        %1262 = vmatmul.mubr.f32.gmra.mrb[0].mxu0 %v1047
        %v1263 = vpop.f32.mrb[0].mxu0
        %v1264 = vadd.f32 %v1120, %v1263
        %v1265 = vpop.f32.mrb[0].mxu0
        %1266 = vmatprep.mubr.f32.mxu0 %v1051
        %1267 = vmatmul.mubr.f32.gmra.mrb[0].mxu0 %v1050
        %v1268 = vpop.f32.mrb[0].mxu0
        %v1269 = vadd.f32 %v1125, %v1268
        %v1270 = vpop.f32.mrb[0].mxu0
        %1271 = vmatprep.mubr.f32.mxu0 %v1054
        %1272 = vmatmul.mubr.f32.gmra.mrb[0].mxu0 %v1053
        %v1273 = vpop.f32.mrb[0].mxu0
        %v1274 = vadd.f32 %v1130, %v1273
        %v1275 = vpop.f32.mrb[0].mxu0
        %1276 = vmatprep.mubr.f32.mxu0 %v1057
        %1277 = vmatmul.mubr.f32.gmra.mrb[0].mxu0 %v1056
        %v1278 = vpop.f32.mrb[0].mxu0
        %v1279 = vadd.f32 %v1135, %v1278
        %v1280 = vpop.f32.mrb[0].mxu0
        %1281 = vmatprep.mubr.f32.mxu0 %v1060
        %1282 = vmatmul.mubr.f32.gmra.mrb[0].mxu0 %v1059
        %v1283 = vpop.f32.mrb[0].mxu0
        %v1284 = vadd.f32 %v1140, %v1283
        %v1285 = vpop.f32.mrb[0].mxu0
        %1286 = vmatprep.mubr.f32.mxu0 %v1063
        %1287 = vmatmul.mubr.f32.gmra.mrb[0].mxu0 %v1062
        %v1288 = vpop.f32.mrb[0].mxu0
        %v1289 = vadd.f32 %v1145, %v1288
        %v1290 = vpop.f32.mrb[0].mxu0
        %1291 = vmatprep.mubr.f32.mxu0 %v1066
        %1292 = vmatmul.mubr.f32.gmra.mrb[0].mxu0 %v1065
        %v1293 = vpop.f32.mrb[0].mxu0
        %v1294 = vadd.f32 %v1150, %v1293
        %v1295 = vpop.f32.mrb[0].mxu0
        %1296 = vmatprep.mubr.f32.mxu0 %v1069
        %1297 = vmatmul.mubr.f32.gmra.mrb[0].mxu0 %v1068
        %v1298 = vpop.f32.mrb[0].mxu0
        %v1299 = vadd.f32 %v1155, %v1298
        %v1300 = vpop.f32.mrb[0].mxu0
        %1301 = vmatprep.mubr.f32.mxu0 %v1072
        %1302 = vmatmul.mubr.f32.gmra.mrb[0].mxu0 %v1071
        %v1303 = vpop.f32.mrb[0].mxu0
        %v1304 = vadd.f32 %v1160, %v1303
        %v1305 = vpop.f32.mrb[0].mxu0
        %1306 = vmatprep.mubr.f32.mxu0 %v1075
        %1307 = vmatmul.mubr.f32.gmra.mrb[0].mxu0 %v1074
        %v1308 = vpop.f32.mrb[0].mxu0
        %v1309 = vadd.f32 %v1165, %v1308
        %v1310 = vpop.f32.mrb[0].mxu0
        %1311 = vmatprep.mubr.f32.mxu0 %v1078
        %1312 = vmatmul.mubr.f32.gmra.mrb[0].mxu0 %v1077
        %v1313 = vpop.f32.mrb[0].mxu0
        %v1314 = vadd.f32 %v1170, %v1313
        %v1315 = vpop.f32.mrb[0].mxu0
        %1316 = vmatprep.mubr.f32.mxu0 %v1081
        %1317 = vmatmul.mubr.f32.gmra.mrb[0].mxu0 %v1080
        %v1318 = vpop.f32.mrb[0].mxu0
        %v1319 = vadd.f32 %v1175, %v1318
        %v1320 = vpop.f32.mrb[0].mxu0
        %1321 = vmatprep.mubr.f32.mxu0 %v1084
        %1322 = vmatmul.mubr.f32.gmra.mrb[0].mxu0 %v1083
        %v1323 = vpop.f32.mrb[0].mxu0
        %v1324 = vadd.f32 %v1180, %v1323
        %v1325 = vpop.f32.mrb[0].mxu0
        %1326 = vdwg.mxu0
        %1327 = vmatprep.subr.mxu0 0.0
        %1328 = vmatpush1.msra.mxu0 %v1022
        %1329 = vmatprep.subr.mxu0 0.0
        %1330 = vmatpush1.msra.mxu0 %v1023
        %1331 = vmatprep.subr.mxu0 0.0
        %1332 = vmatpush1.msra.mxu0 %v1024
        %1333 = vmatprep.subr.mxu0 0.0
        %1334 = vmatpush1.msra.mxu0 %v1025
        %1335 = vmatprep.subr.mxu0 0.0
        %1336 = vmatpush1.msra.mxu0 %v1026
        %1337 = vmatprep.subr.mxu0 0.0
        %1338 = vmatpush1.msra.mxu0 %v1027
        %1339 = vmatprep.subr.mxu0 0.0
        %1340 = vmatpush1.msra.mxu0 %v1028
        %1341 = vmatprep.subr.mxu0 0.0
        %1342 = vmatpush1.msra.mxu0 %v1029
        %1343 = vmatprep.subr.mxu0 0.0
        %1344 = vmatpush1.msra.mxu0 %v1030
        %1345 = vmatprep.subr.mxu0 0.0
        %1346 = vmatpush1.msra.mxu0 %v1031
        %1347 = vmatprep.subr.mxu0 0.0
        %1348 = vmatpush1.msra.mxu0 %v1032
        %1349 = vmatprep.subr.mxu0 0.0
        %1350 = vmatpush1.msra.mxu0 %v1033
        %1351 = vmatprep.subr.mxu0 0.0
        %1352 = vmatpush1.msra.mxu0 %v1034
        %1353 = vmatprep.subr.mxu0 0.0
        %1354 = vmatpush1.msra.mxu0 %v1035
        %1355 = vmatprep.subr.mxu0 0.0
        %1356 = vmatpush1.msra.mxu0 %v1036
        %1357 = vmatprep.subr.mxu0 0.0
        %1358 = vmatpush1.msra.mxu0 %v1037
        %1359 = vmatprep.subr.mxu0 0.0
        %1360 = vmatpush1.msra.mxu0 0.0
        %1361 = vmatprep.subr.mxu0 0.0
        %1362 = vmatpush1.msra.mxu0 0.0
        %1363 = vmatprep.subr.mxu0 0.0
        %1364 = vmatpush1.msra.mxu0 0.0
        %1365 = vmatprep.subr.mxu0 0.0
        %1366 = vmatpush1.msra.mxu0 0.0
        %1367 = vmatprep.subr.mxu0 0.0
        %1368 = vmatpush1.msra.mxu0 0.0
        %1369 = vmatprep.subr.mxu0 0.0
        %1370 = vmatpush1.msra.mxu0 0.0
        %1371 = vmatprep.subr.mxu0 0.0
        %1372 = vmatpush1.msra.mxu0 0.0
        %1373 = vmatprep.subr.mxu0 0.0
        %1374 = vmatpush1.msra.mxu0 0.0
        %1375 = vmatprep.subr.mxu0 0.0
        %1376 = vmatpush1.msra.mxu0 0.0
        %1377 = vmatprep.subr.mxu0 0.0
        %1378 = vmatpush1.msra.mxu0 0.0
        %1379 = vmatprep.subr.mxu0 0.0
        %1380 = vmatpush1.msra.mxu0 0.0
        %1381 = vmatprep.subr.mxu0 0.0
        %1382 = vmatpush1.msra.mxu0 0.0
        %1383 = vmatprep.subr.mxu0 0.0
        %1384 = vmatpush1.msra.mxu0 0.0
        %1385 = vmatprep.subr.mxu0 0.0
        %1386 = vmatpush1.msra.mxu0 0.0
        %1387 = vmatprep.subr.mxu0 0.0
        %1388 = vmatpush1.msra.mxu0 0.0
        %1389 = vmatprep.subr.mxu0 0.0
        %1390 = vmatpush1.msra.mxu0 0.0
        %1391 = vmatprep.mubr.f32.mxu0 0.0
        %1392 = vmatmul.mubr.f32.gmra.mrb[0].mxu0 %v1040
        %v1393 = vpop.f32.mrb[0].mxu0
        %v1394 = vadd.f32 %v1249, %v1393
        %v1395 = vpop.f32.mrb[0].mxu0
        %1396 = vmatprep.mubr.f32.mxu0 0.0
        %1397 = vmatmul.mubr.f32.gmra.mrb[0].mxu0 %v1043
        %v1398 = vpop.f32.mrb[0].mxu0
        %v1399 = vadd.f32 %v1254, %v1398
        %v1400 = vpop.f32.mrb[0].mxu0
        %1401 = vmatprep.mubr.f32.mxu0 0.0
        %1402 = vmatmul.mubr.f32.gmra.mrb[0].mxu0 %v1046
        %v1403 = vpop.f32.mrb[0].mxu0
        %v1404 = vadd.f32 %v1259, %v1403
        %v1405 = vpop.f32.mrb[0].mxu0
        %1406 = vmatprep.mubr.f32.mxu0 0.0
        %1407 = vmatmul.mubr.f32.gmra.mrb[0].mxu0 %v1049
        %v1408 = vpop.f32.mrb[0].mxu0
        %v1409 = vadd.f32 %v1264, %v1408
        %v1410 = vpop.f32.mrb[0].mxu0
        %1411 = vmatprep.mubr.f32.mxu0 0.0
        %1412 = vmatmul.mubr.f32.gmra.mrb[0].mxu0 %v1052
        %v1413 = vpop.f32.mrb[0].mxu0
        %v1414 = vadd.f32 %v1269, %v1413
        %v1415 = vpop.f32.mrb[0].mxu0
        %1416 = vmatprep.mubr.f32.mxu0 0.0
        %1417 = vmatmul.mubr.f32.gmra.mrb[0].mxu0 %v1055
        %v1418 = vpop.f32.mrb[0].mxu0
        %v1419 = vadd.f32 %v1274, %v1418
        %v1420 = vpop.f32.mrb[0].mxu0
        %1421 = vmatprep.mubr.f32.mxu0 0.0
        %1422 = vmatmul.mubr.f32.gmra.mrb[0].mxu0 %v1058
        %v1423 = vpop.f32.mrb[0].mxu0
        %v1424 = vadd.f32 %v1279, %v1423
        %v1425 = vpop.f32.mrb[0].mxu0
        %1426 = vmatprep.mubr.f32.mxu0 0.0
        %1427 = vmatmul.mubr.f32.gmra.mrb[0].mxu0 %v1061
        %v1428 = vpop.f32.mrb[0].mxu0
        %v1429 = vadd.f32 %v1284, %v1428
        %v1430 = vpop.f32.mrb[0].mxu0
        %1431 = vmatprep.mubr.f32.mxu0 0.0
        %1432 = vmatmul.mubr.f32.gmra.mrb[0].mxu0 %v1064
        %v1433 = vpop.f32.mrb[0].mxu0
        %v1434 = vadd.f32 %v1289, %v1433
        %v1435 = vpop.f32.mrb[0].mxu0
        %1436 = vmatprep.mubr.f32.mxu0 0.0
        %1437 = vmatmul.mubr.f32.gmra.mrb[0].mxu0 %v1067
        %v1438 = vpop.f32.mrb[0].mxu0
        %v1439 = vadd.f32 %v1294, %v1438
        %v1440 = vpop.f32.mrb[0].mxu0
        %1441 = vmatprep.mubr.f32.mxu0 0.0
        %1442 = vmatmul.mubr.f32.gmra.mrb[0].mxu0 %v1070
        %v1443 = vpop.f32.mrb[0].mxu0
        %v1444 = vadd.f32 %v1299, %v1443
        %v1445 = vpop.f32.mrb[0].mxu0
        %1446 = vmatprep.mubr.f32.mxu0 0.0
        %1447 = vmatmul.mubr.f32.gmra.mrb[0].mxu0 %v1073
        %v1448 = vpop.f32.mrb[0].mxu0
        %v1449 = vadd.f32 %v1304, %v1448
        %v1450 = vpop.f32.mrb[0].mxu0
        %1451 = vmatprep.mubr.f32.mxu0 0.0
        %1452 = vmatmul.mubr.f32.gmra.mrb[0].mxu0 %v1076
        %v1453 = vpop.f32.mrb[0].mxu0
        %v1454 = vadd.f32 %v1309, %v1453
        %v1455 = vpop.f32.mrb[0].mxu0
        %1456 = vmatprep.mubr.f32.mxu0 0.0
        %1457 = vmatmul.mubr.f32.gmra.mrb[0].mxu0 %v1079
        %v1458 = vpop.f32.mrb[0].mxu0
        %v1459 = vadd.f32 %v1314, %v1458
        %v1460 = vpop.f32.mrb[0].mxu0
        %1461 = vmatprep.mubr.f32.mxu0 0.0
        %1462 = vmatmul.mubr.f32.gmra.mrb[0].mxu0 %v1082
        %v1463 = vpop.f32.mrb[0].mxu0
        %v1464 = vadd.f32 %v1319, %v1463
        %v1465 = vpop.f32.mrb[0].mxu0
        %1466 = vmatprep.mubr.f32.mxu0 0.0
        %1467 = vmatmul.mubr.f32.gmra.mrb[0].mxu0 %v1085
        %v1468 = vpop.f32.mrb[0].mxu0
        %v1469 = vadd.f32 %v1324, %v1468
        %v1470 = vpop.f32.mrb[0].mxu0
        %1471 = vdwg.mxu0
        %v1472 = vadd.f32 %v1394, %v878
        %v1473 = vadd.f32 %v1399, %v879
        %v1474 = vadd.f32 %v1404, %v880
        %v1475 = vadd.f32 %v1409, %v881
        %v1476 = vadd.f32 %v1414, %v882
        %v1477 = vadd.f32 %v1419, %v883
        %v1478 = vadd.f32 %v1424, %v884
        %v1479 = vadd.f32 %v1429, %v885
        %v1480 = vadd.f32 %v1434, %v886
        %v1481 = vadd.f32 %v1439, %v887
        %v1482 = vadd.f32 %v1444, %v888
        %v1483 = vadd.f32 %v1449, %v889
        %v1484 = vadd.f32 %v1454, %v890
        %v1485 = vadd.f32 %v1459, %v891
        %v1486 = vadd.f32 %v1464, %v892
        %v1487 = vadd.f32 %v1469, %v893
        %v1488 = vmax.f32 %v1472, 0.0
        %v1489 = vmax.f32 %v1473, 0.0
        %v1490 = vmax.f32 %v1474, 0.0
        %v1491 = vmax.f32 %v1475, 0.0
        %v1492 = vmax.f32 %v1476, 0.0
        %v1493 = vmax.f32 %v1477, 0.0
        %v1494 = vmax.f32 %v1478, 0.0
        %v1495 = vmax.f32 %v1479, 0.0
        %v1496 = vmax.f32 %v1480, 0.0
        %v1497 = vmax.f32 %v1481, 0.0
        %v1498 = vmax.f32 %v1482, 0.0
        %v1499 = vmax.f32 %v1483, 0.0
        %v1500 = vmax.f32 %v1484, 0.0
        %v1501 = vmax.f32 %v1485, 0.0
        %v1502 = vmax.f32 %v1486, 0.0
        %v1503 = vmax.f32 %v1487, 0.0
        %1520 = vrot.lane.b32.xlu0 %v1488, 1
        %v1521 = vpop.permute.xlu0 %1520
        %1522 = vrot.lane.b32.xlu0 %v1489, 1
        %v1523 = vpop.permute.xlu0 %1522
        %1524 = vrot.lane.b32.xlu0 %v1490, 1
        %v1525 = vpop.permute.xlu0 %1524
        %1526 = vrot.lane.b32.xlu0 %v1491, 1
        %v1527 = vpop.permute.xlu0 %1526
        %1528 = vrot.lane.b32.xlu0 %v1492, 1
        %v1529 = vpop.permute.xlu0 %1528
        %1530 = vrot.lane.b32.xlu0 %v1493, 1
        %v1531 = vpop.permute.xlu0 %1530
        %1532 = vrot.lane.b32.xlu0 %v1494, 1
        %v1533 = vpop.permute.xlu0 %1532
        %1534 = vrot.lane.b32.xlu0 %v1495, 1
        %v1535 = vpop.permute.xlu0 %1534
        %1536 = vrot.lane.b32.xlu0 %v1496, 1
        %v1537 = vpop.permute.xlu0 %1536
        %1538 = vrot.lane.b32.xlu0 %v1497, 1
        %v1539 = vpop.permute.xlu0 %1538
        %1540 = vrot.lane.b32.xlu0 %v1498, 1
        %v1541 = vpop.permute.xlu0 %1540
        %1542 = vrot.lane.b32.xlu0 %v1499, 1
        %v1543 = vpop.permute.xlu0 %1542
        %1544 = vrot.lane.b32.xlu0 %v1500, 1
        %v1545 = vpop.permute.xlu0 %1544
        %1546 = vrot.lane.b32.xlu0 %v1501, 1
        %v1547 = vpop.permute.xlu0 %1546
        %1548 = vrot.lane.b32.xlu0 %v1502, 1
        %v1549 = vpop.permute.xlu0 %1548
        %1550 = vrot.lane.b32.xlu0 %v1503, 1
        %v1551 = vpop.permute.xlu0 %1550
        %v1568 = vsel %vm565, %v1488, %v1521
        %v1569 = vsel %vm565, %v1489, %v1523
        %v1570 = vsel %vm565, %v1490, %v1525
        %v1571 = vsel %vm565, %v1491, %v1527
        %v1572 = vsel %vm565, %v1492, %v1529
        %v1573 = vsel %vm565, %v1493, %v1531
        %v1574 = vsel %vm565, %v1494, %v1533
        %v1575 = vsel %vm565, %v1495, %v1535
        %v1576 = vsel %vm565, %v1496, %v1537
        %v1577 = vsel %vm565, %v1497, %v1539
        %v1578 = vsel %vm565, %v1498, %v1541
        %v1579 = vsel %vm565, %v1499, %v1543
        %v1580 = vsel %vm565, %v1500, %v1545
        %v1581 = vsel %vm565, %v1501, %v1547
        %v1582 = vsel %vm565, %v1502, %v1549
        %v1583 = vsel %vm565, %v1503, %v1551
        %1584 = vrot.lane.b32.xlu0 %v1488, 127
        %v1585 = vpop.permute.xlu0 %1584
        %1586 = vrot.lane.b32.xlu0 %v1489, 127
        %v1587 = vpop.permute.xlu0 %1586
        %1588 = vrot.lane.b32.xlu0 %v1490, 127
        %v1589 = vpop.permute.xlu0 %1588
        %1590 = vrot.lane.b32.xlu0 %v1491, 127
        %v1591 = vpop.permute.xlu0 %1590
        %1592 = vrot.lane.b32.xlu0 %v1492, 127
        %v1593 = vpop.permute.xlu0 %1592
        %1594 = vrot.lane.b32.xlu0 %v1493, 127
        %v1595 = vpop.permute.xlu0 %1594
        %1596 = vrot.lane.b32.xlu0 %v1494, 127
        %v1597 = vpop.permute.xlu0 %1596
        %1598 = vrot.lane.b32.xlu0 %v1495, 127
        %v1599 = vpop.permute.xlu0 %1598
        %1600 = vrot.lane.b32.xlu0 %v1496, 127
        %v1601 = vpop.permute.xlu0 %1600
        %1602 = vrot.lane.b32.xlu0 %v1497, 127
        %v1603 = vpop.permute.xlu0 %1602
        %1604 = vrot.lane.b32.xlu0 %v1498, 127
        %v1605 = vpop.permute.xlu0 %1604
        %1606 = vrot.lane.b32.xlu0 %v1499, 127
        %v1607 = vpop.permute.xlu0 %1606
        %1608 = vrot.lane.b32.xlu0 %v1500, 127
        %v1609 = vpop.permute.xlu0 %1608
        %1610 = vrot.lane.b32.xlu0 %v1501, 127
        %v1611 = vpop.permute.xlu0 %1610
        %1612 = vrot.lane.b32.xlu0 %v1502, 127
        %v1613 = vpop.permute.xlu0 %1612
        %1614 = vrot.lane.b32.xlu0 %v1503, 127
        %v1615 = vpop.permute.xlu0 %1614
        %v1632 = vsel %vm570, %v1585, %v1488
        %v1633 = vsel %vm570, %v1587, %v1489
        %v1634 = vsel %vm570, %v1589, %v1490
        %v1635 = vsel %vm570, %v1591, %v1491
        %v1636 = vsel %vm570, %v1593, %v1492
        %v1637 = vsel %vm570, %v1595, %v1493
        %v1638 = vsel %vm570, %v1597, %v1494
        %v1639 = vsel %vm570, %v1599, %v1495
        %v1640 = vsel %vm570, %v1601, %v1496
        %v1641 = vsel %vm570, %v1603, %v1497
        %v1642 = vsel %vm570, %v1605, %v1498
        %v1643 = vsel %vm570, %v1607, %v1499
        %v1644 = vsel %vm570, %v1609, %v1500
        %v1645 = vsel %vm570, %v1611, %v1501
        %v1646 = vsel %vm570, %v1613, %v1502
        %v1647 = vsel %vm570, %v1615, %v1503
        %v1648 = vld [vmem:[#allocation2] sm:$0xff]
        %v1649 = vld [vmem:[#allocation2 + $0x8] sm:$0xff]
        %v1650 = vld [vmem:[#allocation2 + $0x10] sm:$0xff]
        %v1651 = vld [vmem:[#allocation2 + $0x18] sm:$0xff]
        %v1652 = vld [vmem:[#allocation2 + $0x20] sm:$0xff]
        %v1653 = vld [vmem:[#allocation2 + $0x28] sm:$0xff]
        %v1654 = vld [vmem:[#allocation2 + $0x30] sm:$0xff]
        %v1655 = vld [vmem:[#allocation2 + $0x38] sm:$0xff]
        %v1656 = vld [vmem:[#allocation2 + $0x40] sm:$0xff]
        %v1657 = vld [vmem:[#allocation2 + $0x48] sm:$0xff]
        %v1658 = vld [vmem:[#allocation2 + $0x50] sm:$0xff]
        %v1659 = vld [vmem:[#allocation2 + $0x58] sm:$0xff]
        %v1660 = vld [vmem:[#allocation2 + $0x60] sm:$0xff]
        %v1661 = vld [vmem:[#allocation2 + $0x68] sm:$0xff]
        %v1662 = vld [vmem:[#allocation2 + $0x70] sm:$0xff]
        %v1663 = vld [vmem:[#allocation2 + $0x78] sm:$0xff]
        %v1664 = vld [vmem:[#allocation2 + $0x80] sm:$0xff]
        %v1665 = vld [vmem:[#allocation2 + $0x88] sm:$0xff]
        %v1666 = vld [vmem:[#allocation2 + $0x90] sm:$0xff]
        %v1667 = vld [vmem:[#allocation2 + $0x98] sm:$0xff]
        %v1668 = vld [vmem:[#allocation2 + $0xa0] sm:$0xff]
        %v1669 = vld [vmem:[#allocation2 + $0xa8] sm:$0xff]
        %v1670 = vld [vmem:[#allocation2 + $0xb0] sm:$0xff]
        %v1671 = vld [vmem:[#allocation2 + $0xb8] sm:$0xff]
        %v1672 = vld [vmem:[#allocation2 + $0xc0] sm:$0xff]
        %v1673 = vld [vmem:[#allocation2 + $0xc8] sm:$0xff]
        %v1674 = vld [vmem:[#allocation2 + $0xd0] sm:$0xff]
        %v1675 = vld [vmem:[#allocation2 + $0xd8] sm:$0xff]
        %v1676 = vld [vmem:[#allocation2 + $0xe0] sm:$0xff]
        %v1677 = vld [vmem:[#allocation2 + $0xe8] sm:$0xff]
        %v1678 = vld [vmem:[#allocation2 + $0xf0] sm:$0xff]
        %v1679 = vld [vmem:[#allocation2 + $0xf8] sm:$0xff]
        %v1680 = vld [vmem:[#allocation2 + $0x100] sm:$0xff]
        %v1681 = vld [vmem:[#allocation2 + $0x108] sm:$0xff]
        %v1682 = vld [vmem:[#allocation2 + $0x110] sm:$0xff]
        %v1683 = vld [vmem:[#allocation2 + $0x118] sm:$0xff]
        %v1684 = vld [vmem:[#allocation2 + $0x120] sm:$0xff]
        %v1685 = vld [vmem:[#allocation2 + $0x128] sm:$0xff]
        %v1686 = vld [vmem:[#allocation2 + $0x130] sm:$0xff]
        %v1687 = vld [vmem:[#allocation2 + $0x138] sm:$0xff]
        %v1688 = vld [vmem:[#allocation2 + $0x140] sm:$0xff]
        %v1689 = vld [vmem:[#allocation2 + $0x148] sm:$0xff]
        %v1690 = vld [vmem:[#allocation2 + $0x150] sm:$0xff]
        %v1691 = vld [vmem:[#allocation2 + $0x158] sm:$0xff]
        %v1692 = vld [vmem:[#allocation2 + $0x160] sm:$0xff]
        %v1693 = vld [vmem:[#allocation2 + $0x168] sm:$0xff]
        %v1694 = vld [vmem:[#allocation2 + $0x170] sm:$0xff]
        %v1695 = vld [vmem:[#allocation2 + $0x178] sm:$0xff]
        %v1696 = vld [vmem:[%s7] sm:$0xff]
        %v1697 = vld [vmem:[%s7 + $0x8] sm:$0xff]
        %v1698 = vld [vmem:[%s7 + $0x10] sm:$0xff]
        %v1699 = vld [vmem:[%s7 + $0x18] sm:$0xff]
        %v1700 = vld [vmem:[%s7 + $0x20] sm:$0xff]
        %v1701 = vld [vmem:[%s7 + $0x28] sm:$0xff]
        %v1702 = vld [vmem:[%s7 + $0x30] sm:$0xff]
        %v1703 = vld [vmem:[%s7 + $0x38] sm:$0xff]
        %v1704 = vld [vmem:[%s7 + $0x40] sm:$0xff]
        %v1705 = vld [vmem:[%s7 + $0x48] sm:$0xff]
        %v1706 = vld [vmem:[%s7 + $0x50] sm:$0xff]
        %v1707 = vld [vmem:[%s7 + $0x58] sm:$0xff]
        %v1708 = vld [vmem:[%s7 + $0x60] sm:$0xff]
        %v1709 = vld [vmem:[%s7 + $0x68] sm:$0xff]
        %v1710 = vld [vmem:[%s7 + $0x70] sm:$0xff]
        %v1711 = vld [vmem:[%s7 + $0x78] sm:$0xff]
        %1713 = vset.pattern.permute.xlu0 0
        %1714 = vperm.xlu0 %1713, %v1696
        %v1715 = vpop.permute.xlu0 %1714
        %1718 = vset.pattern.permute.xlu0 0
        %1719 = vperm.xlu0 %1718, %v1697
        %v1720 = vpop.permute.xlu0 %1719
        %1723 = vset.pattern.permute.xlu0 0
        %1724 = vperm.xlu0 %1723, %v1698
        %v1725 = vpop.permute.xlu0 %1724
        %1728 = vset.pattern.permute.xlu0 0
        %1729 = vperm.xlu0 %1728, %v1699
        %v1730 = vpop.permute.xlu0 %1729
        %1733 = vset.pattern.permute.xlu0 0
        %1734 = vperm.xlu0 %1733, %v1700
        %v1735 = vpop.permute.xlu0 %1734
        %1738 = vset.pattern.permute.xlu0 0
        %1739 = vperm.xlu0 %1738, %v1701
        %v1740 = vpop.permute.xlu0 %1739
        %1743 = vset.pattern.permute.xlu0 0
        %1744 = vperm.xlu0 %1743, %v1702
        %v1745 = vpop.permute.xlu0 %1744
        %1748 = vset.pattern.permute.xlu0 0
        %1749 = vperm.xlu0 %1748, %v1703
        %v1750 = vpop.permute.xlu0 %1749
        %1753 = vset.pattern.permute.xlu0 0
        %1754 = vperm.xlu0 %1753, %v1704
        %v1755 = vpop.permute.xlu0 %1754
        %1758 = vset.pattern.permute.xlu0 0
        %1759 = vperm.xlu0 %1758, %v1705
        %v1760 = vpop.permute.xlu0 %1759
        %1763 = vset.pattern.permute.xlu0 0
        %1764 = vperm.xlu0 %1763, %v1706
        %v1765 = vpop.permute.xlu0 %1764
        %1768 = vset.pattern.permute.xlu0 0
        %1769 = vperm.xlu0 %1768, %v1707
        %v1770 = vpop.permute.xlu0 %1769
        %1773 = vset.pattern.permute.xlu0 0
        %1774 = vperm.xlu0 %1773, %v1708
        %v1775 = vpop.permute.xlu0 %1774
        %1778 = vset.pattern.permute.xlu0 0
        %1779 = vperm.xlu0 %1778, %v1709
        %v1780 = vpop.permute.xlu0 %1779
        %1783 = vset.pattern.permute.xlu0 0
        %1784 = vperm.xlu0 %1783, %v1710
        %v1785 = vpop.permute.xlu0 %1784
        %1788 = vset.pattern.permute.xlu0 0
        %1789 = vperm.xlu0 %1788, %v1711
        %v1790 = vpop.permute.xlu0 %1789
        %1792 = vmatprep.subr.mxu0 0.0
        %1793 = vmatpush1.msra.mxu0 %v1568
        %1794 = vmatprep.subr.mxu0 0.0
        %1795 = vmatpush1.msra.mxu0 %v1569
        %1796 = vmatprep.subr.mxu0 0.0
        %1797 = vmatpush1.msra.mxu0 %v1570
        %1798 = vmatprep.subr.mxu0 0.0
        %1799 = vmatpush1.msra.mxu0 %v1571
        %1800 = vmatprep.subr.mxu0 0.0
        %1801 = vmatpush1.msra.mxu0 %v1572
        %1802 = vmatprep.subr.mxu0 0.0
        %1803 = vmatpush1.msra.mxu0 %v1573
        %1804 = vmatprep.subr.mxu0 0.0
        %1805 = vmatpush1.msra.mxu0 %v1574
        %1806 = vmatprep.subr.mxu0 0.0
        %1807 = vmatpush1.msra.mxu0 %v1575
        %1808 = vmatprep.subr.mxu0 0.0
        %1809 = vmatpush1.msra.mxu0 %v1576
        %1810 = vmatprep.subr.mxu0 0.0
        %1811 = vmatpush1.msra.mxu0 %v1577
        %1812 = vmatprep.subr.mxu0 0.0
        %1813 = vmatpush1.msra.mxu0 %v1578
        %1814 = vmatprep.subr.mxu0 0.0
        %1815 = vmatpush1.msra.mxu0 %v1579
        %1816 = vmatprep.subr.mxu0 0.0
        %1817 = vmatpush1.msra.mxu0 %v1580
        %1818 = vmatprep.subr.mxu0 0.0
        %1819 = vmatpush1.msra.mxu0 %v1581
        %1820 = vmatprep.subr.mxu0 0.0
        %1821 = vmatpush1.msra.mxu0 %v1582
        %1822 = vmatprep.subr.mxu0 0.0
        %1823 = vmatpush1.msra.mxu0 %v1583
        %1824 = vmatprep.subr.mxu0 0.0
        %1825 = vmatpush1.msra.mxu0 %v1488
        %1826 = vmatprep.subr.mxu0 0.0
        %1827 = vmatpush1.msra.mxu0 %v1489
        %1828 = vmatprep.subr.mxu0 0.0
        %1829 = vmatpush1.msra.mxu0 %v1490
        %1830 = vmatprep.subr.mxu0 0.0
        %1831 = vmatpush1.msra.mxu0 %v1491
        %1832 = vmatprep.subr.mxu0 0.0
        %1833 = vmatpush1.msra.mxu0 %v1492
        %1834 = vmatprep.subr.mxu0 0.0
        %1835 = vmatpush1.msra.mxu0 %v1493
        %1836 = vmatprep.subr.mxu0 0.0
        %1837 = vmatpush1.msra.mxu0 %v1494
        %1838 = vmatprep.subr.mxu0 0.0
        %1839 = vmatpush1.msra.mxu0 %v1495
        %1840 = vmatprep.subr.mxu0 0.0
        %1841 = vmatpush1.msra.mxu0 %v1496
        %1842 = vmatprep.subr.mxu0 0.0
        %1843 = vmatpush1.msra.mxu0 %v1497
        %1844 = vmatprep.subr.mxu0 0.0
        %1845 = vmatpush1.msra.mxu0 %v1498
        %1846 = vmatprep.subr.mxu0 0.0
        %1847 = vmatpush1.msra.mxu0 %v1499
        %1848 = vmatprep.subr.mxu0 0.0
        %1849 = vmatpush1.msra.mxu0 %v1500
        %1850 = vmatprep.subr.mxu0 0.0
        %1851 = vmatpush1.msra.mxu0 %v1501
        %1852 = vmatprep.subr.mxu0 0.0
        %1853 = vmatpush1.msra.mxu0 %v1502
        %1854 = vmatprep.subr.mxu0 0.0
        %1855 = vmatpush1.msra.mxu0 %v1503
        %1856 = vmatprep.mubr.f32.mxu0 %v1649
        %1857 = vmatmul.mubr.f32.gmra.mrb[0].mxu0 %v1648
        %v1858 = vpop.f32.mrb[0].mxu0
        %v1859 = vadd.f32 %v1715, %v1858
        %v1860 = vpop.f32.mrb[0].mxu0
        %1861 = vmatprep.mubr.f32.mxu0 %v1652
        %1862 = vmatmul.mubr.f32.gmra.mrb[0].mxu0 %v1651
        %v1863 = vpop.f32.mrb[0].mxu0
        %v1864 = vadd.f32 %v1720, %v1863
        %v1865 = vpop.f32.mrb[0].mxu0
        %1866 = vmatprep.mubr.f32.mxu0 %v1655
        %1867 = vmatmul.mubr.f32.gmra.mrb[0].mxu0 %v1654
        %v1868 = vpop.f32.mrb[0].mxu0
        %v1869 = vadd.f32 %v1725, %v1868
        %v1870 = vpop.f32.mrb[0].mxu0
        %1871 = vmatprep.mubr.f32.mxu0 %v1658
        %1872 = vmatmul.mubr.f32.gmra.mrb[0].mxu0 %v1657
        %v1873 = vpop.f32.mrb[0].mxu0
        %v1874 = vadd.f32 %v1730, %v1873
        %v1875 = vpop.f32.mrb[0].mxu0
        %1876 = vmatprep.mubr.f32.mxu0 %v1661
        %1877 = vmatmul.mubr.f32.gmra.mrb[0].mxu0 %v1660
        %v1878 = vpop.f32.mrb[0].mxu0
        %v1879 = vadd.f32 %v1735, %v1878
        %v1880 = vpop.f32.mrb[0].mxu0
        %1881 = vmatprep.mubr.f32.mxu0 %v1664
        %1882 = vmatmul.mubr.f32.gmra.mrb[0].mxu0 %v1663
        %v1883 = vpop.f32.mrb[0].mxu0
        %v1884 = vadd.f32 %v1740, %v1883
        %v1885 = vpop.f32.mrb[0].mxu0
        %1886 = vmatprep.mubr.f32.mxu0 %v1667
        %1887 = vmatmul.mubr.f32.gmra.mrb[0].mxu0 %v1666
        %v1888 = vpop.f32.mrb[0].mxu0
        %v1889 = vadd.f32 %v1745, %v1888
        %v1890 = vpop.f32.mrb[0].mxu0
        %1891 = vmatprep.mubr.f32.mxu0 %v1670
        %1892 = vmatmul.mubr.f32.gmra.mrb[0].mxu0 %v1669
        %v1893 = vpop.f32.mrb[0].mxu0
        %v1894 = vadd.f32 %v1750, %v1893
        %v1895 = vpop.f32.mrb[0].mxu0
        %1896 = vmatprep.mubr.f32.mxu0 %v1673
        %1897 = vmatmul.mubr.f32.gmra.mrb[0].mxu0 %v1672
        %v1898 = vpop.f32.mrb[0].mxu0
        %v1899 = vadd.f32 %v1755, %v1898
        %v1900 = vpop.f32.mrb[0].mxu0
        %1901 = vmatprep.mubr.f32.mxu0 %v1676
        %1902 = vmatmul.mubr.f32.gmra.mrb[0].mxu0 %v1675
        %v1903 = vpop.f32.mrb[0].mxu0
        %v1904 = vadd.f32 %v1760, %v1903
        %v1905 = vpop.f32.mrb[0].mxu0
        %1906 = vmatprep.mubr.f32.mxu0 %v1679
        %1907 = vmatmul.mubr.f32.gmra.mrb[0].mxu0 %v1678
        %v1908 = vpop.f32.mrb[0].mxu0
        %v1909 = vadd.f32 %v1765, %v1908
        %v1910 = vpop.f32.mrb[0].mxu0
        %1911 = vmatprep.mubr.f32.mxu0 %v1682
        %1912 = vmatmul.mubr.f32.gmra.mrb[0].mxu0 %v1681
        %v1913 = vpop.f32.mrb[0].mxu0
        %v1914 = vadd.f32 %v1770, %v1913
        %v1915 = vpop.f32.mrb[0].mxu0
        %1916 = vmatprep.mubr.f32.mxu0 %v1685
        %1917 = vmatmul.mubr.f32.gmra.mrb[0].mxu0 %v1684
        %v1918 = vpop.f32.mrb[0].mxu0
        %v1919 = vadd.f32 %v1775, %v1918
        %v1920 = vpop.f32.mrb[0].mxu0
        %1921 = vmatprep.mubr.f32.mxu0 %v1688
        %1922 = vmatmul.mubr.f32.gmra.mrb[0].mxu0 %v1687
        %v1923 = vpop.f32.mrb[0].mxu0
        %v1924 = vadd.f32 %v1780, %v1923
        %v1925 = vpop.f32.mrb[0].mxu0
        %1926 = vmatprep.mubr.f32.mxu0 %v1691
        %1927 = vmatmul.mubr.f32.gmra.mrb[0].mxu0 %v1690
        %v1928 = vpop.f32.mrb[0].mxu0
        %v1929 = vadd.f32 %v1785, %v1928
        %v1930 = vpop.f32.mrb[0].mxu0
        %1931 = vmatprep.mubr.f32.mxu0 %v1694
        %1932 = vmatmul.mubr.f32.gmra.mrb[0].mxu0 %v1693
        %v1933 = vpop.f32.mrb[0].mxu0
        %v1934 = vadd.f32 %v1790, %v1933
        %v1935 = vpop.f32.mrb[0].mxu0
        %1936 = vdwg.mxu0
        %1937 = vmatprep.subr.mxu0 0.0
        %1938 = vmatpush1.msra.mxu0 %v1632
        %1939 = vmatprep.subr.mxu0 0.0
        %1940 = vmatpush1.msra.mxu0 %v1633
        %1941 = vmatprep.subr.mxu0 0.0
        %1942 = vmatpush1.msra.mxu0 %v1634
        %1943 = vmatprep.subr.mxu0 0.0
        %1944 = vmatpush1.msra.mxu0 %v1635
        %1945 = vmatprep.subr.mxu0 0.0
        %1946 = vmatpush1.msra.mxu0 %v1636
        %1947 = vmatprep.subr.mxu0 0.0
        %1948 = vmatpush1.msra.mxu0 %v1637
        %1949 = vmatprep.subr.mxu0 0.0
        %1950 = vmatpush1.msra.mxu0 %v1638
        %1951 = vmatprep.subr.mxu0 0.0
        %1952 = vmatpush1.msra.mxu0 %v1639
        %1953 = vmatprep.subr.mxu0 0.0
        %1954 = vmatpush1.msra.mxu0 %v1640
        %1955 = vmatprep.subr.mxu0 0.0
        %1956 = vmatpush1.msra.mxu0 %v1641
        %1957 = vmatprep.subr.mxu0 0.0
        %1958 = vmatpush1.msra.mxu0 %v1642
        %1959 = vmatprep.subr.mxu0 0.0
        %1960 = vmatpush1.msra.mxu0 %v1643
        %1961 = vmatprep.subr.mxu0 0.0
        %1962 = vmatpush1.msra.mxu0 %v1644
        %1963 = vmatprep.subr.mxu0 0.0
        %1964 = vmatpush1.msra.mxu0 %v1645
        %1965 = vmatprep.subr.mxu0 0.0
        %1966 = vmatpush1.msra.mxu0 %v1646
        %1967 = vmatprep.subr.mxu0 0.0
        %1968 = vmatpush1.msra.mxu0 %v1647
        %1969 = vmatprep.subr.mxu0 0.0
        %1970 = vmatpush1.msra.mxu0 0.0
        %1971 = vmatprep.subr.mxu0 0.0
        %1972 = vmatpush1.msra.mxu0 0.0
        %1973 = vmatprep.subr.mxu0 0.0
        %1974 = vmatpush1.msra.mxu0 0.0
        %1975 = vmatprep.subr.mxu0 0.0
        %1976 = vmatpush1.msra.mxu0 0.0
        %1977 = vmatprep.subr.mxu0 0.0
        %1978 = vmatpush1.msra.mxu0 0.0
        %1979 = vmatprep.subr.mxu0 0.0
        %1980 = vmatpush1.msra.mxu0 0.0
        %1981 = vmatprep.subr.mxu0 0.0
        %1982 = vmatpush1.msra.mxu0 0.0
        %1983 = vmatprep.subr.mxu0 0.0
        %1984 = vmatpush1.msra.mxu0 0.0
        %1985 = vmatprep.subr.mxu0 0.0
        %1986 = vmatpush1.msra.mxu0 0.0
        %1987 = vmatprep.subr.mxu0 0.0
        %1988 = vmatpush1.msra.mxu0 0.0
        %1989 = vmatprep.subr.mxu0 0.0
        %1990 = vmatpush1.msra.mxu0 0.0
        %1991 = vmatprep.subr.mxu0 0.0
        %1992 = vmatpush1.msra.mxu0 0.0
        %1993 = vmatprep.subr.mxu0 0.0
        %1994 = vmatpush1.msra.mxu0 0.0
        %1995 = vmatprep.subr.mxu0 0.0
        %1996 = vmatpush1.msra.mxu0 0.0
        %1997 = vmatprep.subr.mxu0 0.0
        %1998 = vmatpush1.msra.mxu0 0.0
        %1999 = vmatprep.subr.mxu0 0.0
        %2000 = vmatpush1.msra.mxu0 0.0
        %2001 = vmatprep.mubr.f32.mxu0 0.0
        %2002 = vmatmul.mubr.f32.gmra.mrb[0].mxu0 %v1650
        %v2003 = vpop.f32.mrb[0].mxu0
        %v2004 = vadd.f32 %v1859, %v2003
        %v2005 = vpop.f32.mrb[0].mxu0
        %2006 = vmatprep.mubr.f32.mxu0 0.0
        %2007 = vmatmul.mubr.f32.gmra.mrb[0].mxu0 %v1653
        %v2008 = vpop.f32.mrb[0].mxu0
        %v2009 = vadd.f32 %v1864, %v2008
        %v2010 = vpop.f32.mrb[0].mxu0
        %2011 = vmatprep.mubr.f32.mxu0 0.0
        %2012 = vmatmul.mubr.f32.gmra.mrb[0].mxu0 %v1656
        %v2013 = vpop.f32.mrb[0].mxu0
        %v2014 = vadd.f32 %v1869, %v2013
        %v2015 = vpop.f32.mrb[0].mxu0
        %2016 = vmatprep.mubr.f32.mxu0 0.0
        %2017 = vmatmul.mubr.f32.gmra.mrb[0].mxu0 %v1659
        %v2018 = vpop.f32.mrb[0].mxu0
        %v2019 = vadd.f32 %v1874, %v2018
        %v2020 = vpop.f32.mrb[0].mxu0
        %2021 = vmatprep.mubr.f32.mxu0 0.0
        %2022 = vmatmul.mubr.f32.gmra.mrb[0].mxu0 %v1662
        %v2023 = vpop.f32.mrb[0].mxu0
        %v2024 = vadd.f32 %v1879, %v2023
        %v2025 = vpop.f32.mrb[0].mxu0
        %2026 = vmatprep.mubr.f32.mxu0 0.0
        %2027 = vmatmul.mubr.f32.gmra.mrb[0].mxu0 %v1665
        %v2028 = vpop.f32.mrb[0].mxu0
        %v2029 = vadd.f32 %v1884, %v2028
        %v2030 = vpop.f32.mrb[0].mxu0
        %2031 = vmatprep.mubr.f32.mxu0 0.0
        %2032 = vmatmul.mubr.f32.gmra.mrb[0].mxu0 %v1668
        %v2033 = vpop.f32.mrb[0].mxu0
        %v2034 = vadd.f32 %v1889, %v2033
        %v2035 = vpop.f32.mrb[0].mxu0
        %2036 = vmatprep.mubr.f32.mxu0 0.0
        %2037 = vmatmul.mubr.f32.gmra.mrb[0].mxu0 %v1671
        %v2038 = vpop.f32.mrb[0].mxu0
        %v2039 = vadd.f32 %v1894, %v2038
        %v2040 = vpop.f32.mrb[0].mxu0
        %2041 = vmatprep.mubr.f32.mxu0 0.0
        %2042 = vmatmul.mubr.f32.gmra.mrb[0].mxu0 %v1674
        %v2043 = vpop.f32.mrb[0].mxu0
        %v2044 = vadd.f32 %v1899, %v2043
        %v2045 = vpop.f32.mrb[0].mxu0
        %2046 = vmatprep.mubr.f32.mxu0 0.0
        %2047 = vmatmul.mubr.f32.gmra.mrb[0].mxu0 %v1677
        %v2048 = vpop.f32.mrb[0].mxu0
        %v2049 = vadd.f32 %v1904, %v2048
        %v2050 = vpop.f32.mrb[0].mxu0
        %2051 = vmatprep.mubr.f32.mxu0 0.0
        %2052 = vmatmul.mubr.f32.gmra.mrb[0].mxu0 %v1680
        %v2053 = vpop.f32.mrb[0].mxu0
        %v2054 = vadd.f32 %v1909, %v2053
        %v2055 = vpop.f32.mrb[0].mxu0
        %2056 = vmatprep.mubr.f32.mxu0 0.0
        %2057 = vmatmul.mubr.f32.gmra.mrb[0].mxu0 %v1683
        %v2058 = vpop.f32.mrb[0].mxu0
        %v2059 = vadd.f32 %v1914, %v2058
        %v2060 = vpop.f32.mrb[0].mxu0
        %2061 = vmatprep.mubr.f32.mxu0 0.0
        %2062 = vmatmul.mubr.f32.gmra.mrb[0].mxu0 %v1686
        %v2063 = vpop.f32.mrb[0].mxu0
        %v2064 = vadd.f32 %v1919, %v2063
        %v2065 = vpop.f32.mrb[0].mxu0
        %2066 = vmatprep.mubr.f32.mxu0 0.0
        %2067 = vmatmul.mubr.f32.gmra.mrb[0].mxu0 %v1689
        %v2068 = vpop.f32.mrb[0].mxu0
        %v2069 = vadd.f32 %v1924, %v2068
        %v2070 = vpop.f32.mrb[0].mxu0
        %2071 = vmatprep.mubr.f32.mxu0 0.0
        %2072 = vmatmul.mubr.f32.gmra.mrb[0].mxu0 %v1692
        %v2073 = vpop.f32.mrb[0].mxu0
        %v2074 = vadd.f32 %v1929, %v2073
        %v2075 = vpop.f32.mrb[0].mxu0
        %2076 = vmatprep.mubr.f32.mxu0 0.0
        %2077 = vmatmul.mubr.f32.gmra.mrb[0].mxu0 %v1695
        %v2078 = vpop.f32.mrb[0].mxu0
        %v2079 = vadd.f32 %v1934, %v2078
        %v2080 = vpop.f32.mrb[0].mxu0
        %2081 = vdwg.mxu0
        %v2082 = vadd.f32 %v2004, %v1488
        %v2083 = vadd.f32 %v2009, %v1489
        %v2084 = vadd.f32 %v2014, %v1490
        %v2085 = vadd.f32 %v2019, %v1491
        %v2086 = vadd.f32 %v2024, %v1492
        %v2087 = vadd.f32 %v2029, %v1493
        %v2088 = vadd.f32 %v2034, %v1494
        %v2089 = vadd.f32 %v2039, %v1495
        %v2090 = vadd.f32 %v2044, %v1496
        %v2091 = vadd.f32 %v2049, %v1497
        %v2092 = vadd.f32 %v2054, %v1498
        %v2093 = vadd.f32 %v2059, %v1499
        %v2094 = vadd.f32 %v2064, %v1500
        %v2095 = vadd.f32 %v2069, %v1501
        %v2096 = vadd.f32 %v2074, %v1502
        %v2097 = vadd.f32 %v2079, %v1503
        %v2098 = vmax.f32 %v2082, 0.0
        %v2099 = vmax.f32 %v2083, 0.0
        %v2100 = vmax.f32 %v2084, 0.0
        %v2101 = vmax.f32 %v2085, 0.0
        %v2102 = vmax.f32 %v2086, 0.0
        %v2103 = vmax.f32 %v2087, 0.0
        %v2104 = vmax.f32 %v2088, 0.0
        %v2105 = vmax.f32 %v2089, 0.0
        %v2106 = vmax.f32 %v2090, 0.0
        %v2107 = vmax.f32 %v2091, 0.0
        %v2108 = vmax.f32 %v2092, 0.0
        %v2109 = vmax.f32 %v2093, 0.0
        %v2110 = vmax.f32 %v2094, 0.0
        %v2111 = vmax.f32 %v2095, 0.0
        %v2112 = vmax.f32 %v2096, 0.0
        %v2113 = vmax.f32 %v2097, 0.0
        %v2114 = vld [vmem:[%s8] sm:$0xff]
        %2115 = vmatprep.subr.mxu0 0.0
        %2116 = vmatpush1.msra.mxu0 %v2098
        %2117 = vmatprep.subr.mxu0 0.0
        %2118 = vmatpush1.msra.mxu0 %v2099
        %2119 = vmatprep.subr.mxu0 0.0
        %2120 = vmatpush1.msra.mxu0 %v2100
        %2121 = vmatprep.subr.mxu0 0.0
        %2122 = vmatpush1.msra.mxu0 %v2101
        %2123 = vmatprep.subr.mxu0 0.0
        %2124 = vmatpush1.msra.mxu0 %v2102
        %2125 = vmatprep.subr.mxu0 0.0
        %2126 = vmatpush1.msra.mxu0 %v2103
        %2127 = vmatprep.subr.mxu0 0.0
        %2128 = vmatpush1.msra.mxu0 %v2104
        %2129 = vmatprep.subr.mxu0 0.0
        %2130 = vmatpush1.msra.mxu0 %v2105
        %2131 = vmatprep.subr.mxu0 0.0
        %2132 = vmatpush1.msra.mxu0 %v2106
        %2133 = vmatprep.subr.mxu0 0.0
        %2134 = vmatpush1.msra.mxu0 %v2107
        %2135 = vmatprep.subr.mxu0 0.0
        %2136 = vmatpush1.msra.mxu0 %v2108
        %2137 = vmatprep.subr.mxu0 0.0
        %2138 = vmatpush1.msra.mxu0 %v2109
        %2139 = vmatprep.subr.mxu0 0.0
        %2140 = vmatpush1.msra.mxu0 %v2110
        %2141 = vmatprep.subr.mxu0 0.0
        %2142 = vmatpush1.msra.mxu0 %v2111
        %2143 = vmatprep.subr.mxu0 0.0
        %2144 = vmatpush1.msra.mxu0 %v2112
        %2145 = vmatprep.subr.mxu0 0.0
        %2146 = vmatpush1.msra.mxu0 %v2113
        %2147 = vmatprep.subr.mxu0 0.0
        %2148 = vmatpush1.msra.mxu0 0.0
        %2149 = vmatprep.subr.mxu0 0.0
        %2150 = vmatpush1.msra.mxu0 0.0
        %2151 = vmatprep.subr.mxu0 0.0
        %2152 = vmatpush1.msra.mxu0 0.0
        %2153 = vmatprep.subr.mxu0 0.0
        %2154 = vmatpush1.msra.mxu0 0.0
        %2155 = vmatprep.subr.mxu0 0.0
        %2156 = vmatpush1.msra.mxu0 0.0
        %2157 = vmatprep.subr.mxu0 0.0
        %2158 = vmatpush1.msra.mxu0 0.0
        %2159 = vmatprep.subr.mxu0 0.0
        %2160 = vmatpush1.msra.mxu0 0.0
        %2161 = vmatprep.subr.mxu0 0.0
        %2162 = vmatpush1.msra.mxu0 0.0
        %2163 = vmatprep.subr.mxu0 0.0
        %2164 = vmatpush1.msra.mxu0 0.0
        %2165 = vmatprep.subr.mxu0 0.0
        %2166 = vmatpush1.msra.mxu0 0.0
        %2167 = vmatprep.subr.mxu0 0.0
        %2168 = vmatpush1.msra.mxu0 0.0
        %2169 = vmatprep.subr.mxu0 0.0
        %2170 = vmatpush1.msra.mxu0 0.0
        %2171 = vmatprep.subr.mxu0 0.0
        %2172 = vmatpush1.msra.mxu0 0.0
        %2173 = vmatprep.subr.mxu0 0.0
        %2174 = vmatpush1.msra.mxu0 0.0
        %2175 = vmatprep.subr.mxu0 0.0
        %2176 = vmatpush1.msra.mxu0 0.0
        %2177 = vmatprep.subr.mxu0 0.0
        %2178 = vmatpush1.msra.mxu0 0.0
        %2179 = vmatprep.mubr.f32.mxu0 0.0
        %2180 = vmatmul.mubr.f32.gmra.mrb[0].mxu0 %v2114
        %v2181 = vpop.f32.mrb[0].mxu0
        %v2182 = vadd.f32 0.0, %v2181
        %v2183 = vpop.f32.mrb[0].mxu0
        %2184 = vdwg.mxu0
        %vm2185 = vcmask 261120
        %2186 = vst.msk [vmem:[%s534] sm:$0xff] %vm2185, %v2182
        %v2187 = vld [vmem:[%s9] sm:$0xff]
        %v2188 = vld [vmem:[%s9 + $0x8] sm:$0xff]
        %v2189 = vld [vmem:[%s9 + $0x10] sm:$0xff]
        %v2190 = vld [vmem:[%s9 + $0x18] sm:$0xff]
        %v2191 = vld [vmem:[%s10] sm:$0x1]
        %v2193 = vlaneseq
        %v2194 = vshrl.u32 %v2193, 7
        %v2195 = vsub.s32 0, %v2194
        %v2196 = vrot.slane %v2191, %v2195
        %v2199 = vsel %vm2185, %v2182, 0
        %2201 = vmatprep.subr.mxu0 0.0
        %2202 = vmatpush1.msra.mxu0 %v2187
        %2203 = vmatprep.subr.mxu0 0.0
        %2204 = vmatpush1.msra.mxu0 %v2188
        %2205 = vmatprep.subr.mxu0 0.0
        %2206 = vmatpush1.msra.mxu0 %v2189
        %2207 = vmatprep.subr.mxu0 0.0
        %2208 = vmatpush1.msra.mxu0 %v2190
        %2209 = vmatprep.subr.mxu0 0.0
        %2210 = vmatpush1.msra.mxu0 0.0
        %2211 = vmatprep.subr.mxu0 0.0
        %2212 = vmatpush1.msra.mxu0 0.0
        %2213 = vmatprep.subr.mxu0 0.0
        %2214 = vmatpush1.msra.mxu0 0.0
        %2215 = vmatprep.subr.mxu0 0.0
        %2216 = vmatpush1.msra.mxu0 0.0
        %2217 = vmatprep.subr.mxu0 0.0
        %2218 = vmatpush1.msra.mxu0 0.0
        %2219 = vmatprep.subr.mxu0 0.0
        %2220 = vmatpush1.msra.mxu0 0.0
        %2221 = vmatprep.subr.mxu0 0.0
        %2222 = vmatpush1.msra.mxu0 0.0
        %2223 = vmatprep.subr.mxu0 0.0
        %2224 = vmatpush1.msra.mxu0 0.0
        %2225 = vmatprep.subr.mxu0 0.0
        %2226 = vmatpush1.msra.mxu0 0.0
        %2227 = vmatprep.subr.mxu0 0.0
        %2228 = vmatpush1.msra.mxu0 0.0
        %2229 = vmatprep.subr.mxu0 0.0
        %2230 = vmatpush1.msra.mxu0 0.0
        %2231 = vmatprep.subr.mxu0 0.0
        %2232 = vmatpush1.msra.mxu0 0.0
        %2233 = vmatprep.subr.mxu0 0.0
        %2234 = vmatpush1.msra.mxu0 0.0
        %2235 = vmatprep.subr.mxu0 0.0
        %2236 = vmatpush1.msra.mxu0 0.0
        %2237 = vmatprep.subr.mxu0 0.0
        %2238 = vmatpush1.msra.mxu0 0.0
        %2239 = vmatprep.subr.mxu0 0.0
        %2240 = vmatpush1.msra.mxu0 0.0
        %2241 = vmatprep.subr.mxu0 0.0
        %2242 = vmatpush1.msra.mxu0 0.0
        %2243 = vmatprep.subr.mxu0 0.0
        %2244 = vmatpush1.msra.mxu0 0.0
        %2245 = vmatprep.subr.mxu0 0.0
        %2246 = vmatpush1.msra.mxu0 0.0
        %2247 = vmatprep.subr.mxu0 0.0
        %2248 = vmatpush1.msra.mxu0 0.0
        %2249 = vmatprep.subr.mxu0 0.0
        %2250 = vmatpush1.msra.mxu0 0.0
        %2251 = vmatprep.subr.mxu0 0.0
        %2252 = vmatpush1.msra.mxu0 0.0
        %2253 = vmatprep.subr.mxu0 0.0
        %2254 = vmatpush1.msra.mxu0 0.0
        %2255 = vmatprep.subr.mxu0 0.0
        %2256 = vmatpush1.msra.mxu0 0.0
        %2257 = vmatprep.subr.mxu0 0.0
        %2258 = vmatpush1.msra.mxu0 0.0
        %2259 = vmatprep.subr.mxu0 0.0
        %2260 = vmatpush1.msra.mxu0 0.0
        %2261 = vmatprep.subr.mxu0 0.0
        %2262 = vmatpush1.msra.mxu0 0.0
        %2263 = vmatprep.subr.mxu0 0.0
        %2264 = vmatpush1.msra.mxu0 0.0
        %2265 = vmatprep.mubr.f32.mxu0 0.0
        %2266 = vmatmul.mubr.f32.gmra.mrb[0].mxu0 %v2199
        %v2267 = vpop.f32.mrb[0].mxu0
        %v2268 = vadd.f32 %v2196, %v2267
        %v2269 = vpop.f32.mrb[0].mxu0
        %2270 = vdwg.mxu0
        %v2271 = vld [vmem:[%s1] sm:$0xff]
        %v2272 = vadd.f32 %v2268, %v2271
        %2273 = vst.msk [vmem:[%s541] sm:$0xff] %vm2185, %v2272
        %v2274 = vld [vmem:[%s11] sm:$0xff]
        %v2275 = vld [vmem:[%s11 + $0x8] sm:$0xff]
        %v2276 = vld [vmem:[%s11 + $0x10] sm:$0xff]
        %v2277 = vld [vmem:[%s11 + $0x18] sm:$0xff]
        %v2278 = vld [vmem:[%s12] sm:$0x1]
        %v2280 = vlaneseq
        %v2281 = vshrl.u32 %v2280, 7
        %v2282 = vsub.s32 0, %v2281
        %v2283 = vrot.slane %v2278, %v2282
        %v2286 = vsel %vm2185, %v2272, 0
        %2288 = vmatprep.subr.mxu0 0.0
        %2289 = vmatpush1.msra.mxu0 %v2274
        %2290 = vmatprep.subr.mxu0 0.0
        %2291 = vmatpush1.msra.mxu0 %v2275
        %2292 = vmatprep.subr.mxu0 0.0
        %2293 = vmatpush1.msra.mxu0 %v2276
        %2294 = vmatprep.subr.mxu0 0.0
        %2295 = vmatpush1.msra.mxu0 %v2277
        %2296 = vmatprep.subr.mxu0 0.0
        %2297 = vmatpush1.msra.mxu0 0.0
        %2298 = vmatprep.subr.mxu0 0.0
        %2299 = vmatpush1.msra.mxu0 0.0
        %2300 = vmatprep.subr.mxu0 0.0
        %2301 = vmatpush1.msra.mxu0 0.0
        %2302 = vmatprep.subr.mxu0 0.0
        %2303 = vmatpush1.msra.mxu0 0.0
        %2304 = vmatprep.subr.mxu0 0.0
        %2305 = vmatpush1.msra.mxu0 0.0
        %2306 = vmatprep.subr.mxu0 0.0
        %2307 = vmatpush1.msra.mxu0 0.0
        %2308 = vmatprep.subr.mxu0 0.0
        %2309 = vmatpush1.msra.mxu0 0.0
        %2310 = vmatprep.subr.mxu0 0.0
        %2311 = vmatpush1.msra.mxu0 0.0
        %2312 = vmatprep.subr.mxu0 0.0
        %2313 = vmatpush1.msra.mxu0 0.0
        %2314 = vmatprep.subr.mxu0 0.0
        %2315 = vmatpush1.msra.mxu0 0.0
        %2316 = vmatprep.subr.mxu0 0.0
        %2317 = vmatpush1.msra.mxu0 0.0
        %2318 = vmatprep.subr.mxu0 0.0
        %2319 = vmatpush1.msra.mxu0 0.0
        %2320 = vmatprep.subr.mxu0 0.0
        %2321 = vmatpush1.msra.mxu0 0.0
        %2322 = vmatprep.subr.mxu0 0.0
        %2323 = vmatpush1.msra.mxu0 0.0
        %2324 = vmatprep.subr.mxu0 0.0
        %2325 = vmatpush1.msra.mxu0 0.0
        %2326 = vmatprep.subr.mxu0 0.0
        %2327 = vmatpush1.msra.mxu0 0.0
        %2328 = vmatprep.subr.mxu0 0.0
        %2329 = vmatpush1.msra.mxu0 0.0
        %2330 = vmatprep.subr.mxu0 0.0
        %2331 = vmatpush1.msra.mxu0 0.0
        %2332 = vmatprep.subr.mxu0 0.0
        %2333 = vmatpush1.msra.mxu0 0.0
        %2334 = vmatprep.subr.mxu0 0.0
        %2335 = vmatpush1.msra.mxu0 0.0
        %2336 = vmatprep.subr.mxu0 0.0
        %2337 = vmatpush1.msra.mxu0 0.0
        %2338 = vmatprep.subr.mxu0 0.0
        %2339 = vmatpush1.msra.mxu0 0.0
        %2340 = vmatprep.subr.mxu0 0.0
        %2341 = vmatpush1.msra.mxu0 0.0
        %2342 = vmatprep.subr.mxu0 0.0
        %2343 = vmatpush1.msra.mxu0 0.0
        %2344 = vmatprep.subr.mxu0 0.0
        %2345 = vmatpush1.msra.mxu0 0.0
        %2346 = vmatprep.subr.mxu0 0.0
        %2347 = vmatpush1.msra.mxu0 0.0
        %2348 = vmatprep.subr.mxu0 0.0
        %2349 = vmatpush1.msra.mxu0 0.0
        %2350 = vmatprep.subr.mxu0 0.0
        %2351 = vmatpush1.msra.mxu0 0.0
        %2352 = vmatprep.mubr.f32.mxu0 0.0
        %2353 = vmatmul.mubr.f32.gmra.mrb[0].mxu0 %v2286
        %v2354 = vpop.f32.mrb[0].mxu0
        %v2355 = vadd.f32 %v2283, %v2354
        %v2356 = vpop.f32.mrb[0].mxu0
        %2357 = vdwg.mxu0
        %2359 = vrot.lane.b32.xlu0 %v2355, 64
        %v2360 = vpop.permute.xlu0 %2359
        %2362 = vst.msk [vmem:[%s548] sm:$0xff] %vm2185, %v2360
        %2363 = vrot.lane.b32.xlu0 %v2355, 96
        %v2364 = vpop.permute.xlu0 %2363
        %vm2365 = vcmask 64512
        %v2366 = vsel %vm2365, %v2355, 0
        %v2368 = vsel %vm2365, %v2364, 0
        %2370 = vmatprep.subr.mxu0 0.0
        %2371 = vmatpush1.xpose.msra.mxu0 %v2368
        %2372 = vmatprep.subr.mxu0 0.0
        %2373 = vmatpush1.xpose.msra.mxu0 0.0
        %2374 = vmatprep.subr.mxu0 0.0
        %2375 = vmatpush1.xpose.msra.mxu0 0.0
        %2376 = vmatprep.subr.mxu0 0.0
        %2377 = vmatpush1.xpose.msra.mxu0 0.0
        %2378 = vmatprep.subr.mxu0 0.0
        %2379 = vmatpush1.xpose.msra.mxu0 0.0
        %2380 = vmatprep.subr.mxu0 0.0
        %2381 = vmatpush1.xpose.msra.mxu0 0.0
        %2382 = vmatprep.subr.mxu0 0.0
        %2383 = vmatpush1.xpose.msra.mxu0 0.0
        %2384 = vmatprep.subr.mxu0 0.0
        %2385 = vmatpush1.xpose.msra.mxu0 0.0
        %2386 = vmatprep.subr.mxu0 0.0
        %2387 = vmatpush1.xpose.msra.mxu0 0.0
        %2388 = vmatprep.subr.mxu0 0.0
        %2389 = vmatpush1.xpose.msra.mxu0 0.0
        %2390 = vmatprep.subr.mxu0 0.0
        %2391 = vmatpush1.xpose.msra.mxu0 0.0
        %2392 = vmatprep.subr.mxu0 0.0
        %2393 = vmatpush1.xpose.msra.mxu0 0.0
        %2394 = vmatprep.subr.mxu0 0.0
        %2395 = vmatpush1.xpose.msra.mxu0 0.0
        %2396 = vmatprep.subr.mxu0 0.0
        %2397 = vmatpush1.xpose.msra.mxu0 0.0
        %2398 = vmatprep.subr.mxu0 0.0
        %2399 = vmatpush1.xpose.msra.mxu0 0.0
        %2400 = vmatprep.subr.mxu0 0.0
        %2401 = vmatpush1.xpose.msra.mxu0 0.0
        %2402 = vmatprep.subr.mxu0 0.0
        %2403 = vmatpush1.xpose.msra.mxu0 0.0
        %2404 = vmatprep.subr.mxu0 0.0
        %2405 = vmatpush1.xpose.msra.mxu0 0.0
        %2406 = vmatprep.subr.mxu0 0.0
        %2407 = vmatpush1.xpose.msra.mxu0 0.0
        %2408 = vmatprep.subr.mxu0 0.0
        %2409 = vmatpush1.xpose.msra.mxu0 0.0
        %2410 = vmatprep.subr.mxu0 0.0
        %2411 = vmatpush1.xpose.msra.mxu0 0.0
        %2412 = vmatprep.subr.mxu0 0.0
        %2413 = vmatpush1.xpose.msra.mxu0 0.0
        %2414 = vmatprep.subr.mxu0 0.0
        %2415 = vmatpush1.xpose.msra.mxu0 0.0
        %2416 = vmatprep.subr.mxu0 0.0
        %2417 = vmatpush1.xpose.msra.mxu0 0.0
        %2418 = vmatprep.subr.mxu0 0.0
        %2419 = vmatpush1.xpose.msra.mxu0 0.0
        %2420 = vmatprep.subr.mxu0 0.0
        %2421 = vmatpush1.xpose.msra.mxu0 0.0
        %2422 = vmatprep.subr.mxu0 0.0
        %2423 = vmatpush1.xpose.msra.mxu0 0.0
        %2424 = vmatprep.subr.mxu0 0.0
        %2425 = vmatpush1.xpose.msra.mxu0 0.0
        %2426 = vmatprep.subr.mxu0 0.0
        %2427 = vmatpush1.xpose.msra.mxu0 0.0
        %2428 = vmatprep.subr.mxu0 0.0
        %2429 = vmatpush1.xpose.msra.mxu0 0.0
        %2430 = vmatprep.subr.mxu0 0.0
        %2431 = vmatpush1.xpose.msra.mxu0 0.0
        %2432 = vmatprep.subr.mxu0 0.0
        %2433 = vmatpush1.xpose.msra.mxu0 0.0
        %2434 = vmatprep.mubr.f32.mxu0 0.0
        %2435 = vmatmul.mubr.f32.gmra.mrb[0].mxu0 %v2366
        %v2436 = vpop.f32.mrb[0].mxu0
        %v2437 = vadd.f32 0.0, %v2436
        %v2438 = vpop.f32.mrb[0].mxu0
        %2439 = vdwg.mxu0
        %v2440 = vmul.f32 %v2437, 0.35355338
        %v2441 = vsel %vm2365, %v2440, -inf
        %2442 = vmax.xlane.f32.xlu0 %v2441
        %v2443 = vpop.xlane.xlu0 %2442
        %v2444 = vsub.f32 %v2440, %v2443
        %v2445 = vmul.f32 %v2444, 1.442695
        %v2446 = vpow.pop %v2445
        %v2447 = vsel %vm2365, %v2446, 0.0
        %2448 = vadd.xlane.f32.xlu0 %v2447
        %v2449 = vpop.xlane.xlu0 %2448
        %v2450 = vrcp.pop %v2449
        %v2451 = vmul.f32 %v2446, %v2450
        %2452 = vrot.lane.b32.xlu0 %v2355, 120
        %v2453 = vpop.permute.xlu0 %2452
        %2454 = vrot.lane.b32.xlu0 %v2355, 88
        %v2455 = vpop.permute.xlu0 %2454
        %v2456 = vsel %vm2365, %v2453, 0
        %v2458 = vsel %vm2365, %v2455, 0
        %2460 = vmatprep.subr.mxu0 0.0
        %2461 = vmatpush1.xpose.msra.mxu0 %v2458
        %2462 = vmatprep.subr.mxu0 0.0
        %2463 = vmatpush1.xpose.msra.mxu0 0.0
        %2464 = vmatprep.subr.mxu0 0.0
        %2465 = vmatpush1.xpose.msra.mxu0 0.0
        %2466 = vmatprep.subr.mxu0 0.0
        %2467 = vmatpush1.xpose.msra.mxu0 0.0
        %2468 = vmatprep.subr.mxu0 0.0
        %2469 = vmatpush1.xpose.msra.mxu0 0.0
        %2470 = vmatprep.subr.mxu0 0.0
        %2471 = vmatpush1.xpose.msra.mxu0 0.0
        %2472 = vmatprep.subr.mxu0 0.0
        %2473 = vmatpush1.xpose.msra.mxu0 0.0
        %2474 = vmatprep.subr.mxu0 0.0
        %2475 = vmatpush1.xpose.msra.mxu0 0.0
        %2476 = vmatprep.subr.mxu0 0.0
        %2477 = vmatpush1.xpose.msra.mxu0 0.0
        %2478 = vmatprep.subr.mxu0 0.0
        %2479 = vmatpush1.xpose.msra.mxu0 0.0
        %2480 = vmatprep.subr.mxu0 0.0
        %2481 = vmatpush1.xpose.msra.mxu0 0.0
        %2482 = vmatprep.subr.mxu0 0.0
        %2483 = vmatpush1.xpose.msra.mxu0 0.0
        %2484 = vmatprep.subr.mxu0 0.0
        %2485 = vmatpush1.xpose.msra.mxu0 0.0
        %2486 = vmatprep.subr.mxu0 0.0
        %2487 = vmatpush1.xpose.msra.mxu0 0.0
        %2488 = vmatprep.subr.mxu0 0.0
        %2489 = vmatpush1.xpose.msra.mxu0 0.0
        %2490 = vmatprep.subr.mxu0 0.0
        %2491 = vmatpush1.xpose.msra.mxu0 0.0
        %2492 = vmatprep.subr.mxu0 0.0
        %2493 = vmatpush1.xpose.msra.mxu0 0.0
        %2494 = vmatprep.subr.mxu0 0.0
        %2495 = vmatpush1.xpose.msra.mxu0 0.0
        %2496 = vmatprep.subr.mxu0 0.0
        %2497 = vmatpush1.xpose.msra.mxu0 0.0
        %2498 = vmatprep.subr.mxu0 0.0
        %2499 = vmatpush1.xpose.msra.mxu0 0.0
        %2500 = vmatprep.subr.mxu0 0.0
        %2501 = vmatpush1.xpose.msra.mxu0 0.0
        %2502 = vmatprep.subr.mxu0 0.0
        %2503 = vmatpush1.xpose.msra.mxu0 0.0
        %2504 = vmatprep.subr.mxu0 0.0
        %2505 = vmatpush1.xpose.msra.mxu0 0.0
        %2506 = vmatprep.subr.mxu0 0.0
        %2507 = vmatpush1.xpose.msra.mxu0 0.0
        %2508 = vmatprep.subr.mxu0 0.0
        %2509 = vmatpush1.xpose.msra.mxu0 0.0
        %2510 = vmatprep.subr.mxu0 0.0
        %2511 = vmatpush1.xpose.msra.mxu0 0.0
        %2512 = vmatprep.subr.mxu0 0.0
        %2513 = vmatpush1.xpose.msra.mxu0 0.0
        %2514 = vmatprep.subr.mxu0 0.0
        %2515 = vmatpush1.xpose.msra.mxu0 0.0
        %2516 = vmatprep.subr.mxu0 0.0
        %2517 = vmatpush1.xpose.msra.mxu0 0.0
        %2518 = vmatprep.subr.mxu0 0.0
        %2519 = vmatpush1.xpose.msra.mxu0 0.0
        %2520 = vmatprep.subr.mxu0 0.0
        %2521 = vmatpush1.xpose.msra.mxu0 0.0
        %2522 = vmatprep.subr.mxu0 0.0
        %2523 = vmatpush1.xpose.msra.mxu0 0.0
        %2524 = vmatprep.mubr.f32.mxu0 0.0
        %2525 = vmatmul.mubr.f32.gmra.mrb[0].mxu0 %v2456
        %v2526 = vpop.f32.mrb[0].mxu0
        %v2527 = vadd.f32 0.0, %v2526
        %v2528 = vpop.f32.mrb[0].mxu0
        %2529 = vdwg.mxu0
        %v2530 = vmul.f32 %v2527, 0.35355338
        %v2531 = vsel %vm2365, %v2530, -inf
        %2532 = vmax.xlane.f32.xlu0 %v2531
        %v2533 = vpop.xlane.xlu0 %2532
        %v2534 = vsub.f32 %v2530, %v2533
        %v2535 = vmul.f32 %v2534, 1.442695
        %v2536 = vpow.pop %v2535
        %v2537 = vsel %vm2365, %v2536, 0.0
        %2538 = vadd.xlane.f32.xlu0 %v2537
        %v2539 = vpop.xlane.xlu0 %2538
        %v2540 = vrcp.pop %v2539
        %v2541 = vmul.f32 %v2536, %v2540
        %2542 = vrot.lane.b32.xlu0 %v2355, 112
        %v2543 = vpop.permute.xlu0 %2542
        %2544 = vrot.lane.b32.xlu0 %v2355, 80
        %v2545 = vpop.permute.xlu0 %2544
        %v2546 = vsel %vm2365, %v2543, 0
        %v2548 = vsel %vm2365, %v2545, 0
        %2550 = vmatprep.subr.mxu0 0.0
        %2551 = vmatpush1.xpose.msra.mxu0 %v2548
        %2552 = vmatprep.subr.mxu0 0.0
        %2553 = vmatpush1.xpose.msra.mxu0 0.0
        %2554 = vmatprep.subr.mxu0 0.0
        %2555 = vmatpush1.xpose.msra.mxu0 0.0
        %2556 = vmatprep.subr.mxu0 0.0
        %2557 = vmatpush1.xpose.msra.mxu0 0.0
        %2558 = vmatprep.subr.mxu0 0.0
        %2559 = vmatpush1.xpose.msra.mxu0 0.0
        %2560 = vmatprep.subr.mxu0 0.0
        %2561 = vmatpush1.xpose.msra.mxu0 0.0
        %2562 = vmatprep.subr.mxu0 0.0
        %2563 = vmatpush1.xpose.msra.mxu0 0.0
        %2564 = vmatprep.subr.mxu0 0.0
        %2565 = vmatpush1.xpose.msra.mxu0 0.0
        %2566 = vmatprep.subr.mxu0 0.0
        %2567 = vmatpush1.xpose.msra.mxu0 0.0
        %2568 = vmatprep.subr.mxu0 0.0
        %2569 = vmatpush1.xpose.msra.mxu0 0.0
        %2570 = vmatprep.subr.mxu0 0.0
        %2571 = vmatpush1.xpose.msra.mxu0 0.0
        %2572 = vmatprep.subr.mxu0 0.0
        %2573 = vmatpush1.xpose.msra.mxu0 0.0
        %2574 = vmatprep.subr.mxu0 0.0
        %2575 = vmatpush1.xpose.msra.mxu0 0.0
        %2576 = vmatprep.subr.mxu0 0.0
        %2577 = vmatpush1.xpose.msra.mxu0 0.0
        %2578 = vmatprep.subr.mxu0 0.0
        %2579 = vmatpush1.xpose.msra.mxu0 0.0
        %2580 = vmatprep.subr.mxu0 0.0
        %2581 = vmatpush1.xpose.msra.mxu0 0.0
        %2582 = vmatprep.subr.mxu0 0.0
        %2583 = vmatpush1.xpose.msra.mxu0 0.0
        %2584 = vmatprep.subr.mxu0 0.0
        %2585 = vmatpush1.xpose.msra.mxu0 0.0
        %2586 = vmatprep.subr.mxu0 0.0
        %2587 = vmatpush1.xpose.msra.mxu0 0.0
        %2588 = vmatprep.subr.mxu0 0.0
        %2589 = vmatpush1.xpose.msra.mxu0 0.0
        %2590 = vmatprep.subr.mxu0 0.0
        %2591 = vmatpush1.xpose.msra.mxu0 0.0
        %2592 = vmatprep.subr.mxu0 0.0
        %2593 = vmatpush1.xpose.msra.mxu0 0.0
        %2594 = vmatprep.subr.mxu0 0.0
        %2595 = vmatpush1.xpose.msra.mxu0 0.0
        %2596 = vmatprep.subr.mxu0 0.0
        %2597 = vmatpush1.xpose.msra.mxu0 0.0
        %2598 = vmatprep.subr.mxu0 0.0
        %2599 = vmatpush1.xpose.msra.mxu0 0.0
        %2600 = vmatprep.subr.mxu0 0.0
        %2601 = vmatpush1.xpose.msra.mxu0 0.0
        %2602 = vmatprep.subr.mxu0 0.0
        %2603 = vmatpush1.xpose.msra.mxu0 0.0
        %2604 = vmatprep.subr.mxu0 0.0
        %2605 = vmatpush1.xpose.msra.mxu0 0.0
        %2606 = vmatprep.subr.mxu0 0.0
        %2607 = vmatpush1.xpose.msra.mxu0 0.0
        %2608 = vmatprep.subr.mxu0 0.0
        %2609 = vmatpush1.xpose.msra.mxu0 0.0
        %2610 = vmatprep.subr.mxu0 0.0
        %2611 = vmatpush1.xpose.msra.mxu0 0.0
        %2612 = vmatprep.subr.mxu0 0.0
        %2613 = vmatpush1.xpose.msra.mxu0 0.0
        %2614 = vmatprep.mubr.f32.mxu0 0.0
        %2615 = vmatmul.mubr.f32.gmra.mrb[0].mxu0 %v2546
        %v2616 = vpop.f32.mrb[0].mxu0
        %v2617 = vadd.f32 0.0, %v2616
        %v2618 = vpop.f32.mrb[0].mxu0
        %2619 = vdwg.mxu0
        %v2620 = vmul.f32 %v2617, 0.35355338
        %v2621 = vsel %vm2365, %v2620, -inf
        %2622 = vmax.xlane.f32.xlu0 %v2621
        %v2623 = vpop.xlane.xlu0 %2622
        %v2624 = vsub.f32 %v2620, %v2623
        %v2625 = vmul.f32 %v2624, 1.442695
        %v2626 = vpow.pop %v2625
        %v2627 = vsel %vm2365, %v2626, 0.0
        %2628 = vadd.xlane.f32.xlu0 %v2627
        %v2629 = vpop.xlane.xlu0 %2628
        %v2630 = vrcp.pop %v2629
        %v2631 = vmul.f32 %v2626, %v2630
        %2632 = vrot.lane.b32.xlu0 %v2355, 104
        %v2633 = vpop.permute.xlu0 %2632
        %2634 = vrot.lane.b32.xlu0 %v2355, 72
        %v2635 = vpop.permute.xlu0 %2634
        %v2636 = vsel %vm2365, %v2633, 0
        %v2638 = vsel %vm2365, %v2635, 0
        %2640 = vmatprep.subr.mxu0 0.0
        %2641 = vmatpush1.xpose.msra.mxu0 %v2638
        %2642 = vmatprep.subr.mxu0 0.0
        %2643 = vmatpush1.xpose.msra.mxu0 0.0
        %2644 = vmatprep.subr.mxu0 0.0
        %2645 = vmatpush1.xpose.msra.mxu0 0.0
        %2646 = vmatprep.subr.mxu0 0.0
        %2647 = vmatpush1.xpose.msra.mxu0 0.0
        %2648 = vmatprep.subr.mxu0 0.0
        %2649 = vmatpush1.xpose.msra.mxu0 0.0
        %2650 = vmatprep.subr.mxu0 0.0
        %2651 = vmatpush1.xpose.msra.mxu0 0.0
        %2652 = vmatprep.subr.mxu0 0.0
        %2653 = vmatpush1.xpose.msra.mxu0 0.0
        %2654 = vmatprep.subr.mxu0 0.0
        %2655 = vmatpush1.xpose.msra.mxu0 0.0
        %2656 = vmatprep.subr.mxu0 0.0
        %2657 = vmatpush1.xpose.msra.mxu0 0.0
        %2658 = vmatprep.subr.mxu0 0.0
        %2659 = vmatpush1.xpose.msra.mxu0 0.0
        %2660 = vmatprep.subr.mxu0 0.0
        %2661 = vmatpush1.xpose.msra.mxu0 0.0
        %2662 = vmatprep.subr.mxu0 0.0
        %2663 = vmatpush1.xpose.msra.mxu0 0.0
        %2664 = vmatprep.subr.mxu0 0.0
        %2665 = vmatpush1.xpose.msra.mxu0 0.0
        %2666 = vmatprep.subr.mxu0 0.0
        %2667 = vmatpush1.xpose.msra.mxu0 0.0
        %2668 = vmatprep.subr.mxu0 0.0
        %2669 = vmatpush1.xpose.msra.mxu0 0.0
        %2670 = vmatprep.subr.mxu0 0.0
        %2671 = vmatpush1.xpose.msra.mxu0 0.0
        %2672 = vmatprep.subr.mxu0 0.0
        %2673 = vmatpush1.xpose.msra.mxu0 0.0
        %2674 = vmatprep.subr.mxu0 0.0
        %2675 = vmatpush1.xpose.msra.mxu0 0.0
        %2676 = vmatprep.subr.mxu0 0.0
        %2677 = vmatpush1.xpose.msra.mxu0 0.0
        %2678 = vmatprep.subr.mxu0 0.0
        %2679 = vmatpush1.xpose.msra.mxu0 0.0
        %2680 = vmatprep.subr.mxu0 0.0
        %2681 = vmatpush1.xpose.msra.mxu0 0.0
        %2682 = vmatprep.subr.mxu0 0.0
        %2683 = vmatpush1.xpose.msra.mxu0 0.0
        %2684 = vmatprep.subr.mxu0 0.0
        %2685 = vmatpush1.xpose.msra.mxu0 0.0
        %2686 = vmatprep.subr.mxu0 0.0
        %2687 = vmatpush1.xpose.msra.mxu0 0.0
        %2688 = vmatprep.subr.mxu0 0.0
        %2689 = vmatpush1.xpose.msra.mxu0 0.0
        %2690 = vmatprep.subr.mxu0 0.0
        %2691 = vmatpush1.xpose.msra.mxu0 0.0
        %2692 = vmatprep.subr.mxu0 0.0
        %2693 = vmatpush1.xpose.msra.mxu0 0.0
        %2694 = vmatprep.subr.mxu0 0.0
        %2695 = vmatpush1.xpose.msra.mxu0 0.0
        %2696 = vmatprep.subr.mxu0 0.0
        %2697 = vmatpush1.xpose.msra.mxu0 0.0
        %2698 = vmatprep.subr.mxu0 0.0
        %2699 = vmatpush1.xpose.msra.mxu0 0.0
        %2700 = vmatprep.subr.mxu0 0.0
        %2701 = vmatpush1.xpose.msra.mxu0 0.0
        %2702 = vmatprep.subr.mxu0 0.0
        %2703 = vmatpush1.xpose.msra.mxu0 0.0
        %2704 = vmatprep.mubr.f32.mxu0 0.0
        %2705 = vmatmul.mubr.f32.gmra.mrb[0].mxu0 %v2636
        %v2706 = vpop.f32.mrb[0].mxu0
        %v2707 = vadd.f32 0.0, %v2706
        %v2708 = vpop.f32.mrb[0].mxu0
        %2709 = vdwg.mxu0
        %v2710 = vmul.f32 %v2707, 0.35355338
        %v2711 = vsel %vm2365, %v2710, -inf
        %2712 = vmax.xlane.f32.xlu0 %v2711
        %v2713 = vpop.xlane.xlu0 %2712
        %v2714 = vsub.f32 %v2710, %v2713
        %v2715 = vmul.f32 %v2714, 1.442695
        %v2716 = vpow.pop %v2715
        %v2717 = vsel %vm2365, %v2716, 0.0
        %2718 = vadd.xlane.f32.xlu0 %v2717
        %v2719 = vpop.xlane.xlu0 %2718
        %v2720 = vrcp.pop %v2719
        %v2721 = vmul.f32 %v2716, %v2720
        %2723 = vrot.lane.b32.xlu0 %v2541, 8
        %v2724 = vpop.permute.xlu0 %2723
        %2727 = vrot.lane.b32.xlu0 %v2631, 16
        %v2728 = vpop.permute.xlu0 %2727
        %2731 = vrot.lane.b32.xlu0 %v2721, 24
        %v2732 = vpop.permute.xlu0 %2731
        %v2734 = vsel %vm2365, %v2451, %v2724
        %vm2735 = vcmask 130048
        %v2736 = vsel %vm2735, %v2734, %v2728
        %v2737 = vsel %vm684, %v2736, %v2732
        %2738 = vst.msk [vmem:[%s555] sm:$0xff] %vm2185, %v2737
        %s2739 = sand.u32 %s324, 1
        %s2740 = scalar_lea.sflag [#allocation4], %s2739
        %s2741 = sand.u32 %s324, 1
        %s2742 = smul.addr %s2741, 8
        %s2743 = scalar_lea.vmem [#allocation5], %s2742
        %s2744 = sand.u32 %s38, 1
        %s2745 = scalar_lea.sflag [#allocation7], %s2744
        %s2746 = sand.u32 %s350, 1
        %s2747 = smul.addr %s2746, 8
        %s2748 = scalar_lea.vmem [#allocation6], %s2747
        %s2749 = sand.u32 %s38, 1
        %s2750 = scalar_lea.sflag [#allocation7], %s2749
        %s2751 = sand.u32 %s376, 1
        %s2752 = smul.addr %s2751, 8
        %s2753 = scalar_lea.vmem [#allocation8], %s2752
        %s2754 = sand.u32 %s402, 1
        %s2755 = scalar_lea.sflag [#allocation10], %s2754
        %s2756 = sand.u32 %s402, 1
        %s2757 = smul.addr %s2756, 8
        %s2758 = scalar_lea.vmem [#allocation9], %s2757
        // Predicated region
        $region77: #{tpu_custom_call.1} parent=71 // pred_check
          %p2759 = pneg %p334
        $region78: #{tpu_custom_call.1} parent=71 // pred_check_branch
          %2761 = sbr.rel (%p2759) target = $region80
        $region79: #{tpu_custom_call.1} parent=71 // pred_region
          %s2763 = ssub.s32 128, 128
          %2764 = vsyncadd %s2740, %s2763
          %s2765 = smul.addr %s38, 128
          %s2766 = scalar_lea.hbm %s13, %s2765
          %s2768 = sshll.u32 %s2743, 4
          %s2769 = int_to_ptr.vmem [resolvable:$true] %s2768
          %2771 = dma.vmem_to_hbm [thread:$0]  %s2769, 128, %s2766, %s2740
        $region80: #{tpu_custom_call.1} parent=71 // pred_fallthru
          _
        // Predicated region
        $region81: #{tpu_custom_call.1} parent=71 // pred_check
          %p2772 = pneg %p360
        $region82: #{tpu_custom_call.1} parent=71 // pred_check_branch
          %2774 = sbr.rel (%p2772) target = $region84
        $region83: #{tpu_custom_call.1} parent=71 // pred_region
          %s2776 = ssub.s32 128, 128
          %2777 = vsyncadd %s2745, %s2776
          %s2778 = smul.addr %s38, 128
          %s2779 = scalar_lea.hbm %s14, %s2778
          %s2781 = sshll.u32 %s2748, 4
          %s2782 = int_to_ptr.vmem [resolvable:$true] %s2781
          %2784 = dma.vmem_to_hbm [thread:$0]  %s2782, 128, %s2779, %s2745
        $region84: #{tpu_custom_call.1} parent=71 // pred_fallthru
          _
        // Predicated region
        $region85: #{tpu_custom_call.1} parent=71 // pred_check
          %p2785 = pneg %p386
        $region86: #{tpu_custom_call.1} parent=71 // pred_check_branch
          %2787 = sbr.rel (%p2785) target = $region88
        $region87: #{tpu_custom_call.1} parent=71 // pred_region
          %s2789 = ssub.s32 128, 128
          %2790 = vsyncadd %s2750, %s2789
          %s2791 = smul.addr %s38, 128
          %s2792 = scalar_lea.hbm %s15, %s2791
          %s2794 = sshll.u32 %s2753, 4
          %s2795 = int_to_ptr.vmem [resolvable:$true] %s2794
          %2797 = dma.vmem_to_hbm [thread:$0]  %s2795, 128, %s2792, %s2750
        $region88: #{tpu_custom_call.1} parent=71 // pred_fallthru
          _
        // Predicated region
        $region89: #{tpu_custom_call.1} parent=71 // pred_check
          %p2798 = pneg %p412
        $region90: #{tpu_custom_call.1} parent=71 // pred_check_branch
          %2800 = sbr.rel (%p2798) target = $region92
        $region91: #{tpu_custom_call.1} parent=71 // pred_region
          %s2802 = ssub.s32 128, 128
          %2803 = vsyncadd %s2755, %s2802
          %s2804 = smul.addr %s38, 128
          %s2805 = scalar_lea.hbm %s16, %s2804
          %s2807 = sshll.u32 %s2758, 4
          %s2808 = int_to_ptr.vmem [resolvable:$true] %s2807
          %2810 = dma.vmem_to_hbm [thread:$0]  %s2808, 128, %s2805, %s2755
        $region92: #{tpu_custom_call.1} parent=71 // pred_fallthru
          _
      $region72: #{tpu_custom_call.1} parent=5 // pred_fallthru
        _
      %p2811 = scmp.le.s32.totalorder 2, %s33
      // Predicated region
      $region93: #{tpu_custom_call.1} parent=5 // pred_check
        %p2812 = pneg %p2811
      $region94: #{tpu_custom_call.1} parent=5 // pred_check_branch
        %2814 = sbr.rel (%p2812) target = $region96
      $region95: #{tpu_custom_call.1} parent=5 // pred_region
        %s2815 = ssub.s32 %s33, 2
        // Predicated region
        $region97: #{tpu_custom_call.1} parent=95 // pred_check
          %p2816 = pneg %p340
        $region98: #{tpu_custom_call.1} parent=95 // pred_check_branch
          %2818 = sbr.rel (%p2816) target = $region100
        $region99: #{tpu_custom_call.1} parent=95 // pred_region
          %s2819 = sand.u32 %s325, 1
          %s2820 = scalar_lea.sflag [#allocation4], %s2819
          %s2821 = sand.u32 %s325, 1
          %s2822 = smul.addr %s2821, 8
          %s2823 = scalar_lea.vmem [#allocation5], %s2822
          %2824 = dma.done %s2820, 128
        $region100: #{tpu_custom_call.1} parent=95 // pred_fallthru
          _
        // Predicated region
        $region101: #{tpu_custom_call.1} parent=95 // pred_check
          %p2825 = pneg %p366
        $region102: #{tpu_custom_call.1} parent=95 // pred_check_branch
          %2827 = sbr.rel (%p2825) target = $region104
        $region103: #{tpu_custom_call.1} parent=95 // pred_region
          %s2828 = sand.u32 %s39, 1
          %s2829 = scalar_lea.sflag [#allocation7], %s2828
          %s2830 = sand.u32 %s351, 1
          %s2831 = smul.addr %s2830, 8
          %s2832 = scalar_lea.vmem [#allocation6], %s2831
          %2833 = dma.done %s2829, 128
        $region104: #{tpu_custom_call.1} parent=95 // pred_fallthru
          _
        // Predicated region
        $region105: #{tpu_custom_call.1} parent=95 // pred_check
          %p2834 = pneg %p392
        $region106: #{tpu_custom_call.1} parent=95 // pred_check_branch
          %2836 = sbr.rel (%p2834) target = $region108
        $region107: #{tpu_custom_call.1} parent=95 // pred_region
          %s2837 = sand.u32 %s39, 1
          %s2838 = scalar_lea.sflag [#allocation7], %s2837
          %s2839 = sand.u32 %s377, 1
          %s2840 = smul.addr %s2839, 8
          %s2841 = scalar_lea.vmem [#allocation8], %s2840
          %2842 = dma.done %s2838, 128
        $region108: #{tpu_custom_call.1} parent=95 // pred_fallthru
          _
        // Predicated region
        $region109: #{tpu_custom_call.1} parent=95 // pred_check
          %p2843 = pneg %p418
        $region110: #{tpu_custom_call.1} parent=95 // pred_check_branch
          %2845 = sbr.rel (%p2843) target = $region112
        $region111: #{tpu_custom_call.1} parent=95 // pred_region
          %s2846 = sand.u32 %s403, 1
          %s2847 = scalar_lea.sflag [#allocation10], %s2846
          %s2848 = sand.u32 %s403, 1
          %s2849 = smul.addr %s2848, 8
          %s2850 = scalar_lea.vmem [#allocation9], %s2849
          %2851 = dma.done %s2847, 128
        $region112: #{tpu_custom_call.1} parent=95 // pred_fallthru
          _
      $region96: #{tpu_custom_call.1} parent=5 // pred_fallthru
        _
    $region6: #{tpu_custom_call.1} parent=1 // loop_footer
      %s37 = sadd.s32 1, %s33
    $region7: #{tpu_custom_call.1} parent=1 // loop_footer_branch
      %32 = sbr.rel target = $region3
    $region8: #{tpu_custom_call.1} parent=1 // loop_exit
      _
    %2852 = vsyncpa [#allocation3], 1
    %s2853 = scalar_lea.sflag [#allocation3], 1
    %2854 = vsyncpa %s2853, 1
    %2855 = vsyncpa [#allocation4], 1
    %s2856 = scalar_lea.sflag [#allocation4], 1
    %2857 = vsyncpa %s2856, 1
    %2858 = vsyncpa [#allocation7], 1
    %s2859 = scalar_lea.sflag [#allocation7], 1
    %2860 = vsyncpa %s2859, 1
    %2861 = vsyncpa [#allocation10], 1
    %s2862 = scalar_lea.sflag [#allocation10], 1
    %2863 = vsyncpa %s2862, 1

</llo_original>
